<compile_context>
chip_gen: v5e
topology: v5e:2x2
jax: 0.10.0
libtpu: 0.0.40
codegen_flags: <defaults>
</compile_context>

<pallas_src>
import jax
import jax.numpy as jnp
from jax.experimental import pallas as pl
from jax.experimental.pallas import tpu as pltpu

_LANE = 128   # channel padding target (TPU lane width)
_OFF = 16     # aligned halo offset inside the padded VMEM scratches


def _round_up(n, m):
    return ((n + m - 1) // m) * m


# -----------------------------------------------------------------------------
# Fused kernel: conv1+BN+ReLU -> conv2+BN+ReLU -> 2x2 stride-2 ceil-mode pool.
# One image per grid step; channels padded to 128 lanes.
# -----------------------------------------------------------------------------
def _make_encoder_kernel(ksize, H, W):
    pad = (ksize - 1) // 2          # PyTorch Conv2d(padding=(k-1)//2)
    base = _OFF - pad               # first tap's read offset inside the scratch

    def kernel(x_ref, w1_ref, s1_ref, o1_ref, w2_ref, s2_ref, o2_ref,
               conv_ref, down_ref, xpad_ref, ypad_ref, ppad_ref):
        Cip = x_ref.shape[-1]
        Cop = conv_ref.shape[-1]
        Ho, Wo, _ = down_ref.shape

        def conv_bn_relu(src_ref, w_ref, s_ref, o_ref, cin_p):
            # KxK 'same' conv as K*K shifted (H*W,cin_p)@(cin_p,Cop) bf16 MXU
            # matmuls (each with full 128-deep contraction), f32 accumulate,
            # folded BN + ReLU epilogue in f32.
            acc = jnp.zeros((H * W, Cop), jnp.float32)
            for kh in range(ksize):
                for kw in range(ksize):
                    patch = src_ref[base + kh:base + kh + H,
                                    base + kw:base + kw + W, :]
                    patch = patch.reshape(H * W, cin_p).astype(jnp.bfloat16)
                    acc = acc + jnp.dot(patch, w_ref[kh * ksize + kw],
                                        preferred_element_type=jnp.float32)
            y = acc * s_ref[...] + o_ref[...]     # fused conv bias + BN (eval)
            return jnp.maximum(y, 0.0)            # ReLU, (H*W, Cop) f32

        # ---- conv block 1: in-kernel zero 'same' padding in VMEM scratch -----
        xpad_ref[...] = jnp.zeros(xpad_ref.shape, xpad_ref.dtype)
        xpad_ref[_OFF:_OFF + H, _OFF:_OFF + W, :] = x_ref[...]
        y1 = conv_bn_relu(xpad_ref, w1_ref, s1_ref, o1_ref, Cip)

        # ---- conv block 2: intermediate activation never leaves VMEM ---------
        ypad_ref[...] = jnp.zeros(ypad_ref.shape, ypad_ref.dtype)
        ypad_ref[_OFF:_OFF + H, _OFF:_OFF + W, :] = y1.reshape(H, W, Cop)
        y2 = conv_bn_relu(ypad_ref, w2_ref, s2_ref, o2_ref, Cop)
        y2 = y2.reshape(H, W, Cop)
        conv_ref[...] = y2.astype(conv_ref.dtype)

        # ---- fused 2x2 stride-2 max pool, ceil_mode via in-kernel -inf pad ----
        ppad_ref[...] = jnp.full(ppad_ref.shape, -jnp.inf, ppad_ref.dtype)
        ppad_ref[0:H, 0:W, :] = y2
        a = ppad_ref[pl.ds(0, Ho, stride=2), pl.ds(0, Wo, stride=2), :]
        b = ppad_ref[pl.ds(0, Ho, stride=2), pl.ds(1, Wo, stride=2), :]
        c = ppad_ref[pl.ds(1, Ho, stride=2), pl.ds(0, Wo, stride=2), :]
        d = ppad_ref[pl.ds(1, Ho, stride=2), pl.ds(1, Wo, stride=2), :]
        down_ref[...] = jnp.maximum(jnp.maximum(a, b),
                                    jnp.maximum(c, d)).astype(down_ref.dtype)

    return kernel


def _encoder_pallas(x, w1p, s1p, o1p, w2p, s2p, o2p, *, k):
    """x:(N,H,W,Cip) f32 with channels padded to a multiple of 128 lanes."""
    N, H, W, Cip = x.shape
    kk, _, Cop = w1p.shape
    assert kk == k * k
    pad = (k - 1) // 2
    assert pad <= _OFF
    Ho, Wo = -(-H // 2), -(-W // 2)
    Hs, Ws = _OFF + H + pad, _OFF + W + pad   # scratch: halo at aligned offset

    kernel = _make_encoder_kernel(k, H, W)
    return pl.pallas_call(
        kernel,
        out_shape=(jax.ShapeDtypeStruct((N, H, W, Cop), jnp.float32),
                   jax.ShapeDtypeStruct((N, Ho, Wo, Cop), jnp.float32)),
        grid=(N,),
        in_specs=[
            pl.BlockSpec((None, H, W, Cip), lambda n: (n, 0, 0, 0)),
            pl.BlockSpec((kk, Cip, Cop), lambda n: (0, 0, 0)),
            pl.BlockSpec((1, Cop), lambda n: (0, 0)),
            pl.BlockSpec((1, Cop), lambda n: (0, 0)),
            pl.BlockSpec((kk, Cop, Cop), lambda n: (0, 0, 0)),
            pl.BlockSpec((1, Cop), lambda n: (0, 0)),
            pl.BlockSpec((1, Cop), lambda n: (0, 0)),
        ],
        out_specs=(
            pl.BlockSpec((None, H, W, Cop), lambda n: (n, 0, 0, 0)),
            pl.BlockSpec((None, Ho, Wo, Cop), lambda n: (n, 0, 0, 0)),
        ),
        scratch_shapes=[
            pltpu.VMEM((Hs, Ws, Cip), jnp.float32),          # zero-padded conv1 input
            pltpu.VMEM((Hs, Ws, Cop), jnp.float32),          # zero-padded conv2 input
            pltpu.VMEM((2 * Ho, 2 * Wo, Cop), jnp.float32),  # -inf padded pool input
        ],
        compiler_params=pltpu.CompilerParams(
            dimension_semantics=("parallel",),
            vmem_limit_bytes=32 * 1024 * 1024,
        ),
    )(x, w1p, s1p, o1p, w2p, s2p, o2p)


# -----------------------------------------------------------------------------
# Parameter packing (channel padding to 128 lanes, bf16 weights) + forward
# -----------------------------------------------------------------------------
def _prep_weight(w, cin_p, cout_p):
    """(k,k,cin,cout) HWIO -> zero-padded (k*k, cin_p, cout_p) bf16."""
    k, _, cin, cout = w.shape
    wp = jnp.zeros((k, k, cin_p, cout_p), jnp.bfloat16)
    wp = wp.at[:, :, :cin, :cout].set(w.astype(jnp.bfloat16))
    return wp.reshape(k * k, cin_p, cout_p)


def _prep_affine(scale, offset, cout_p):
    c = scale.shape[0]
    s = jnp.zeros((1, cout_p), jnp.float32).at[0, :c].set(scale.astype(jnp.float32))
    o = jnp.zeros((1, cout_p), jnp.float32).at[0, :c].set(offset.astype(jnp.float32))
    return s, o


def stack_encoder_2d(x_nchw, params, k=3):
    """StackEncoder2d forward: x:(N,Cin,H,W) -> (conv_out, down_out), both NCHW."""
    N, Cin, H, W = x_nchw.shape
    Cout = params["w2"].shape[-1]
    Cip = _round_up(Cin, _LANE)
    Cop = _round_up(Cout, _LANE)

    # NCHW -> NHWC + one-time lane pad of the network input (fused with the
    # transpose by XLA; per-layer activation padding is done inside the kernel).
    x = jnp.transpose(x_nchw, (0, 2, 3, 1)).astype(jnp.float32)
    x = jnp.pad(x, ((0, 0), (0, 0), (0, 0), (0, Cip - Cin)))

    w1p = _prep_weight(params["w1"], Cip, Cop)
    w2p = _prep_weight(params["w2"], Cop, Cop)
    s1p, o1p = _prep_affine(params["scale1"], params["offset1"], Cop)
    s2p, o2p = _prep_affine(params["scale2"], params["offset2"], Cop)

    conv_p, down_p = _encoder_pallas(x, w1p, s1p, o1p, w2p, s2p, o2p, k=k)
    conv_out = jnp.transpose(conv_p[..., :Cout], (0, 3, 1, 2))   # back to NCHW
    down_out = jnp.transpose(down_p[..., :Cout], (0, 3, 1, 2))
    return conv_out, down_out


# -----------------------------------------------------------------------------
# Deterministic parameter construction (shapes from the nn.Module __init__);
# eval-mode BN folded with the conv bias into per-channel scale/offset.
# -----------------------------------------------------------------------------
def init_params(key, in_chl, out_chl, k=3, eps=1e-4):
    ks = jax.random.split(key, 12)

    def conv_init(kw_, kb_, cin, cout):
        fan_in = cin * k * k
        bound = 1.0 / (fan_in ** 0.5)
        w = jax.random.uniform(kw_, (k, k, cin, cout), jnp.float32, -bound, bound)
        b = jax.random.uniform(kb_, (cout,), jnp.float32, -bound, bound)
        return w, b

    def bn_init(kg, kb_, km, kv, c):
        gamma = 1.0 + 0.1 * jax.random.normal(kg, (c,), jnp.float32)
        beta = 0.1 * jax.random.normal(kb_, (c,), jnp.float32)
        mean = 0.1 * jax.random.normal(km, (c,), jnp.float32)
        var = 1.0 + 0.1 * jnp.abs(jax.random.normal(kv, (c,), jnp.float32))
        return gamma, beta, mean, var

    def fold(gamma, beta, mean, var, bias):
        scale = gamma / jnp.sqrt(var + eps)
        offset = beta + (bias - mean) * scale
        return scale, offset

    w1, b1 = conv_init(ks[0], ks[1], in_chl, out_chl)
    w2, b2 = conv_init(ks[2], ks[3], out_chl, out_chl)
    g1, be1, m1, v1 = bn_init(ks[4], ks[5], ks[6], ks[7], out_chl)
    g2, be2, m2, v2 = bn_init(ks[8], ks[9], ks[10], ks[11], out_chl)
    s1, o1 = fold(g1, be1, m1, v1, b1)
    s2, o2 = fold(g2, be2, m2, v2, b2)
    return dict(w1=w1, scale1=s1, offset1=o1, w2=w2, scale2=s2, offset2=o2,
                b1=b1, g1=g1, be1=be1, m1=m1, v1=v1,
                b2=b2, g2=g2, be2=be2, m2=m2, v2=v2)


# -----------------------------------------------------------------------------
# Pure-JAX reference (same numerics contract: bf16 conv operands, f32
# accumulate/epilogue, bf16-rounded intermediate activation).
# -----------------------------------------------------------------------------
def ref_forward(x_nchw, p, k=3, eps=1e-4):
    pad = (k - 1) // 2
    x = jnp.transpose(x_nchw, (0, 2, 3, 1)).astype(jnp.float32)

    def block(x, w, b, g, be, m, v):
        y = jax.lax.conv_general_dilated(
            x.astype(jnp.bfloat16), w.astype(jnp.bfloat16),
            window_strides=(1, 1), padding=[(pad, pad), (pad, pad)],
            dimension_numbers=("NHWC", "HWIO", "NHWC"),
            preferred_element_type=jnp.float32)
        y = y + b
        y = g * (y - m) / jnp.sqrt(v + eps) + be
        return jnp.maximum(y, 0.0)

    h1 = block(x, p["w1"], p["b1"], p["g1"], p["be1"], p["m1"], p["v1"])
    h1 = h1.astype(jnp.bfloat16).astype(jnp.float32)   # matches kernel bf16 taps
    h2 = block(h1, p["w2"], p["b2"], p["g2"], p["be2"], p["m2"], p["v2"])

    H, W = h2.shape[1], h2.shape[2]
    h2p = jnp.pad(h2, ((0, 0), (0, (-H) % 2), (0, (-W) % 2), (0, 0)),
                  constant_values=-jnp.inf)
    down = jax.lax.reduce_window(h2p, -jnp.inf, jax.lax.max,
                                 (1, 2, 2, 1), (1, 2, 2, 1), "VALID")
    return jnp.transpose(h2, (0, 3, 1, 2)), jnp.transpose(down, (0, 3, 1, 2))


if __name__ == "__main__":
    key = jax.random.PRNGKey(0)
    k_x, k_p, k_x2, k_p2 = jax.random.split(key, 4)
    fwd = jax.jit(stack_encoder_2d)

    # --- test 1: even spatial size, like the nn.Module default use ------------
    N, C_in, H, W = 2, 4, 16, 16
    C_out = 8
    x = jax.random.normal(k_x, (N, C_in, H, W), jnp.float32)
    params = init_params(k_p, C_in, C_out)

    conv_out, down_out = fwd(x, params)
    conv_out = jax.block_until_ready(conv_out)
    down_out = jax.block_until_ready(down_out)
    assert conv_out.shape == (N, C_out, H, W)
    assert down_out.shape == (N, C_out, H // 2, W // 2)

    ref_conv, ref_down = ref_forward(x, params)
    assert jnp.allclose(conv_out, ref_conv, rtol=2e-2, atol=2e-2), "conv_out mismatch"
    assert jnp.allclose(down_out, ref_down, rtol=2e-2, atol=2e-2), "down_out mismatch"

    # --- test 2: odd H exercises the ceil-mode max-pool (-inf pad) path -------
    N2, C_in2, H2, W2, C_out2 = 1, 3, 15, 16, 6
    x2 = jax.random.normal(k_x2, (N2, C_in2, H2, W2), jnp.float32)
    params2 = init_params(k_p2, C_in2, C_out2)
    conv2_out, down2_out = fwd(x2, params2)
    conv2_out = jax.block_until_ready(conv2_out)
    down2_out = jax.block_until_ready(down2_out)
    assert conv2_out.shape == (N2, C_out2, H2, W2)
    assert down2_out.shape == (N2, C_out2, (H2 + 1) // 2, (W2 + 1) // 2)

    ref_conv2, ref_down2 = ref_forward(x2, params2)
    assert jnp.allclose(conv2_out, ref_conv2, rtol=2e-2, atol=2e-2), "odd conv mismatch"
    assert jnp.allclose(down2_out, ref_down2, rtol=2e-2, atol=2e-2), "odd down mismatch"

    print("KERNEL_OK")
</pallas_src>

<mosaic_0001>
module attributes {stable_mosaic.version = 11 : i64} {
  func.func @kernel(%arg0: i32, %arg1: memref<1x16x16x128xf32, #tpu.memory_space<vmem>>, %arg2: memref<9x128x128xbf16, #tpu.memory_space<vmem>>, %arg3: memref<1x128xf32, #tpu.memory_space<vmem>>, %arg4: memref<1x128xf32, #tpu.memory_space<vmem>>, %arg5: memref<9x128x128xbf16, #tpu.memory_space<vmem>>, %arg6: memref<1x128xf32, #tpu.memory_space<vmem>>, %arg7: memref<1x128xf32, #tpu.memory_space<vmem>>, %arg8: memref<1x16x16x128xf32, #tpu.memory_space<vmem>>, %arg9: memref<1x8x8x128xf32, #tpu.memory_space<vmem>>, %arg10: memref<33x33x128xf32, #tpu.memory_space<vmem>>, %arg11: memref<33x33x128xf32, #tpu.memory_space<vmem>>, %arg12: memref<16x16x128xf32, #tpu.memory_space<vmem>>) attributes {dimension_semantics = [#tpu.dimension_semantics<parallel>], iteration_bounds = array<i64: 2>, scalar_prefetch = 0 : i64, scratch_operands = 3 : i64, tpu.core_type = #tpu.core_type<tc>, window_params = [{transform_indices = @transform_0, window_bounds = array<i64: 1, 16, 16, 128>}, {pipeline_mode = #tpu.pipeline_mode<synchronous>, transform_indices = @transform_1, window_bounds = array<i64: 9, 128, 128>}, {pipeline_mode = #tpu.pipeline_mode<synchronous>, transform_indices = @transform_2, window_bounds = array<i64: 1, 128>}, {pipeline_mode = #tpu.pipeline_mode<synchronous>, transform_indices = @transform_3, window_bounds = array<i64: 1, 128>}, {pipeline_mode = #tpu.pipeline_mode<synchronous>, transform_indices = @transform_4, window_bounds = array<i64: 9, 128, 128>}, {pipeline_mode = #tpu.pipeline_mode<synchronous>, transform_indices = @transform_5, window_bounds = array<i64: 1, 128>}, {pipeline_mode = #tpu.pipeline_mode<synchronous>, transform_indices = @transform_6, window_bounds = array<i64: 1, 128>}, {transform_indices = @transform_7, window_bounds = array<i64: 1, 16, 16, 128>}, {transform_indices = @transform_8, window_bounds = array<i64: 1, 8, 8, 128>}]} {
    %cst = arith.constant 0.000000e+00 : f32
    %0 = vector.broadcast %cst : f32 to vector<33x33x128xf32>
    %c0 = arith.constant 0 : index
    %c0_0 = arith.constant 0 : index
    %c0_1 = arith.constant 0 : index
    %1 = vector.load %arg10[%c0, %c0_0, %c0_1] : memref<33x33x128xf32, #tpu.memory_space<vmem>>, vector<33x33x128xf32>
    tpu.vector_store %arg10[%c0, %c0_0, %c0_1], %0 {strides = array<i32>} : memref<33x33x128xf32, #tpu.memory_space<vmem>>, vector<33x33x128xf32>,
    %c0_2 = arith.constant 0 : index
    %c0_3 = arith.constant 0 : index
    %c0_4 = arith.constant 0 : index
    %c0_5 = arith.constant 0 : index
    %2 = vector.load %arg1[%c0_2, %c0_3, %c0_4, %c0_5] : memref<1x16x16x128xf32, #tpu.memory_space<vmem>>, vector<1x16x16x128xf32>
    %3 = vector.shape_cast %2 : vector<1x16x16x128xf32> to vector<16x16x128xf32>
    %c16 = arith.constant 16 : index
    %c16_6 = arith.constant 16 : index
    %c0_7 = arith.constant 0 : index
    %4 = vector.load %arg10[%c16, %c16_6, %c0_7] : memref<33x33x128xf32, #tpu.memory_space<vmem>>, vector<16x16x128xf32>
    tpu.vector_store %arg10[%c16, %c16_6, %c0_7], %3 {strides = array<i32>} : memref<33x33x128xf32, #tpu.memory_space<vmem>>, vector<16x16x128xf32>,
    %cst_8 = arith.constant 0.000000e+00 : f32
    %5 = vector.broadcast %cst_8 : f32 to vector<256x128xf32>
    %c15 = arith.constant 15 : index
    %c15_9 = arith.constant 15 : index
    %c0_10 = arith.constant 0 : index
    %6 = vector.load %arg10[%c15, %c15_9, %c0_10] : memref<33x33x128xf32, #tpu.memory_space<vmem>>, vector<16x16x128xf32>
    %7 = vector.shape_cast %6 : vector<16x16x128xf32> to vector<256x128xf32>
    %8 = arith.truncf %7 : vector<256x128xf32> to vector<256x128xbf16>
    %c0_11 = arith.constant 0 : index
    %c0_12 = arith.constant 0 : index
    %c0_13 = arith.constant 0 : index
    %9 = vector.load %arg2[%c0_11, %c0_12, %c0_13] : memref<9x128x128xbf16, #tpu.memory_space<vmem>>, vector<1x128x128xbf16>
    %10 = vector.shape_cast %9 : vector<1x128x128xbf16> to vector<128x128xbf16>
    %cst_14 = arith.constant dense<0.000000e+00> : vector<256x128xf32>
    %11 = tpu.matmul %8, %10, %cst_14 {dimension_numbers = #tpu.dot_dimension_numbers<[1], [0], [0], [1], [0, 0, 1, 1], [], []>} : vector<256x128xbf16>, vector<128x128xbf16>, vector<256x128xf32> -> vector<256x128xf32>
    %12 = arith.addf %5, %11 : vector<256x128xf32>
    %c15_15 = arith.constant 15 : index
    %c16_16 = arith.constant 16 : index
    %c0_17 = arith.constant 0 : index
    %13 = vector.load %arg10[%c15_15, %c16_16, %c0_17] : memref<33x33x128xf32, #tpu.memory_space<vmem>>, vector<16x16x128xf32>
    %14 = vector.shape_cast %13 : vector<16x16x128xf32> to vector<256x128xf32>
    %15 = arith.truncf %14 : vector<256x128xf32> to vector<256x128xbf16>
    %c1 = arith.constant 1 : index
    %c0_18 = arith.constant 0 : index
    %c0_19 = arith.constant 0 : index
    %16 = vector.load %arg2[%c1, %c0_18, %c0_19] : memref<9x128x128xbf16, #tpu.memory_space<vmem>>, vector<1x128x128xbf16>
    %17 = vector.shape_cast %16 : vector<1x128x128xbf16> to vector<128x128xbf16>
    %cst_20 = arith.constant dense<0.000000e+00> : vector<256x128xf32>
    %18 = tpu.matmul %15, %17, %cst_20 {dimension_numbers = #tpu.dot_dimension_numbers<[1], [0], [0], [1], [0, 0, 1, 1], [], []>} : vector<256x128xbf16>, vector<128x128xbf16>, vector<256x128xf32> -> vector<256x128xf32>
    %19 = arith.addf %12, %18 : vector<256x128xf32>
    %c15_21 = arith.constant 15 : index
    %c17 = arith.constant 17 : index
    %c0_22 = arith.constant 0 : index
    %20 = vector.load %arg10[%c15_21, %c17, %c0_22] : memref<33x33x128xf32, #tpu.memory_space<vmem>>, vector<16x16x128xf32>
    %21 = vector.shape_cast %20 : vector<16x16x128xf32> to vector<256x128xf32>
    %22 = arith.truncf %21 : vector<256x128xf32> to vector<256x128xbf16>
    %c2 = arith.constant 2 : index
    %c0_23 = arith.constant 0 : index
    %c0_24 = arith.constant 0 : index
    %23 = vector.load %arg2[%c2, %c0_23, %c0_24] : memref<9x128x128xbf16, #tpu.memory_space<vmem>>, vector<1x128x128xbf16>
    %24 = vector.shape_cast %23 : vector<1x128x128xbf16> to vector<128x128xbf16>
    %cst_25 = arith.constant dense<0.000000e+00> : vector<256x128xf32>
    %25 = tpu.matmul %22, %24, %cst_25 {dimension_numbers = #tpu.dot_dimension_numbers<[1], [0], [0], [1], [0, 0, 1, 1], [], []>} : vector<256x128xbf16>, vector<128x128xbf16>, vector<256x128xf32> -> vector<256x128xf32>
    %26 = arith.addf %19, %25 : vector<256x128xf32>
    %c16_26 = arith.constant 16 : index
    %c15_27 = arith.constant 15 : index
    %c0_28 = arith.constant 0 : index
    %27 = vector.load %arg10[%c16_26, %c15_27, %c0_28] : memref<33x33x128xf32, #tpu.memory_space<vmem>>, vector<16x16x128xf32>
    %28 = vector.shape_cast %27 : vector<16x16x128xf32> to vector<256x128xf32>
    %29 = arith.truncf %28 : vector<256x128xf32> to vector<256x128xbf16>
    %c3 = arith.constant 3 : index
    %c0_29 = arith.constant 0 : index
    %c0_30 = arith.constant 0 : index
    %30 = vector.load %arg2[%c3, %c0_29, %c0_30] : memref<9x128x128xbf16, #tpu.memory_space<vmem>>, vector<1x128x128xbf16>
    %31 = vector.shape_cast %30 : vector<1x128x128xbf16> to vector<128x128xbf16>
    %cst_31 = arith.constant dense<0.000000e+00> : vector<256x128xf32>
    %32 = tpu.matmul %29, %31, %cst_31 {dimension_numbers = #tpu.dot_dimension_numbers<[1], [0], [0], [1], [0, 0, 1, 1], [], []>} : vector<256x128xbf16>, vector<128x128xbf16>, vector<256x128xf32> -> vector<256x128xf32>
    %33 = arith.addf %26, %32 : vector<256x128xf32>
    %c16_32 = arith.constant 16 : index
    %c16_33 = arith.constant 16 : index
    %c0_34 = arith.constant 0 : index
    %34 = vector.load %arg10[%c16_32, %c16_33, %c0_34] : memref<33x33x128xf32, #tpu.memory_space<vmem>>, vector<16x16x128xf32>
    %35 = vector.shape_cast %34 : vector<16x16x128xf32> to vector<256x128xf32>
    %36 = arith.truncf %35 : vector<256x128xf32> to vector<256x128xbf16>
    %c4 = arith.constant 4 : index
    %c0_35 = arith.constant 0 : index
    %c0_36 = arith.constant 0 : index
    %37 = vector.load %arg2[%c4, %c0_35, %c0_36] : memref<9x128x128xbf16, #tpu.memory_space<vmem>>, vector<1x128x128xbf16>
    %38 = vector.shape_cast %37 : vector<1x128x128xbf16> to vector<128x128xbf16>
    %cst_37 = arith.constant dense<0.000000e+00> : vector<256x128xf32>
    %39 = tpu.matmul %36, %38, %cst_37 {dimension_numbers = #tpu.dot_dimension_numbers<[1], [0], [0], [1], [0, 0, 1, 1], [], []>} : vector<256x128xbf16>, vector<128x128xbf16>, vector<256x128xf32> -> vector<256x128xf32>
    %40 = arith.addf %33, %39 : vector<256x128xf32>
    %c16_38 = arith.constant 16 : index
    %c17_39 = arith.constant 17 : index
    %c0_40 = arith.constant 0 : index
    %41 = vector.load %arg10[%c16_38, %c17_39, %c0_40] : memref<33x33x128xf32, #tpu.memory_space<vmem>>, vector<16x16x128xf32>
    %42 = vector.shape_cast %41 : vector<16x16x128xf32> to vector<256x128xf32>
    %43 = arith.truncf %42 : vector<256x128xf32> to vector<256x128xbf16>
    %c5 = arith.constant 5 : index
    %c0_41 = arith.constant 0 : index
    %c0_42 = arith.constant 0 : index
    %44 = vector.load %arg2[%c5, %c0_41, %c0_42] : memref<9x128x128xbf16, #tpu.memory_space<vmem>>, vector<1x128x128xbf16>
    %45 = vector.shape_cast %44 : vector<1x128x128xbf16> to vector<128x128xbf16>
    %cst_43 = arith.constant dense<0.000000e+00> : vector<256x128xf32>
    %46 = tpu.matmul %43, %45, %cst_43 {dimension_numbers = #tpu.dot_dimension_numbers<[1], [0], [0], [1], [0, 0, 1, 1], [], []>} : vector<256x128xbf16>, vector<128x128xbf16>, vector<256x128xf32> -> vector<256x128xf32>
    %47 = arith.addf %40, %46 : vector<256x128xf32>
    %c17_44 = arith.constant 17 : index
    %c15_45 = arith.constant 15 : index
    %c0_46 = arith.constant 0 : index
    %48 = vector.load %arg10[%c17_44, %c15_45, %c0_46] : memref<33x33x128xf32, #tpu.memory_space<vmem>>, vector<16x16x128xf32>
    %49 = vector.shape_cast %48 : vector<16x16x128xf32> to vector<256x128xf32>
    %50 = arith.truncf %49 : vector<256x128xf32> to vector<256x128xbf16>
    %c6 = arith.constant 6 : index
    %c0_47 = arith.constant 0 : index
    %c0_48 = arith.constant 0 : index
    %51 = vector.load %arg2[%c6, %c0_47, %c0_48] : memref<9x128x128xbf16, #tpu.memory_space<vmem>>, vector<1x128x128xbf16>
    %52 = vector.shape_cast %51 : vector<1x128x128xbf16> to vector<128x128xbf16>
    %cst_49 = arith.constant dense<0.000000e+00> : vector<256x128xf32>
    %53 = tpu.matmul %50, %52, %cst_49 {dimension_numbers = #tpu.dot_dimension_numbers<[1], [0], [0], [1], [0, 0, 1, 1], [], []>} : vector<256x128xbf16>, vector<128x128xbf16>, vector<256x128xf32> -> vector<256x128xf32>
    %54 = arith.addf %47, %53 : vector<256x128xf32>
    %c17_50 = arith.constant 17 : index
    %c16_51 = arith.constant 16 : index
    %c0_52 = arith.constant 0 : index
    %55 = vector.load %arg10[%c17_50, %c16_51, %c0_52] : memref<33x33x128xf32, #tpu.memory_space<vmem>>, vector<16x16x128xf32>
    %56 = vector.shape_cast %55 : vector<16x16x128xf32> to vector<256x128xf32>
    %57 = arith.truncf %56 : vector<256x128xf32> to vector<256x128xbf16>
    %c7 = arith.constant 7 : index
    %c0_53 = arith.constant 0 : index
    %c0_54 = arith.constant 0 : index
    %58 = vector.load %arg2[%c7, %c0_53, %c0_54] : memref<9x128x128xbf16, #tpu.memory_space<vmem>>, vector<1x128x128xbf16>
    %59 = vector.shape_cast %58 : vector<1x128x128xbf16> to vector<128x128xbf16>
    %cst_55 = arith.constant dense<0.000000e+00> : vector<256x128xf32>
    %60 = tpu.matmul %57, %59, %cst_55 {dimension_numbers = #tpu.dot_dimension_numbers<[1], [0], [0], [1], [0, 0, 1, 1], [], []>} : vector<256x128xbf16>, vector<128x128xbf16>, vector<256x128xf32> -> vector<256x128xf32>
    %61 = arith.addf %54, %60 : vector<256x128xf32>
    %c17_56 = arith.constant 17 : index
    %c17_57 = arith.constant 17 : index
    %c0_58 = arith.constant 0 : index
    %62 = vector.load %arg10[%c17_56, %c17_57, %c0_58] : memref<33x33x128xf32, #tpu.memory_space<vmem>>, vector<16x16x128xf32>
    %63 = vector.shape_cast %62 : vector<16x16x128xf32> to vector<256x128xf32>
    %64 = arith.truncf %63 : vector<256x128xf32> to vector<256x128xbf16>
    %c8 = arith.constant 8 : index
    %c0_59 = arith.constant 0 : index
    %c0_60 = arith.constant 0 : index
    %65 = vector.load %arg2[%c8, %c0_59, %c0_60] : memref<9x128x128xbf16, #tpu.memory_space<vmem>>, vector<1x128x128xbf16>
    %66 = vector.shape_cast %65 : vector<1x128x128xbf16> to vector<128x128xbf16>
    %cst_61 = arith.constant dense<0.000000e+00> : vector<256x128xf32>
    %67 = tpu.matmul %64, %66, %cst_61 {dimension_numbers = #tpu.dot_dimension_numbers<[1], [0], [0], [1], [0, 0, 1, 1], [], []>} : vector<256x128xbf16>, vector<128x128xbf16>, vector<256x128xf32> -> vector<256x128xf32>
    %68 = arith.addf %61, %67 : vector<256x128xf32>
    %c0_62 = arith.constant 0 : index
    %c0_63 = arith.constant 0 : index
    %69 = vector.load %arg3[%c0_62, %c0_63] : memref<1x128xf32, #tpu.memory_space<vmem>>, vector<1x128xf32>
    %70 = vector.broadcast %69 : vector<1x128xf32> to vector<256x128xf32>
    %71 = arith.mulf %68, %70 : vector<256x128xf32>
    %c0_64 = arith.constant 0 : index
    %c0_65 = arith.constant 0 : index
    %72 = vector.load %arg4[%c0_64, %c0_65] : memref<1x128xf32, #tpu.memory_space<vmem>>, vector<1x128xf32>
    %73 = vector.broadcast %72 : vector<1x128xf32> to vector<256x128xf32>
    %74 = arith.addf %71, %73 : vector<256x128xf32>
    %cst_66 = arith.constant 0.000000e+00 : f32
    %75 = vector.broadcast %cst_66 : f32 to vector<256x128xf32>
    %76 = arith.maximumf %74, %75 : vector<256x128xf32>
    %cst_67 = arith.constant 0.000000e+00 : f32
    %77 = vector.broadcast %cst_67 : f32 to vector<33x33x128xf32>
    %c0_68 = arith.constant 0 : index
    %c0_69 = arith.constant 0 : index
    %c0_70 = arith.constant 0 : index
    %78 = vector.load %arg11[%c0_68, %c0_69, %c0_70] : memref<33x33x128xf32, #tpu.memory_space<vmem>>, vector<33x33x128xf32>
    tpu.vector_store %arg11[%c0_68, %c0_69, %c0_70], %77 {strides = array<i32>} : memref<33x33x128xf32, #tpu.memory_space<vmem>>, vector<33x33x128xf32>,
    %79 = vector.shape_cast %76 : vector<256x128xf32> to vector<16x16x128xf32>
    %c16_71 = arith.constant 16 : index
    %c16_72 = arith.constant 16 : index
    %c0_73 = arith.constant 0 : index
    %80 = vector.load %arg11[%c16_71, %c16_72, %c0_73] : memref<33x33x128xf32, #tpu.memory_space<vmem>>, vector<16x16x128xf32>
    tpu.vector_store %arg11[%c16_71, %c16_72, %c0_73], %79 {strides = array<i32>} : memref<33x33x128xf32, #tpu.memory_space<vmem>>, vector<16x16x128xf32>,
    %cst_74 = arith.constant 0.000000e+00 : f32
    %81 = vector.broadcast %cst_74 : f32 to vector<256x128xf32>
    %c15_75 = arith.constant 15 : index
    %c15_76 = arith.constant 15 : index
    %c0_77 = arith.constant 0 : index
    %82 = vector.load %arg11[%c15_75, %c15_76, %c0_77] : memref<33x33x128xf32, #tpu.memory_space<vmem>>, vector<16x16x128xf32>
    %83 = vector.shape_cast %82 : vector<16x16x128xf32> to vector<256x128xf32>
    %84 = arith.truncf %83 : vector<256x128xf32> to vector<256x128xbf16>
    %c0_78 = arith.constant 0 : index
    %c0_79 = arith.constant 0 : index
    %c0_80 = arith.constant 0 : index
    %85 = vector.load %arg5[%c0_78, %c0_79, %c0_80] : memref<9x128x128xbf16, #tpu.memory_space<vmem>>, vector<1x128x128xbf16>
    %86 = vector.shape_cast %85 : vector<1x128x128xbf16> to vector<128x128xbf16>
    %cst_81 = arith.constant dense<0.000000e+00> : vector<256x128xf32>
    %87 = tpu.matmul %84, %86, %cst_81 {dimension_numbers = #tpu.dot_dimension_numbers<[1], [0], [0], [1], [0, 0, 1, 1], [], []>} : vector<256x128xbf16>, vector<128x128xbf16>, vector<256x128xf32> -> vector<256x128xf32>
    %88 = arith.addf %81, %87 : vector<256x128xf32>
    %c15_82 = arith.constant 15 : index
    %c16_83 = arith.constant 16 : index
    %c0_84 = arith.constant 0 : index
    %89 = vector.load %arg11[%c15_82, %c16_83, %c0_84] : memref<33x33x128xf32, #tpu.memory_space<vmem>>, vector<16x16x128xf32>
    %90 = vector.shape_cast %89 : vector<16x16x128xf32> to vector<256x128xf32>
    %91 = arith.truncf %90 : vector<256x128xf32> to vector<256x128xbf16>
    %c1_85 = arith.constant 1 : index
    %c0_86 = arith.constant 0 : index
    %c0_87 = arith.constant 0 : index
    %92 = vector.load %arg5[%c1_85, %c0_86, %c0_87] : memref<9x128x128xbf16, #tpu.memory_space<vmem>>, vector<1x128x128xbf16>
    %93 = vector.shape_cast %92 : vector<1x128x128xbf16> to vector<128x128xbf16>
    %cst_88 = arith.constant dense<0.000000e+00> : vector<256x128xf32>
    %94 = tpu.matmul %91, %93, %cst_88 {dimension_numbers = #tpu.dot_dimension_numbers<[1], [0], [0], [1], [0, 0, 1, 1], [], []>} : vector<256x128xbf16>, vector<128x128xbf16>, vector<256x128xf32> -> vector<256x128xf32>
    %95 = arith.addf %88, %94 : vector<256x128xf32>
    %c15_89 = arith.constant 15 : index
    %c17_90 = arith.constant 17 : index
    %c0_91 = arith.constant 0 : index
    %96 = vector.load %arg11[%c15_89, %c17_90, %c0_91] : memref<33x33x128xf32, #tpu.memory_space<vmem>>, vector<16x16x128xf32>
    %97 = vector.shape_cast %96 : vector<16x16x128xf32> to vector<256x128xf32>
    %98 = arith.truncf %97 : vector<256x128xf32> to vector<256x128xbf16>
    %c2_92 = arith.constant 2 : index
    %c0_93 = arith.constant 0 : index
    %c0_94 = arith.constant 0 : index
    %99 = vector.load %arg5[%c2_92, %c0_93, %c0_94] : memref<9x128x128xbf16, #tpu.memory_space<vmem>>, vector<1x128x128xbf16>
    %100 = vector.shape_cast %99 : vector<1x128x128xbf16> to vector<128x128xbf16>
    %cst_95 = arith.constant dense<0.000000e+00> : vector<256x128xf32>
    %101 = tpu.matmul %98, %100, %cst_95 {dimension_numbers = #tpu.dot_dimension_numbers<[1], [0], [0], [1], [0, 0, 1, 1], [], []>} : vector<256x128xbf16>, vector<128x128xbf16>, vector<256x128xf32> -> vector<256x128xf32>
    %102 = arith.addf %95, %101 : vector<256x128xf32>
    %c16_96 = arith.constant 16 : index
    %c15_97 = arith.constant 15 : index
    %c0_98 = arith.constant 0 : index
    %103 = vector.load %arg11[%c16_96, %c15_97, %c0_98] : memref<33x33x128xf32, #tpu.memory_space<vmem>>, vector<16x16x128xf32>
    %104 = vector.shape_cast %103 : vector<16x16x128xf32> to vector<256x128xf32>
    %105 = arith.truncf %104 : vector<256x128xf32> to vector<256x128xbf16>
    %c3_99 = arith.constant 3 : index
    %c0_100 = arith.constant 0 : index
    %c0_101 = arith.constant 0 : index
    %106 = vector.load %arg5[%c3_99, %c0_100, %c0_101] : memref<9x128x128xbf16, #tpu.memory_space<vmem>>, vector<1x128x128xbf16>
    %107 = vector.shape_cast %106 : vector<1x128x128xbf16> to vector<128x128xbf16>
    %cst_102 = arith.constant dense<0.000000e+00> : vector<256x128xf32>
    %108 = tpu.matmul %105, %107, %cst_102 {dimension_numbers = #tpu.dot_dimension_numbers<[1], [0], [0], [1], [0, 0, 1, 1], [], []>} : vector<256x128xbf16>, vector<128x128xbf16>, vector<256x128xf32> -> vector<256x128xf32>
    %109 = arith.addf %102, %108 : vector<256x128xf32>
    %c16_103 = arith.constant 16 : index
    %c16_104 = arith.constant 16 : index
    %c0_105 = arith.constant 0 : index
    %110 = vector.load %arg11[%c16_103, %c16_104, %c0_105] : memref<33x33x128xf32, #tpu.memory_space<vmem>>, vector<16x16x128xf32>
    %111 = vector.shape_cast %110 : vector<16x16x128xf32> to vector<256x128xf32>
    %112 = arith.truncf %111 : vector<256x128xf32> to vector<256x128xbf16>
    %c4_106 = arith.constant 4 : index
    %c0_107 = arith.constant 0 : index
    %c0_108 = arith.constant 0 : index
    %113 = vector.load %arg5[%c4_106, %c0_107, %c0_108] : memref<9x128x128xbf16, #tpu.memory_space<vmem>>, vector<1x128x128xbf16>
    %114 = vector.shape_cast %113 : vector<1x128x128xbf16> to vector<128x128xbf16>
    %cst_109 = arith.constant dense<0.000000e+00> : vector<256x128xf32>
    %115 = tpu.matmul %112, %114, %cst_109 {dimension_numbers = #tpu.dot_dimension_numbers<[1], [0], [0], [1], [0, 0, 1, 1], [], []>} : vector<256x128xbf16>, vector<128x128xbf16>, vector<256x128xf32> -> vector<256x128xf32>
    %116 = arith.addf %109, %115 : vector<256x128xf32>
    %c16_110 = arith.constant 16 : index
    %c17_111 = arith.constant 17 : index
    %c0_112 = arith.constant 0 : index
    %117 = vector.load %arg11[%c16_110, %c17_111, %c0_112] : memref<33x33x128xf32, #tpu.memory_space<vmem>>, vector<16x16x128xf32>
    %118 = vector.shape_cast %117 : vector<16x16x128xf32> to vector<256x128xf32>
    %119 = arith.truncf %118 : vector<256x128xf32> to vector<256x128xbf16>
    %c5_113 = arith.constant 5 : index
    %c0_114 = arith.constant 0 : index
    %c0_115 = arith.constant 0 : index
    %120 = vector.load %arg5[%c5_113, %c0_114, %c0_115] : memref<9x128x128xbf16, #tpu.memory_space<vmem>>, vector<1x128x128xbf16>
    %121 = vector.shape_cast %120 : vector<1x128x128xbf16> to vector<128x128xbf16>
    %cst_116 = arith.constant dense<0.000000e+00> : vector<256x128xf32>
    %122 = tpu.matmul %119, %121, %cst_116 {dimension_numbers = #tpu.dot_dimension_numbers<[1], [0], [0], [1], [0, 0, 1, 1], [], []>} : vector<256x128xbf16>, vector<128x128xbf16>, vector<256x128xf32> -> vector<256x128xf32>
    %123 = arith.addf %116, %122 : vector<256x128xf32>
    %c17_117 = arith.constant 17 : index
    %c15_118 = arith.constant 15 : index
    %c0_119 = arith.constant 0 : index
    %124 = vector.load %arg11[%c17_117, %c15_118, %c0_119] : memref<33x33x128xf32, #tpu.memory_space<vmem>>, vector<16x16x128xf32>
    %125 = vector.shape_cast %124 : vector<16x16x128xf32> to vector<256x128xf32>
    %126 = arith.truncf %125 : vector<256x128xf32> to vector<256x128xbf16>
    %c6_120 = arith.constant 6 : index
    %c0_121 = arith.constant 0 : index
    %c0_122 = arith.constant 0 : index
    %127 = vector.load %arg5[%c6_120, %c0_121, %c0_122] : memref<9x128x128xbf16, #tpu.memory_space<vmem>>, vector<1x128x128xbf16>
    %128 = vector.shape_cast %127 : vector<1x128x128xbf16> to vector<128x128xbf16>
    %cst_123 = arith.constant dense<0.000000e+00> : vector<256x128xf32>
    %129 = tpu.matmul %126, %128, %cst_123 {dimension_numbers = #tpu.dot_dimension_numbers<[1], [0], [0], [1], [0, 0, 1, 1], [], []>} : vector<256x128xbf16>, vector<128x128xbf16>, vector<256x128xf32> -> vector<256x128xf32>
    %130 = arith.addf %123, %129 : vector<256x128xf32>
    %c17_124 = arith.constant 17 : index
    %c16_125 = arith.constant 16 : index
    %c0_126 = arith.constant 0 : index
    %131 = vector.load %arg11[%c17_124, %c16_125, %c0_126] : memref<33x33x128xf32, #tpu.memory_space<vmem>>, vector<16x16x128xf32>
    %132 = vector.shape_cast %131 : vector<16x16x128xf32> to vector<256x128xf32>
    %133 = arith.truncf %132 : vector<256x128xf32> to vector<256x128xbf16>
    %c7_127 = arith.constant 7 : index
    %c0_128 = arith.constant 0 : index
    %c0_129 = arith.constant 0 : index
    %134 = vector.load %arg5[%c7_127, %c0_128, %c0_129] : memref<9x128x128xbf16, #tpu.memory_space<vmem>>, vector<1x128x128xbf16>
    %135 = vector.shape_cast %134 : vector<1x128x128xbf16> to vector<128x128xbf16>
    %cst_130 = arith.constant dense<0.000000e+00> : vector<256x128xf32>
    %136 = tpu.matmul %133, %135, %cst_130 {dimension_numbers = #tpu.dot_dimension_numbers<[1], [0], [0], [1], [0, 0, 1, 1], [], []>} : vector<256x128xbf16>, vector<128x128xbf16>, vector<256x128xf32> -> vector<256x128xf32>
    %137 = arith.addf %130, %136 : vector<256x128xf32>
    %c17_131 = arith.constant 17 : index
    %c17_132 = arith.constant 17 : index
    %c0_133 = arith.constant 0 : index
    %138 = vector.load %arg11[%c17_131, %c17_132, %c0_133] : memref<33x33x128xf32, #tpu.memory_space<vmem>>, vector<16x16x128xf32>
    %139 = vector.shape_cast %138 : vector<16x16x128xf32> to vector<256x128xf32>
    %140 = arith.truncf %139 : vector<256x128xf32> to vector<256x128xbf16>
    %c8_134 = arith.constant 8 : index
    %c0_135 = arith.constant 0 : index
    %c0_136 = arith.constant 0 : index
    %141 = vector.load %arg5[%c8_134, %c0_135, %c0_136] : memref<9x128x128xbf16, #tpu.memory_space<vmem>>, vector<1x128x128xbf16>
    %142 = vector.shape_cast %141 : vector<1x128x128xbf16> to vector<128x128xbf16>
    %cst_137 = arith.constant dense<0.000000e+00> : vector<256x128xf32>
    %143 = tpu.matmul %140, %142, %cst_137 {dimension_numbers = #tpu.dot_dimension_numbers<[1], [0], [0], [1], [0, 0, 1, 1], [], []>} : vector<256x128xbf16>, vector<128x128xbf16>, vector<256x128xf32> -> vector<256x128xf32>
    %144 = arith.addf %137, %143 : vector<256x128xf32>
    %c0_138 = arith.constant 0 : index
    %c0_139 = arith.constant 0 : index
    %145 = vector.load %arg6[%c0_138, %c0_139] : memref<1x128xf32, #tpu.memory_space<vmem>>, vector<1x128xf32>
    %146 = vector.broadcast %145 : vector<1x128xf32> to vector<256x128xf32>
    %147 = arith.mulf %144, %146 : vector<256x128xf32>
    %c0_140 = arith.constant 0 : index
    %c0_141 = arith.constant 0 : index
    %148 = vector.load %arg7[%c0_140, %c0_141] : memref<1x128xf32, #tpu.memory_space<vmem>>, vector<1x128xf32>
    %149 = vector.broadcast %148 : vector<1x128xf32> to vector<256x128xf32>
    %150 = arith.addf %147, %149 : vector<256x128xf32>
    %cst_142 = arith.constant 0.000000e+00 : f32
    %151 = vector.broadcast %cst_142 : f32 to vector<256x128xf32>
    %152 = arith.maximumf %150, %151 : vector<256x128xf32>
    %153 = vector.shape_cast %152 : vector<256x128xf32> to vector<16x16x128xf32>
    %c0_143 = arith.constant 0 : index
    %c0_144 = arith.constant 0 : index
    %c0_145 = arith.constant 0 : index
    %c0_146 = arith.constant 0 : index
    %154 = vector.load %arg8[%c0_143, %c0_144, %c0_145, %c0_146] : memref<1x16x16x128xf32, #tpu.memory_space<vmem>>, vector<1x16x16x128xf32>
    %155 = vector.shape_cast %154 : vector<1x16x16x128xf32> to vector<16x16x128xf32>
    %156 = vector.shape_cast %153 : vector<16x16x128xf32> to vector<1x16x16x128xf32>
    tpu.vector_store %arg8[%c0_143, %c0_144, %c0_145, %c0_146], %156 {strides = array<i32>} : memref<1x16x16x128xf32, #tpu.memory_space<vmem>>, vector<1x16x16x128xf32>,
    %cst_147 = arith.constant 0xFF800000 : f32
    %157 = vector.broadcast %cst_147 : f32 to vector<16x16x128xf32>
    %c0_148 = arith.constant 0 : index
    %c0_149 = arith.constant 0 : index
    %c0_150 = arith.constant 0 : index
    %158 = vector.load %arg12[%c0_148, %c0_149, %c0_150] : memref<16x16x128xf32, #tpu.memory_space<vmem>>, vector<16x16x128xf32>
    tpu.vector_store %arg12[%c0_148, %c0_149, %c0_150], %157 {strides = array<i32>} : memref<16x16x128xf32, #tpu.memory_space<vmem>>, vector<16x16x128xf32>,
    %c0_151 = arith.constant 0 : index
    %c0_152 = arith.constant 0 : index
    %c0_153 = arith.constant 0 : index
    %159 = vector.load %arg12[%c0_151, %c0_152, %c0_153] : memref<16x16x128xf32, #tpu.memory_space<vmem>>, vector<16x16x128xf32>
    tpu.vector_store %arg12[%c0_151, %c0_152, %c0_153], %153 {strides = array<i32>} : memref<16x16x128xf32, #tpu.memory_space<vmem>>, vector<16x16x128xf32>,
    %c0_154 = arith.constant 0 : index
    %c0_155 = arith.constant 0 : index
    %c0_156 = arith.constant 0 : index
    %160 = tpu.strided_load %arg12[%c0_154, %c0_155, %c0_156] {strides = array<i32: 2, 2, 1>} : memref<16x16x128xf32, #tpu.memory_space<vmem>>, vector<8x8x128xf32>
    %c0_157 = arith.constant 0 : index
    %c1_158 = arith.constant 1 : index
    %c0_159 = arith.constant 0 : index
    %161 = tpu.strided_load %arg12[%c0_157, %c1_158, %c0_159] {strides = array<i32: 2, 2, 1>} : memref<16x16x128xf32, #tpu.memory_space<vmem>>, vector<8x8x128xf32>
    %c1_160 = arith.constant 1 : index
    %c0_161 = arith.constant 0 : index
    %c0_162 = arith.constant 0 : index
    %162 = tpu.strided_load %arg12[%c1_160, %c0_161, %c0_162] {strides = array<i32: 2, 2, 1>} : memref<16x16x128xf32, #tpu.memory_space<vmem>>, vector<8x8x128xf32>
    %c1_163 = arith.constant 1 : index
    %c1_164 = arith.constant 1 : index
    %c0_165 = arith.constant 0 : index
    %163 = tpu.strided_load %arg12[%c1_163, %c1_164, %c0_165] {strides = array<i32: 2, 2, 1>} : memref<16x16x128xf32, #tpu.memory_space<vmem>>, vector<8x8x128xf32>
    %164 = arith.maximumf %160, %161 : vector<8x8x128xf32>
    %165 = arith.maximumf %162, %163 : vector<8x8x128xf32>
    %166 = arith.maximumf %164, %165 : vector<8x8x128xf32>
    %c0_166 = arith.constant 0 : index
    %c0_167 = arith.constant 0 : index
    %c0_168 = arith.constant 0 : index
    %c0_169 = arith.constant 0 : index
    %167 = vector.load %arg9[%c0_166, %c0_167, %c0_168, %c0_169] : memref<1x8x8x128xf32, #tpu.memory_space<vmem>>, vector<1x8x8x128xf32>
    %168 = vector.shape_cast %167 : vector<1x8x8x128xf32> to vector<8x8x128xf32>
    %169 = vector.shape_cast %166 : vector<8x8x128xf32> to vector<1x8x8x128xf32>
    tpu.vector_store %arg9[%c0_166, %c0_167, %c0_168, %c0_169], %169 {strides = array<i32>} : memref<1x8x8x128xf32, #tpu.memory_space<vmem>>, vector<1x8x8x128xf32>,
    return
  }
  func.func @transform_0(%arg0: i32) -> (i32, i32, i32, i32) {
    %c0_i32 = arith.constant 0 : i32
    %c0_i32_0 = arith.constant 0 : i32
    %c0_i32_1 = arith.constant 0 : i32
    %c0_i32_2 = arith.constant 0 : i32
    return %arg0, %c0_i32, %c0_i32_0, %c0_i32_1 : i32, i32, i32, i32
  }
  func.func @transform_1(%arg0: i32) -> (i32, i32, i32) {
    %c0_i32 = arith.constant 0 : i32
    %c0_i32_0 = arith.constant 0 : i32
    %c0_i32_1 = arith.constant 0 : i32
    %c0_i32_2 = arith.constant 0 : i32
    return %c0_i32, %c0_i32_0, %c0_i32_1 : i32, i32, i32
  }
  func.func @transform_2(%arg0: i32) -> (i32, i32) {
    %c0_i32 = arith.constant 0 : i32
    %c0_i32_0 = arith.constant 0 : i32
    %c0_i32_1 = arith.constant 0 : i32
    return %c0_i32, %c0_i32_0 : i32, i32
  }
  func.func @transform_3(%arg0: i32) -> (i32, i32) {
    %c0_i32 = arith.constant 0 : i32
    %c0_i32_0 = arith.constant 0 : i32
    %c0_i32_1 = arith.constant 0 : i32
    return %c0_i32, %c0_i32_0 : i32, i32
  }
  func.func @transform_4(%arg0: i32) -> (i32, i32, i32) {
    %c0_i32 = arith.constant 0 : i32
    %c0_i32_0 = arith.constant 0 : i32
    %c0_i32_1 = arith.constant 0 : i32
    %c0_i32_2 = arith.constant 0 : i32
    return %c0_i32, %c0_i32_0, %c0_i32_1 : i32, i32, i32
  }
  func.func @transform_5(%arg0: i32) -> (i32, i32) {
    %c0_i32 = arith.constant 0 : i32
    %c0_i32_0 = arith.constant 0 : i32
    %c0_i32_1 = arith.constant 0 : i32
    return %c0_i32, %c0_i32_0 : i32, i32
  }
  func.func @transform_6(%arg0: i32) -> (i32, i32) {
    %c0_i32 = arith.constant 0 : i32
    %c0_i32_0 = arith.constant 0 : i32
    %c0_i32_1 = arith.constant 0 : i32
    return %c0_i32, %c0_i32_0 : i32, i32
  }
  func.func @transform_7(%arg0: i32) -> (i32, i32, i32, i32) {
    %c0_i32 = arith.constant 0 : i32
    %c0_i32_0 = arith.constant 0 : i32
    %c0_i32_1 = arith.constant 0 : i32
    %c0_i32_2 = arith.constant 0 : i32
    return %arg0, %c0_i32, %c0_i32_0, %c0_i32_1 : i32, i32, i32, i32
  }
  func.func @transform_8(%arg0: i32) -> (i32, i32, i32, i32) {
    %c0_i32 = arith.constant 0 : i32
    %c0_i32_0 = arith.constant 0 : i32
    %c0_i32_1 = arith.constant 0 : i32
    %c0_i32_2 = arith.constant 0 : i32
    return %arg0, %c0_i32, %c0_i32_0, %c0_i32_1 : i32, i32, i32, i32
  }
}

</mosaic_0001>

<llo_original>
// kernel: stack_encoder_2d.1
$region0: #{stack_encoder_2d.1}
  #allocation0 [shape = 'u32[]', space=smem, size = 0x4, offset = 0x4, fixed_abs, tag = 'smem constant byte address 0x4 - core index']
  #allocation1 [shape = 'u32[72,128]{1,0:T(1,128)}', space=vmem, size = 0x9000, scoped, tag = 'internal scratch']
  #allocation2 [shape = 'f32[33,33,128]{2,1,0:T(8,128)}', space=vmem, size = 0xa5000, scoped, tag = 'scratch operand']
  #allocation3 [shape = 'f32[33,33,128]{2,1,0:T(8,128)}', space=vmem, size = 0xa5000, scoped, tag = 'scratch operand']
  #allocation4 [shape = 'f32[16,16,128]{2,1,0:T(8,128)}', space=vmem, size = 0x20000, scoped, tag = 'scratch operand']
  %s0 = inlined_call_operand.vmem [shape: f32[2,16,16,128], index: 0, kind: input, shape index: {}]
  %s1 = inlined_call_operand.vmem [shape: bf16[9,128,128], index: 1, kind: input, shape index: {}]
  %s2 = inlined_call_operand.vmem [shape: f32[1,128], index: 2, kind: input, shape index: {}]
  %s3 = inlined_call_operand.vmem [shape: f32[1,128], index: 3, kind: input, shape index: {}]
  %s4 = inlined_call_operand.vmem [shape: bf16[9,128,128], index: 4, kind: input, shape index: {}]
  %s5 = inlined_call_operand.vmem [shape: f32[1,128], index: 5, kind: input, shape index: {}]
  %s6 = inlined_call_operand.vmem [shape: f32[1,128], index: 6, kind: input, shape index: {}]
  %s7 = inlined_call_operand.vmem [shape: f32[2,16,16,128], index: 7, kind: output, shape index: {0}]
  %s8 = inlined_call_operand.vmem [shape: f32[2,8,8,128], index: 8, kind: output, shape index: {1}]
  %9 = xla_tuple %s7, %s8
  %s10 = sld [smem:[#allocation0]]
  $region69: #{stack_encoder_2d.1} parent=0
    _
  %s12 = ssub.s32 1, %s10
  %s13 = scalar_select 0, %s12, %s10
  loop: start=0, step=1, limit=4
  $region2: #{stack_encoder_2d.1} parent=0 // loop_pre_header
    _
  $region3: #{stack_encoder_2d.1} parent=0 // loop_header
    %s15 = sphi 0, %s19
    %p16 = scmp.ge.s32.totalorder %s15, 4
    %s25 = sphi 0, %s27
    %s28 = sphi 0, %s25
    %s29 = sphi 0, %s28
    %s45 = sphi 0, %s29
    %s49 = sphi 0, %s49
    %s51 = sphi 0, %s49
    %s52 = sphi 0, %s51
    %s66 = sphi 0, %s52
    %s70 = sphi 0, %s70
    %s72 = sphi 0, %s70
    %s73 = sphi 0, %s72
    %s87 = sphi 0, %s73
    %s91 = sphi 0, %s91
    %s93 = sphi 0, %s91
    %s94 = sphi 0, %s93
    %s108 = sphi 0, %s94
    %s112 = sphi 0, %s112
    %s114 = sphi 0, %s112
    %s115 = sphi 0, %s114
    %s129 = sphi 0, %s115
    %s133 = sphi 0, %s133
    %s135 = sphi 0, %s133
    %s136 = sphi 0, %s135
    %s150 = sphi 0, %s136
    %s154 = sphi 0, %s154
    %s156 = sphi 0, %s154
    %s157 = sphi 0, %s156
    %s171 = sphi 0, %s157
    %s177 = sphi 0, %s179
    %s180 = sphi 0, %s177
    %s181 = sphi 0, %s180
    %s197 = sphi 0, %s181
    %s203 = sphi 0, %s205
    %s206 = sphi 0, %s203
    %s207 = sphi 0, %s206
    %s223 = sphi 0, %s207
  $region4: #{stack_encoder_2d.1} parent=0 // loop_header_branch
    %18 = sbr.rel (%p16) target = $region8
  $region5: #{stack_encoder_2d.1} parent=0 // loop_body
    %s20 = ssub.s32 %s15, 1
    %s21 = ssub.s32 %s15, 2
    %s22 = sadd.s32 %s15, 1
    %s23 = ssub.s32 %s15, %s22
    %p24 = scmp.eq.s32.totalorder %s23, 0
    %s26 = sadd.s32 %s25, 1
    %s27 = scalar_select %p24, %s25, %s26
    %p30 = pneg %p24
    %p31 = scmp.eq.s32.totalorder %s15, 1
    %p32 = por %p30, %p31
    %p33 = scmp.ne.s32.totalorder %s25, %s28
    %p34 = scmp.eq.s32.totalorder %s15, 0
    %p35 = por %p33, %p34
    %p36 = scmp.ne.s32.totalorder %s25, %s28
    %p37 = scmp.eq.s32.totalorder %s20, 1
    %p38 = por %p36, %p37
    %p39 = scmp.ne.s32.totalorder %s28, %s29
    %p40 = scmp.eq.s32.totalorder %s20, 0
    %p41 = por %p39, %p40
    %p42 = scmp.ne.s32.totalorder %s28, %s29
    %p43 = scmp.eq.s32.totalorder %s21, 1
    %p44 = por %p42, %p43
    %p46 = scmp.ne.s32.totalorder %s29, %s45
    %p47 = scmp.eq.s32.totalorder %s21, 0
    %p48 = por %p46, %p47
    %s50 = sadd.s32 %s49, 1
    %p53 = scmp.eq.s32.totalorder %s15, 1
    %p54 = scmp.ne.s32.totalorder %s49, %s51
    %p55 = scmp.eq.s32.totalorder %s15, 0
    %p56 = por %p54, %p55
    %p57 = scmp.ne.s32.totalorder %s49, %s51
    %p58 = scmp.eq.s32.totalorder %s20, 1
    %p59 = por %p57, %p58
    %p60 = scmp.ne.s32.totalorder %s51, %s52
    %p61 = scmp.eq.s32.totalorder %s20, 0
    %p62 = por %p60, %p61
    %p63 = scmp.ne.s32.totalorder %s51, %s52
    %p64 = scmp.eq.s32.totalorder %s21, 1
    %p65 = por %p63, %p64
    %p67 = scmp.ne.s32.totalorder %s52, %s66
    %p68 = scmp.eq.s32.totalorder %s21, 0
    %p69 = por %p67, %p68
    %s71 = sadd.s32 %s70, 1
    %p74 = scmp.eq.s32.totalorder %s15, 1
    %p75 = scmp.ne.s32.totalorder %s70, %s72
    %p76 = scmp.eq.s32.totalorder %s15, 0
    %p77 = por %p75, %p76
    %p78 = scmp.ne.s32.totalorder %s70, %s72
    %p79 = scmp.eq.s32.totalorder %s20, 1
    %p80 = por %p78, %p79
    %p81 = scmp.ne.s32.totalorder %s72, %s73
    %p82 = scmp.eq.s32.totalorder %s20, 0
    %p83 = por %p81, %p82
    %p84 = scmp.ne.s32.totalorder %s72, %s73
    %p85 = scmp.eq.s32.totalorder %s21, 1
    %p86 = por %p84, %p85
    %p88 = scmp.ne.s32.totalorder %s73, %s87
    %p89 = scmp.eq.s32.totalorder %s21, 0
    %p90 = por %p88, %p89
    %s92 = sadd.s32 %s91, 1
    %p95 = scmp.eq.s32.totalorder %s15, 1
    %p96 = scmp.ne.s32.totalorder %s91, %s93
    %p97 = scmp.eq.s32.totalorder %s15, 0
    %p98 = por %p96, %p97
    %p99 = scmp.ne.s32.totalorder %s91, %s93
    %p100 = scmp.eq.s32.totalorder %s20, 1
    %p101 = por %p99, %p100
    %p102 = scmp.ne.s32.totalorder %s93, %s94
    %p103 = scmp.eq.s32.totalorder %s20, 0
    %p104 = por %p102, %p103
    %p105 = scmp.ne.s32.totalorder %s93, %s94
    %p106 = scmp.eq.s32.totalorder %s21, 1
    %p107 = por %p105, %p106
    %p109 = scmp.ne.s32.totalorder %s94, %s108
    %p110 = scmp.eq.s32.totalorder %s21, 0
    %p111 = por %p109, %p110
    %s113 = sadd.s32 %s112, 1
    %p116 = scmp.eq.s32.totalorder %s15, 1
    %p117 = scmp.ne.s32.totalorder %s112, %s114
    %p118 = scmp.eq.s32.totalorder %s15, 0
    %p119 = por %p117, %p118
    %p120 = scmp.ne.s32.totalorder %s112, %s114
    %p121 = scmp.eq.s32.totalorder %s20, 1
    %p122 = por %p120, %p121
    %p123 = scmp.ne.s32.totalorder %s114, %s115
    %p124 = scmp.eq.s32.totalorder %s20, 0
    %p125 = por %p123, %p124
    %p126 = scmp.ne.s32.totalorder %s114, %s115
    %p127 = scmp.eq.s32.totalorder %s21, 1
    %p128 = por %p126, %p127
    %p130 = scmp.ne.s32.totalorder %s115, %s129
    %p131 = scmp.eq.s32.totalorder %s21, 0
    %p132 = por %p130, %p131
    %s134 = sadd.s32 %s133, 1
    %p137 = scmp.eq.s32.totalorder %s15, 1
    %p138 = scmp.ne.s32.totalorder %s133, %s135
    %p139 = scmp.eq.s32.totalorder %s15, 0
    %p140 = por %p138, %p139
    %p141 = scmp.ne.s32.totalorder %s133, %s135
    %p142 = scmp.eq.s32.totalorder %s20, 1
    %p143 = por %p141, %p142
    %p144 = scmp.ne.s32.totalorder %s135, %s136
    %p145 = scmp.eq.s32.totalorder %s20, 0
    %p146 = por %p144, %p145
    %p147 = scmp.ne.s32.totalorder %s135, %s136
    %p148 = scmp.eq.s32.totalorder %s21, 1
    %p149 = por %p147, %p148
    %p151 = scmp.ne.s32.totalorder %s136, %s150
    %p152 = scmp.eq.s32.totalorder %s21, 0
    %p153 = por %p151, %p152
    %s155 = sadd.s32 %s154, 1
    %p158 = scmp.eq.s32.totalorder %s15, 1
    %p159 = scmp.ne.s32.totalorder %s154, %s156
    %p160 = scmp.eq.s32.totalorder %s15, 0
    %p161 = por %p159, %p160
    %p162 = scmp.ne.s32.totalorder %s154, %s156
    %p163 = scmp.eq.s32.totalorder %s20, 1
    %p164 = por %p162, %p163
    %p165 = scmp.ne.s32.totalorder %s156, %s157
    %p166 = scmp.eq.s32.totalorder %s20, 0
    %p167 = por %p165, %p166
    %p168 = scmp.ne.s32.totalorder %s156, %s157
    %p169 = scmp.eq.s32.totalorder %s21, 1
    %p170 = por %p168, %p169
    %p172 = scmp.ne.s32.totalorder %s157, %s171
    %p173 = scmp.eq.s32.totalorder %s21, 0
    %p174 = por %p172, %p173
    %s175 = ssub.s32 %s15, %s22
    %p176 = scmp.eq.s32.totalorder %s175, 0
    %s178 = sadd.s32 %s177, 1
    %s179 = scalar_select %p176, %s177, %s178
    %p182 = pneg %p176
    %p183 = scmp.eq.s32.totalorder %s15, 1
    %p184 = por %p182, %p183
    %p185 = scmp.ne.s32.totalorder %s177, %s180
    %p186 = scmp.eq.s32.totalorder %s15, 0
    %p187 = por %p185, %p186
    %p188 = scmp.ne.s32.totalorder %s177, %s180
    %p189 = scmp.eq.s32.totalorder %s20, 1
    %p190 = por %p188, %p189
    %p191 = scmp.ne.s32.totalorder %s180, %s181
    %p192 = scmp.eq.s32.totalorder %s20, 0
    %p193 = por %p191, %p192
    %p194 = scmp.ne.s32.totalorder %s180, %s181
    %p195 = scmp.eq.s32.totalorder %s21, 1
    %p196 = por %p194, %p195
    %p198 = scmp.ne.s32.totalorder %s181, %s197
    %p199 = scmp.eq.s32.totalorder %s21, 0
    %p200 = por %p198, %p199
    %s201 = ssub.s32 %s15, %s22
    %p202 = scmp.eq.s32.totalorder %s201, 0
    %s204 = sadd.s32 %s203, 1
    %s205 = scalar_select %p202, %s203, %s204
    %p208 = pneg %p202
    %p209 = scmp.eq.s32.totalorder %s15, 1
    %p210 = por %p208, %p209
    %p211 = scmp.ne.s32.totalorder %s203, %s206
    %p212 = scmp.eq.s32.totalorder %s15, 0
    %p213 = por %p211, %p212
    %p214 = scmp.ne.s32.totalorder %s203, %s206
    %p215 = scmp.eq.s32.totalorder %s20, 1
    %p216 = por %p214, %p215
    %p217 = scmp.ne.s32.totalorder %s206, %s207
    %p218 = scmp.eq.s32.totalorder %s20, 0
    %p219 = por %p217, %p218
    %p220 = scmp.ne.s32.totalorder %s206, %s207
    %p221 = scmp.eq.s32.totalorder %s21, 1
    %p222 = por %p220, %p221
    %p224 = scmp.ne.s32.totalorder %s207, %s223
    %p225 = scmp.eq.s32.totalorder %s21, 0
    %p226 = por %p224, %p225
    %p227 = scmp.le.s32.totalorder 1, %s15
    %p228 = scmp.lt.s32.totalorder %s15, 3
    %p229 = pnand %p227, %p228
    %p230 = pneg %p229
    // Predicated region
    $region9: #{stack_encoder_2d.1} parent=5 // pred_check
      _
    $region10: #{stack_encoder_2d.1} parent=5 // pred_check_branch
      %232 = sbr.rel (%p229) target = $region12
    $region11: #{stack_encoder_2d.1} parent=5 // pred_region
      %s233 = ssub.s32 %s15, 1
      // Predicated region
      $region13: #{stack_encoder_2d.1} parent=11 // pred_check
        %p234 = pneg %p62
      $region14: #{stack_encoder_2d.1} parent=11 // pred_check_branch
        %236 = sbr.rel (%p234) target = $region16
      $region15: #{stack_encoder_2d.1} parent=11 // pred_region
        _
      $region16: #{stack_encoder_2d.1} parent=11 // pred_fallthru
        _
      // Predicated region
      $region17: #{stack_encoder_2d.1} parent=11 // pred_check
        %p237 = pneg %p83
      $region18: #{stack_encoder_2d.1} parent=11 // pred_check_branch
        %239 = sbr.rel (%p237) target = $region20
      $region19: #{stack_encoder_2d.1} parent=11 // pred_region
        _
      $region20: #{stack_encoder_2d.1} parent=11 // pred_fallthru
        _
      // Predicated region
      $region21: #{stack_encoder_2d.1} parent=11 // pred_check
        %p240 = pneg %p104
      $region22: #{stack_encoder_2d.1} parent=11 // pred_check_branch
        %242 = sbr.rel (%p240) target = $region24
      $region23: #{stack_encoder_2d.1} parent=11 // pred_region
        _
      $region24: #{stack_encoder_2d.1} parent=11 // pred_fallthru
        _
      // Predicated region
      $region25: #{stack_encoder_2d.1} parent=11 // pred_check
        %p243 = pneg %p125
      $region26: #{stack_encoder_2d.1} parent=11 // pred_check_branch
        %245 = sbr.rel (%p243) target = $region28
      $region27: #{stack_encoder_2d.1} parent=11 // pred_region
        _
      $region28: #{stack_encoder_2d.1} parent=11 // pred_fallthru
        _
      // Predicated region
      $region29: #{stack_encoder_2d.1} parent=11 // pred_check
        %p246 = pneg %p146
      $region30: #{stack_encoder_2d.1} parent=11 // pred_check_branch
        %248 = sbr.rel (%p246) target = $region32
      $region31: #{stack_encoder_2d.1} parent=11 // pred_region
        _
      $region32: #{stack_encoder_2d.1} parent=11 // pred_fallthru
        _
      // Predicated region
      $region33: #{stack_encoder_2d.1} parent=11 // pred_check
        %p249 = pneg %p167
      $region34: #{stack_encoder_2d.1} parent=11 // pred_check_branch
        %251 = sbr.rel (%p249) target = $region36
      $region35: #{stack_encoder_2d.1} parent=11 // pred_region
        _
      $region36: #{stack_encoder_2d.1} parent=11 // pred_fallthru
        _
    $region12: #{stack_encoder_2d.1} parent=5 // pred_fallthru
      _
    %p252 = scmp.lt.s32.totalorder %s15, 2
    // Predicated region
    $region37: #{stack_encoder_2d.1} parent=5 // pred_check
      %p253 = pneg %p252
    $region38: #{stack_encoder_2d.1} parent=5 // pred_check_branch
      %255 = sbr.rel (%p253) target = $region40
    $region39: #{stack_encoder_2d.1} parent=5 // pred_region
      // Predicated region
      $region41: #{stack_encoder_2d.1} parent=39 // pred_check
        %p256 = pneg %p35
      $region42: #{stack_encoder_2d.1} parent=39 // pred_check_branch
        %258 = sbr.rel (%p256) target = $region44
      $region43: #{stack_encoder_2d.1} parent=39 // pred_region
        %p259 = scmp.lt.s32.totalorder %s15, 1
        %s260 = scalar_select %p259, %s15, 1
        %s261 = smul.addr %s260, 32
        %s262 = smul.addr %s261, 8
        %s263 = scalar_lea.vmem %s0, %s262
      $region44: #{stack_encoder_2d.1} parent=39 // pred_fallthru
        _
    $region40: #{stack_encoder_2d.1} parent=5 // pred_fallthru
      _
    %p264 = scmp.le.s32.totalorder 1, %s15
    %p265 = scmp.lt.s32.totalorder %s15, 3
    %p266 = pnand %p264, %p265
    %p267 = pneg %p266
    // Predicated region
    $region45: #{stack_encoder_2d.1} parent=5 // pred_check
      _
    $region46: #{stack_encoder_2d.1} parent=5 // pred_check_branch
      %269 = sbr.rel (%p266) target = $region48
    $region47: #{stack_encoder_2d.1} parent=5 // pred_region
      %s270 = ssub.s32 %s15, 1
      %p271 = scmp.lt.s32.totalorder %s20, 1
      %s272 = scalar_select %p271, %s20, 1
      %s273 = smul.addr %s272, 32
      %s274 = smul.addr %s273, 8
      %s275 = scalar_lea.vmem %s0, %s274
      %p276 = pneg %p41
      %p277 = pneg %p38
      %p278 = pneg %p62
      %p279 = pneg %p59
      %p280 = pneg %p83
      %p281 = pneg %p80
      %p282 = pneg %p104
      %p283 = pneg %p101
      %p284 = pneg %p125
      %p285 = pneg %p122
      %p286 = pneg %p146
      %p287 = pneg %p143
      %p288 = pneg %p167
      %p289 = pneg %p164
      %p290 = pneg %p193
      %p291 = pneg %p190
      %p292 = scmp.lt.s32.totalorder %s20, 1
      %s293 = scalar_select %p292, %s20, 1
      %s294 = smul.addr %s293, 32
      %s295 = smul.addr %s294, 8
      %s296 = scalar_lea.vmem %s7, %s295
      %p297 = pneg %p219
      %p298 = pneg %p216
      %p299 = scmp.lt.s32.totalorder %s20, 1
      %s300 = scalar_select %p299, %s20, 1
      %s301 = smul.addr %s300, 8
      %s302 = smul.addr %s301, 8
      %s303 = scalar_lea.vmem %s8, %s302
      %p304 = scmp.lt.s32.totalorder %s20, 1
      %s305 = scalar_select %p304, %s20, 1
      %s306 = smul.addr %s305, 32
      %s307 = smul.addr %s306, 8
      %s308 = scalar_lea.vmem %s0, %s307
      %p309 = scmp.lt.s32.totalorder %s20, 1
      %s310 = scalar_select %p309, %s20, 1
      %s311 = smul.addr %s310, 32
      %s312 = smul.addr %s311, 8
      %s313 = scalar_lea.vmem %s7, %s312
      %p314 = scmp.lt.s32.totalorder %s20, 1
      %s315 = scalar_select %p314, %s20, 1
      %s316 = smul.addr %s315, 8
      %s317 = smul.addr %s316, 8
      %s318 = scalar_lea.vmem %s8, %s317
      %319 = vst [vmem:[#allocation2] sm:$0xff] 0.0
      %320 = vst [vmem:[#allocation2 + $0x8] sm:$0xff] 0.0
      %321 = vst [vmem:[#allocation2 + $0x10] sm:$0xff] 0.0
      %322 = vst [vmem:[#allocation2 + $0x18] sm:$0xff] 0.0
      %323 = vst [vmem:[#allocation2 + $0x20] sm:$0x1] 0.0
      %324 = vst [vmem:[#allocation2 + $0x28] sm:$0xff] 0.0
      %325 = vst [vmem:[#allocation2 + $0x30] sm:$0xff] 0.0
      %326 = vst [vmem:[#allocation2 + $0x38] sm:$0xff] 0.0
      %327 = vst [vmem:[#allocation2 + $0x40] sm:$0xff] 0.0
      %328 = vst [vmem:[#allocation2 + $0x48] sm:$0x1] 0.0
      %329 = vst [vmem:[#allocation2 + $0x50] sm:$0xff] 0.0
      %330 = vst [vmem:[#allocation2 + $0x58] sm:$0xff] 0.0
      %331 = vst [vmem:[#allocation2 + $0x60] sm:$0xff] 0.0
      %332 = vst [vmem:[#allocation2 + $0x68] sm:$0xff] 0.0
      %333 = vst [vmem:[#allocation2 + $0x70] sm:$0x1] 0.0
      %334 = vst [vmem:[#allocation2 + $0x78] sm:$0xff] 0.0
      %335 = vst [vmem:[#allocation2 + $0x80] sm:$0xff] 0.0
      %336 = vst [vmem:[#allocation2 + $0x88] sm:$0xff] 0.0
      %337 = vst [vmem:[#allocation2 + $0x90] sm:$0xff] 0.0
      %338 = vst [vmem:[#allocation2 + $0x98] sm:$0x1] 0.0
      %339 = vst [vmem:[#allocation2 + $0xa0] sm:$0xff] 0.0
      %340 = vst [vmem:[#allocation2 + $0xa8] sm:$0xff] 0.0
      %341 = vst [vmem:[#allocation2 + $0xb0] sm:$0xff] 0.0
      %342 = vst [vmem:[#allocation2 + $0xb8] sm:$0xff] 0.0
      %343 = vst [vmem:[#allocation2 + $0xc0] sm:$0x1] 0.0
      %344 = vst [vmem:[#allocation2 + $0xc8] sm:$0xff] 0.0
      %345 = vst [vmem:[#allocation2 + $0xd0] sm:$0xff] 0.0
      %346 = vst [vmem:[#allocation2 + $0xd8] sm:$0xff] 0.0
      %347 = vst [vmem:[#allocation2 + $0xe0] sm:$0xff] 0.0
      %348 = vst [vmem:[#allocation2 + $0xe8] sm:$0x1] 0.0
      %349 = vst [vmem:[#allocation2 + $0xf0] sm:$0xff] 0.0
      %350 = vst [vmem:[#allocation2 + $0xf8] sm:$0xff] 0.0
      %351 = vst [vmem:[#allocation2 + $0x100] sm:$0xff] 0.0
      %352 = vst [vmem:[#allocation2 + $0x108] sm:$0xff] 0.0
      %353 = vst [vmem:[#allocation2 + $0x110] sm:$0x1] 0.0
      %354 = vst [vmem:[#allocation2 + $0x118] sm:$0xff] 0.0
      %355 = vst [vmem:[#allocation2 + $0x120] sm:$0xff] 0.0
      %356 = vst [vmem:[#allocation2 + $0x128] sm:$0xff] 0.0
      %357 = vst [vmem:[#allocation2 + $0x130] sm:$0xff] 0.0
      %358 = vst [vmem:[#allocation2 + $0x138] sm:$0x1] 0.0
      %359 = vst [vmem:[#allocation2 + $0x140] sm:$0xff] 0.0
      %360 = vst [vmem:[#allocation2 + $0x148] sm:$0xff] 0.0
      %361 = vst [vmem:[#allocation2 + $0x150] sm:$0xff] 0.0
      %362 = vst [vmem:[#allocation2 + $0x158] sm:$0xff] 0.0
      %363 = vst [vmem:[#allocation2 + $0x160] sm:$0x1] 0.0
      %364 = vst [vmem:[#allocation2 + $0x168] sm:$0xff] 0.0
      %365 = vst [vmem:[#allocation2 + $0x170] sm:$0xff] 0.0
      %366 = vst [vmem:[#allocation2 + $0x178] sm:$0xff] 0.0
      %367 = vst [vmem:[#allocation2 + $0x180] sm:$0xff] 0.0
      %368 = vst [vmem:[#allocation2 + $0x188] sm:$0x1] 0.0
      %369 = vst [vmem:[#allocation2 + $0x190] sm:$0xff] 0.0
      %370 = vst [vmem:[#allocation2 + $0x198] sm:$0xff] 0.0
      %371 = vst [vmem:[#allocation2 + $0x1a0] sm:$0xff] 0.0
      %372 = vst [vmem:[#allocation2 + $0x1a8] sm:$0xff] 0.0
      %373 = vst [vmem:[#allocation2 + $0x1b0] sm:$0x1] 0.0
      %374 = vst [vmem:[#allocation2 + $0x1b8] sm:$0xff] 0.0
      %375 = vst [vmem:[#allocation2 + $0x1c0] sm:$0xff] 0.0
      %376 = vst [vmem:[#allocation2 + $0x1c8] sm:$0xff] 0.0
      %377 = vst [vmem:[#allocation2 + $0x1d0] sm:$0xff] 0.0
      %378 = vst [vmem:[#allocation2 + $0x1d8] sm:$0x1] 0.0
      %379 = vst [vmem:[#allocation2 + $0x1e0] sm:$0xff] 0.0
      %380 = vst [vmem:[#allocation2 + $0x1e8] sm:$0xff] 0.0
      %381 = vst [vmem:[#allocation2 + $0x1f0] sm:$0xff] 0.0
      %382 = vst [vmem:[#allocation2 + $0x1f8] sm:$0xff] 0.0
      %383 = vst [vmem:[#allocation2 + $0x200] sm:$0x1] 0.0
      %384 = vst [vmem:[#allocation2 + $0x208] sm:$0xff] 0.0
      %385 = vst [vmem:[#allocation2 + $0x210] sm:$0xff] 0.0
      %386 = vst [vmem:[#allocation2 + $0x218] sm:$0xff] 0.0
      %387 = vst [vmem:[#allocation2 + $0x220] sm:$0xff] 0.0
      %388 = vst [vmem:[#allocation2 + $0x228] sm:$0x1] 0.0
      %389 = vst [vmem:[#allocation2 + $0x230] sm:$0xff] 0.0
      %390 = vst [vmem:[#allocation2 + $0x238] sm:$0xff] 0.0
      %391 = vst [vmem:[#allocation2 + $0x240] sm:$0xff] 0.0
      %392 = vst [vmem:[#allocation2 + $0x248] sm:$0xff] 0.0
      %393 = vst [vmem:[#allocation2 + $0x250] sm:$0x1] 0.0
      %394 = vst [vmem:[#allocation2 + $0x258] sm:$0xff] 0.0
      %395 = vst [vmem:[#allocation2 + $0x260] sm:$0xff] 0.0
      %396 = vst [vmem:[#allocation2 + $0x268] sm:$0xff] 0.0
      %397 = vst [vmem:[#allocation2 + $0x270] sm:$0xff] 0.0
      %398 = vst [vmem:[#allocation2 + $0x278] sm:$0x1] 0.0
      %399 = vst [vmem:[#allocation2 + $0x280] sm:$0xff] 0.0
      %400 = vst [vmem:[#allocation2 + $0x288] sm:$0xff] 0.0
      %401 = vst [vmem:[#allocation2 + $0x290] sm:$0xff] 0.0
      %402 = vst [vmem:[#allocation2 + $0x298] sm:$0xff] 0.0
      %403 = vst [vmem:[#allocation2 + $0x2a0] sm:$0x1] 0.0
      %404 = vst [vmem:[#allocation2 + $0x2a8] sm:$0xff] 0.0
      %405 = vst [vmem:[#allocation2 + $0x2b0] sm:$0xff] 0.0
      %406 = vst [vmem:[#allocation2 + $0x2b8] sm:$0xff] 0.0
      %407 = vst [vmem:[#allocation2 + $0x2c0] sm:$0xff] 0.0
      %408 = vst [vmem:[#allocation2 + $0x2c8] sm:$0x1] 0.0
      %409 = vst [vmem:[#allocation2 + $0x2d0] sm:$0xff] 0.0
      %410 = vst [vmem:[#allocation2 + $0x2d8] sm:$0xff] 0.0
      %411 = vst [vmem:[#allocation2 + $0x2e0] sm:$0xff] 0.0
      %412 = vst [vmem:[#allocation2 + $0x2e8] sm:$0xff] 0.0
      %413 = vst [vmem:[#allocation2 + $0x2f0] sm:$0x1] 0.0
      %414 = vst [vmem:[#allocation2 + $0x2f8] sm:$0xff] 0.0
      %415 = vst [vmem:[#allocation2 + $0x300] sm:$0xff] 0.0
      %416 = vst [vmem:[#allocation2 + $0x308] sm:$0xff] 0.0
      %417 = vst [vmem:[#allocation2 + $0x310] sm:$0xff] 0.0
      %418 = vst [vmem:[#allocation2 + $0x318] sm:$0x1] 0.0
      %419 = vst [vmem:[#allocation2 + $0x320] sm:$0xff] 0.0
      %420 = vst [vmem:[#allocation2 + $0x328] sm:$0xff] 0.0
      %421 = vst [vmem:[#allocation2 + $0x330] sm:$0xff] 0.0
      %422 = vst [vmem:[#allocation2 + $0x338] sm:$0xff] 0.0
      %423 = vst [vmem:[#allocation2 + $0x340] sm:$0x1] 0.0
      %424 = vst [vmem:[#allocation2 + $0x348] sm:$0xff] 0.0
      %425 = vst [vmem:[#allocation2 + $0x350] sm:$0xff] 0.0
      %426 = vst [vmem:[#allocation2 + $0x358] sm:$0xff] 0.0
      %427 = vst [vmem:[#allocation2 + $0x360] sm:$0xff] 0.0
      %428 = vst [vmem:[#allocation2 + $0x368] sm:$0x1] 0.0
      %429 = vst [vmem:[#allocation2 + $0x370] sm:$0xff] 0.0
      %430 = vst [vmem:[#allocation2 + $0x378] sm:$0xff] 0.0
      %431 = vst [vmem:[#allocation2 + $0x380] sm:$0xff] 0.0
      %432 = vst [vmem:[#allocation2 + $0x388] sm:$0xff] 0.0
      %433 = vst [vmem:[#allocation2 + $0x390] sm:$0x1] 0.0
      %434 = vst [vmem:[#allocation2 + $0x398] sm:$0xff] 0.0
      %435 = vst [vmem:[#allocation2 + $0x3a0] sm:$0xff] 0.0
      %436 = vst [vmem:[#allocation2 + $0x3a8] sm:$0xff] 0.0
      %437 = vst [vmem:[#allocation2 + $0x3b0] sm:$0xff] 0.0
      %438 = vst [vmem:[#allocation2 + $0x3b8] sm:$0x1] 0.0
      %439 = vst [vmem:[#allocation2 + $0x3c0] sm:$0xff] 0.0
      %440 = vst [vmem:[#allocation2 + $0x3c8] sm:$0xff] 0.0
      %441 = vst [vmem:[#allocation2 + $0x3d0] sm:$0xff] 0.0
      %442 = vst [vmem:[#allocation2 + $0x3d8] sm:$0xff] 0.0
      %443 = vst [vmem:[#allocation2 + $0x3e0] sm:$0x1] 0.0
      %444 = vst [vmem:[#allocation2 + $0x3e8] sm:$0xff] 0.0
      %445 = vst [vmem:[#allocation2 + $0x3f0] sm:$0xff] 0.0
      %446 = vst [vmem:[#allocation2 + $0x3f8] sm:$0xff] 0.0
      %447 = vst [vmem:[#allocation2 + $0x400] sm:$0xff] 0.0
      %448 = vst [vmem:[#allocation2 + $0x408] sm:$0x1] 0.0
      %449 = vst [vmem:[#allocation2 + $0x410] sm:$0xff] 0.0
      %450 = vst [vmem:[#allocation2 + $0x418] sm:$0xff] 0.0
      %451 = vst [vmem:[#allocation2 + $0x420] sm:$0xff] 0.0
      %452 = vst [vmem:[#allocation2 + $0x428] sm:$0xff] 0.0
      %453 = vst [vmem:[#allocation2 + $0x430] sm:$0x1] 0.0
      %454 = vst [vmem:[#allocation2 + $0x438] sm:$0xff] 0.0
      %455 = vst [vmem:[#allocation2 + $0x440] sm:$0xff] 0.0
      %456 = vst [vmem:[#allocation2 + $0x448] sm:$0xff] 0.0
      %457 = vst [vmem:[#allocation2 + $0x450] sm:$0xff] 0.0
      %458 = vst [vmem:[#allocation2 + $0x458] sm:$0x1] 0.0
      %459 = vst [vmem:[#allocation2 + $0x460] sm:$0xff] 0.0
      %460 = vst [vmem:[#allocation2 + $0x468] sm:$0xff] 0.0
      %461 = vst [vmem:[#allocation2 + $0x470] sm:$0xff] 0.0
      %462 = vst [vmem:[#allocation2 + $0x478] sm:$0xff] 0.0
      %463 = vst [vmem:[#allocation2 + $0x480] sm:$0x1] 0.0
      %464 = vst [vmem:[#allocation2 + $0x488] sm:$0xff] 0.0
      %465 = vst [vmem:[#allocation2 + $0x490] sm:$0xff] 0.0
      %466 = vst [vmem:[#allocation2 + $0x498] sm:$0xff] 0.0
      %467 = vst [vmem:[#allocation2 + $0x4a0] sm:$0xff] 0.0
      %468 = vst [vmem:[#allocation2 + $0x4a8] sm:$0x1] 0.0
      %469 = vst [vmem:[#allocation2 + $0x4b0] sm:$0xff] 0.0
      %470 = vst [vmem:[#allocation2 + $0x4b8] sm:$0xff] 0.0
      %471 = vst [vmem:[#allocation2 + $0x4c0] sm:$0xff] 0.0
      %472 = vst [vmem:[#allocation2 + $0x4c8] sm:$0xff] 0.0
      %473 = vst [vmem:[#allocation2 + $0x4d0] sm:$0x1] 0.0
      %474 = vst [vmem:[#allocation2 + $0x4d8] sm:$0xff] 0.0
      %475 = vst [vmem:[#allocation2 + $0x4e0] sm:$0xff] 0.0
      %476 = vst [vmem:[#allocation2 + $0x4e8] sm:$0xff] 0.0
      %477 = vst [vmem:[#allocation2 + $0x4f0] sm:$0xff] 0.0
      %478 = vst [vmem:[#allocation2 + $0x4f8] sm:$0x1] 0.0
      %479 = vst [vmem:[#allocation2 + $0x500] sm:$0xff] 0.0
      %480 = vst [vmem:[#allocation2 + $0x508] sm:$0xff] 0.0
      %481 = vst [vmem:[#allocation2 + $0x510] sm:$0xff] 0.0
      %482 = vst [vmem:[#allocation2 + $0x518] sm:$0xff] 0.0
      %483 = vst [vmem:[#allocation2 + $0x520] sm:$0x1] 0.0
      %v484 = vld [vmem:[%s308] sm:$0xff]
      %v485 = vld [vmem:[%s308 + $0x8] sm:$0xff]
      %v486 = vld [vmem:[%s308 + $0x10] sm:$0xff]
      %v487 = vld [vmem:[%s308 + $0x18] sm:$0xff]
      %v488 = vld [vmem:[%s308 + $0x20] sm:$0xff]
      %v489 = vld [vmem:[%s308 + $0x28] sm:$0xff]
      %v490 = vld [vmem:[%s308 + $0x30] sm:$0xff]
      %v491 = vld [vmem:[%s308 + $0x38] sm:$0xff]
      %v492 = vld [vmem:[%s308 + $0x40] sm:$0xff]
      %v493 = vld [vmem:[%s308 + $0x48] sm:$0xff]
      %v494 = vld [vmem:[%s308 + $0x50] sm:$0xff]
      %v495 = vld [vmem:[%s308 + $0x58] sm:$0xff]
      %v496 = vld [vmem:[%s308 + $0x60] sm:$0xff]
      %v497 = vld [vmem:[%s308 + $0x68] sm:$0xff]
      %v498 = vld [vmem:[%s308 + $0x70] sm:$0xff]
      %v499 = vld [vmem:[%s308 + $0x78] sm:$0xff]
      %v500 = vld [vmem:[%s308 + $0x80] sm:$0xff]
      %v501 = vld [vmem:[%s308 + $0x88] sm:$0xff]
      %v502 = vld [vmem:[%s308 + $0x90] sm:$0xff]
      %v503 = vld [vmem:[%s308 + $0x98] sm:$0xff]
      %v504 = vld [vmem:[%s308 + $0xa0] sm:$0xff]
      %v505 = vld [vmem:[%s308 + $0xa8] sm:$0xff]
      %v506 = vld [vmem:[%s308 + $0xb0] sm:$0xff]
      %v507 = vld [vmem:[%s308 + $0xb8] sm:$0xff]
      %v508 = vld [vmem:[%s308 + $0xc0] sm:$0xff]
      %v509 = vld [vmem:[%s308 + $0xc8] sm:$0xff]
      %v510 = vld [vmem:[%s308 + $0xd0] sm:$0xff]
      %v511 = vld [vmem:[%s308 + $0xd8] sm:$0xff]
      %v512 = vld [vmem:[%s308 + $0xe0] sm:$0xff]
      %v513 = vld [vmem:[%s308 + $0xe8] sm:$0xff]
      %v514 = vld [vmem:[%s308 + $0xf0] sm:$0xff]
      %v515 = vld [vmem:[%s308 + $0xf8] sm:$0xff]
      %s516 = scalar_lea.vmem [#allocation2], 640
      %517 = vst [vmem:[%s516 + $0x10] sm:$0xff] %v484
      %518 = vst [vmem:[%s516 + $0x18] sm:$0xff] %v485
      %519 = vst [vmem:[%s516 + $0x38] sm:$0xff] %v486
      %520 = vst [vmem:[%s516 + $0x40] sm:$0xff] %v487
      %521 = vst [vmem:[%s516 + $0x60] sm:$0xff] %v488
      %522 = vst [vmem:[%s516 + $0x68] sm:$0xff] %v489
      %523 = vst [vmem:[%s516 + $0x88] sm:$0xff] %v490
      %524 = vst [vmem:[%s516 + $0x90] sm:$0xff] %v491
      %525 = vst [vmem:[%s516 + $0xb0] sm:$0xff] %v492
      %526 = vst [vmem:[%s516 + $0xb8] sm:$0xff] %v493
      %527 = vst [vmem:[%s516 + $0xd8] sm:$0xff] %v494
      %528 = vst [vmem:[%s516 + $0xe0] sm:$0xff] %v495
      %529 = vst [vmem:[%s516 + $0x100] sm:$0xff] %v496
      %530 = vst [vmem:[%s516 + $0x108] sm:$0xff] %v497
      %531 = vst [vmem:[%s516 + $0x128] sm:$0xff] %v498
      %532 = vst [vmem:[%s516 + $0x130] sm:$0xff] %v499
      %533 = vst [vmem:[%s516 + $0x150] sm:$0xff] %v500
      %534 = vst [vmem:[%s516 + $0x158] sm:$0xff] %v501
      %535 = vst [vmem:[%s516 + $0x178] sm:$0xff] %v502
      %536 = vst [vmem:[%s516 + $0x180] sm:$0xff] %v503
      %537 = vst [vmem:[%s516 + $0x1a0] sm:$0xff] %v504
      %538 = vst [vmem:[%s516 + $0x1a8] sm:$0xff] %v505
      %539 = vst [vmem:[%s516 + $0x1c8] sm:$0xff] %v506
      %540 = vst [vmem:[%s516 + $0x1d0] sm:$0xff] %v507
      %541 = vst [vmem:[%s516 + $0x1f0] sm:$0xff] %v508
      %542 = vst [vmem:[%s516 + $0x1f8] sm:$0xff] %v509
      %543 = vst [vmem:[%s516 + $0x218] sm:$0xff] %v510
      %544 = vst [vmem:[%s516 + $0x220] sm:$0xff] %v511
      %545 = vst [vmem:[%s516 + $0x240] sm:$0xff] %v512
      %546 = vst [vmem:[%s516 + $0x248] sm:$0xff] %v513
      %547 = vst [vmem:[%s516 + $0x268] sm:$0xff] %v514
      %548 = vst [vmem:[%s516 + $0x270] sm:$0xff] %v515
      %s549 = scalar_lea.vmem [#allocation2], 600
      %v550 = vld [vmem:[%s549 + $0xf] sm:$0xff]
      %v551 = vld [vmem:[%s549 + $0x17] sm:$0xff]
      %v552 = vld [vmem:[%s549 + $0x37] sm:$0xff]
      %v553 = vld [vmem:[%s549 + $0x3f] sm:$0xff]
      %v554 = vld [vmem:[%s549 + $0x5f] sm:$0xff]
      %v555 = vld [vmem:[%s549 + $0x67] sm:$0xff]
      %v556 = vld [vmem:[%s549 + $0x87] sm:$0xff]
      %v557 = vld [vmem:[%s549 + $0x8f] sm:$0xff]
      %v558 = vld [vmem:[%s549 + $0xaf] sm:$0xff]
      %v559 = vld [vmem:[%s549 + $0xb7] sm:$0xff]
      %v560 = vld [vmem:[%s549 + $0xd7] sm:$0xff]
      %v561 = vld [vmem:[%s549 + $0xdf] sm:$0xff]
      %v562 = vld [vmem:[%s549 + $0xff] sm:$0xff]
      %v563 = vld [vmem:[%s549 + $0x107] sm:$0xff]
      %v564 = vld [vmem:[%s549 + $0x127] sm:$0xff]
      %v565 = vld [vmem:[%s549 + $0x12f] sm:$0xff]
      %v566 = vld [vmem:[%s549 + $0x14f] sm:$0xff]
      %v567 = vld [vmem:[%s549 + $0x157] sm:$0xff]
      %v568 = vld [vmem:[%s549 + $0x177] sm:$0xff]
      %v569 = vld [vmem:[%s549 + $0x17f] sm:$0xff]
      %v570 = vld [vmem:[%s549 + $0x19f] sm:$0xff]
      %v571 = vld [vmem:[%s549 + $0x1a7] sm:$0xff]
      %v572 = vld [vmem:[%s549 + $0x1c7] sm:$0xff]
      %v573 = vld [vmem:[%s549 + $0x1cf] sm:$0xff]
      %v574 = vld [vmem:[%s549 + $0x1ef] sm:$0xff]
      %v575 = vld [vmem:[%s549 + $0x1f7] sm:$0xff]
      %v576 = vld [vmem:[%s549 + $0x217] sm:$0xff]
      %v577 = vld [vmem:[%s549 + $0x21f] sm:$0xff]
      %v578 = vld [vmem:[%s549 + $0x23f] sm:$0xff]
      %v579 = vld [vmem:[%s549 + $0x247] sm:$0xff]
      %v580 = vld [vmem:[%s549 + $0x267] sm:$0xff]
      %v581 = vld [vmem:[%s549 + $0x26f] sm:$0xff]
      %v582 = vpack.c.bf16 %v551, %v550
      %v583 = vpack.c.bf16 %v553, %v552
      %v584 = vpack.c.bf16 %v555, %v554
      %v585 = vpack.c.bf16 %v557, %v556
      %v586 = vpack.c.bf16 %v559, %v558
      %v587 = vpack.c.bf16 %v561, %v560
      %v588 = vpack.c.bf16 %v563, %v562
      %v589 = vpack.c.bf16 %v565, %v564
      %v590 = vpack.c.bf16 %v567, %v566
      %v591 = vpack.c.bf16 %v569, %v568
      %v592 = vpack.c.bf16 %v571, %v570
      %v593 = vpack.c.bf16 %v573, %v572
      %v594 = vpack.c.bf16 %v575, %v574
      %v595 = vpack.c.bf16 %v577, %v576
      %v596 = vpack.c.bf16 %v579, %v578
      %v597 = vpack.c.bf16 %v581, %v580
      %v598 = vld [vmem:[%s1] sm:$0xf]
      %v599 = vld [vmem:[%s1 + $0x4] sm:$0xf]
      %v600 = vld [vmem:[%s1 + $0x8] sm:$0xf]
      %v601 = vld [vmem:[%s1 + $0xc] sm:$0xf]
      %v602 = vld [vmem:[%s1 + $0x10] sm:$0xf]
      %v603 = vld [vmem:[%s1 + $0x14] sm:$0xf]
      %v604 = vld [vmem:[%s1 + $0x18] sm:$0xf]
      %v605 = vld [vmem:[%s1 + $0x1c] sm:$0xf]
      %v606 = vld [vmem:[%s1 + $0x20] sm:$0xf]
      %v607 = vld [vmem:[%s1 + $0x24] sm:$0xf]
      %v608 = vld [vmem:[%s1 + $0x28] sm:$0xf]
      %v609 = vld [vmem:[%s1 + $0x2c] sm:$0xf]
      %v610 = vld [vmem:[%s1 + $0x30] sm:$0xf]
      %v611 = vld [vmem:[%s1 + $0x34] sm:$0xf]
      %v612 = vld [vmem:[%s1 + $0x38] sm:$0xf]
      %v613 = vld [vmem:[%s1 + $0x3c] sm:$0xf]
      %v614 = vld [vmem:[%s549 + $0x10] sm:$0xff]
      %v615 = vld [vmem:[%s549 + $0x18] sm:$0xff]
      %v616 = vld [vmem:[%s549 + $0x38] sm:$0xff]
      %v617 = vld [vmem:[%s549 + $0x40] sm:$0xff]
      %v618 = vld [vmem:[%s549 + $0x60] sm:$0xff]
      %v619 = vld [vmem:[%s549 + $0x68] sm:$0xff]
      %v620 = vld [vmem:[%s549 + $0x88] sm:$0xff]
      %v621 = vld [vmem:[%s549 + $0x90] sm:$0xff]
      %v622 = vld [vmem:[%s549 + $0xb0] sm:$0xff]
      %v623 = vld [vmem:[%s549 + $0xb8] sm:$0xff]
      %v624 = vld [vmem:[%s549 + $0xd8] sm:$0xff]
      %v625 = vld [vmem:[%s549 + $0xe0] sm:$0xff]
      %v626 = vld [vmem:[%s549 + $0x100] sm:$0xff]
      %v627 = vld [vmem:[%s549 + $0x108] sm:$0xff]
      %v628 = vld [vmem:[%s549 + $0x128] sm:$0xff]
      %v629 = vld [vmem:[%s549 + $0x130] sm:$0xff]
      %v630 = vld [vmem:[%s549 + $0x150] sm:$0xff]
      %v631 = vld [vmem:[%s549 + $0x158] sm:$0xff]
      %v632 = vld [vmem:[%s549 + $0x178] sm:$0xff]
      %v633 = vld [vmem:[%s549 + $0x180] sm:$0xff]
      %v634 = vld [vmem:[%s549 + $0x1a0] sm:$0xff]
      %v635 = vld [vmem:[%s549 + $0x1a8] sm:$0xff]
      %v636 = vld [vmem:[%s549 + $0x1c8] sm:$0xff]
      %v637 = vld [vmem:[%s549 + $0x1d0] sm:$0xff]
      %v638 = vld [vmem:[%s549 + $0x1f0] sm:$0xff]
      %v639 = vld [vmem:[%s549 + $0x1f8] sm:$0xff]
      %v640 = vld [vmem:[%s549 + $0x218] sm:$0xff]
      %v641 = vld [vmem:[%s549 + $0x220] sm:$0xff]
      %v642 = vld [vmem:[%s549 + $0x240] sm:$0xff]
      %v643 = vld [vmem:[%s549 + $0x248] sm:$0xff]
      %v644 = vld [vmem:[%s549 + $0x268] sm:$0xff]
      %v645 = vld [vmem:[%s549 + $0x270] sm:$0xff]
      %v646 = vpack.c.bf16 %v615, %v614
      %v647 = vpack.c.bf16 %v617, %v616
      %v648 = vpack.c.bf16 %v619, %v618
      %v649 = vpack.c.bf16 %v621, %v620
      %v650 = vpack.c.bf16 %v623, %v622
      %v651 = vpack.c.bf16 %v625, %v624
      %v652 = vpack.c.bf16 %v627, %v626
      %v653 = vpack.c.bf16 %v629, %v628
      %v654 = vpack.c.bf16 %v631, %v630
      %v655 = vpack.c.bf16 %v633, %v632
      %v656 = vpack.c.bf16 %v635, %v634
      %v657 = vpack.c.bf16 %v637, %v636
      %v658 = vpack.c.bf16 %v639, %v638
      %v659 = vpack.c.bf16 %v641, %v640
      %v660 = vpack.c.bf16 %v643, %v642
      %v661 = vpack.c.bf16 %v645, %v644
      %s662 = scalar_lea.vmem %s1, 64
      %v663 = vld [vmem:[%s662] sm:$0xf]
      %v664 = vld [vmem:[%s662 + $0x4] sm:$0xf]
      %v665 = vld [vmem:[%s662 + $0x8] sm:$0xf]
      %v666 = vld [vmem:[%s662 + $0xc] sm:$0xf]
      %v667 = vld [vmem:[%s662 + $0x10] sm:$0xf]
      %v668 = vld [vmem:[%s662 + $0x14] sm:$0xf]
      %v669 = vld [vmem:[%s662 + $0x18] sm:$0xf]
      %v670 = vld [vmem:[%s662 + $0x1c] sm:$0xf]
      %v671 = vld [vmem:[%s662 + $0x20] sm:$0xf]
      %v672 = vld [vmem:[%s662 + $0x24] sm:$0xf]
      %v673 = vld [vmem:[%s662 + $0x28] sm:$0xf]
      %v674 = vld [vmem:[%s662 + $0x2c] sm:$0xf]
      %v675 = vld [vmem:[%s662 + $0x30] sm:$0xf]
      %v676 = vld [vmem:[%s662 + $0x34] sm:$0xf]
      %v677 = vld [vmem:[%s662 + $0x38] sm:$0xf]
      %v678 = vld [vmem:[%s662 + $0x3c] sm:$0xf]
      %v695 = vunpack.c.l.b16 %v663
      %v696 = vunpack.c.l.b16 %v664
      %v697 = vunpack.c.l.b16 %v665
      %v698 = vunpack.c.l.b16 %v666
      %v699 = vunpack.c.l.b16 %v667
      %v700 = vunpack.c.l.b16 %v668
      %v701 = vunpack.c.l.b16 %v669
      %v702 = vunpack.c.l.b16 %v670
      %v703 = vunpack.c.l.b16 %v671
      %v704 = vunpack.c.l.b16 %v672
      %v705 = vunpack.c.l.b16 %v673
      %v706 = vunpack.c.l.b16 %v674
      %v707 = vunpack.c.l.b16 %v675
      %v708 = vunpack.c.l.b16 %v676
      %v709 = vunpack.c.l.b16 %v677
      %v710 = vunpack.c.l.b16 %v678
      %v711 = vpack.c.b16 %v696, %v695
      %v712 = vpack.c.b16 %v698, %v697
      %v713 = vpack.c.b16 %v700, %v699
      %v714 = vpack.c.b16 %v702, %v701
      %v715 = vpack.c.b16 %v704, %v703
      %v716 = vpack.c.b16 %v706, %v705
      %v717 = vpack.c.b16 %v708, %v707
      %v718 = vpack.c.b16 %v710, %v709
      %727 = vmatpush.bf16.msra.mxu0 %v718
      %728 = vmatpush.bf16.msra.mxu0 %v717
      %729 = vmatpush.bf16.msra.mxu0 %v716
      %730 = vmatpush.bf16.msra.mxu0 %v715
      %731 = vmatpush.bf16.msra.mxu0 %v714
      %732 = vmatpush.bf16.msra.mxu0 %v713
      %733 = vmatpush.bf16.msra.mxu0 %v712
      %734 = vmatpush.bf16.msra.mxu0 %v711
      %735 = vmatmul.bf16.gmra.mxu0 %v646
      %v736 = vpop.f32.mrf.mxu0
      %v737 = vadd.f32 0.0, %v736
      %v738 = vpop.f32.mrf.mxu0
      %v739 = vadd.f32 0.0, %v738
      %740 = vmatmul.bf16.gmra.mxu0 %v647
      %v741 = vpop.f32.mrf.mxu0
      %v742 = vadd.f32 0.0, %v741
      %v743 = vpop.f32.mrf.mxu0
      %v744 = vadd.f32 0.0, %v743
      %745 = vmatmul.bf16.gmra.mxu0 %v648
      %v746 = vpop.f32.mrf.mxu0
      %v747 = vadd.f32 0.0, %v746
      %v748 = vpop.f32.mrf.mxu0
      %v749 = vadd.f32 0.0, %v748
      %750 = vmatmul.bf16.gmra.mxu0 %v649
      %v751 = vpop.f32.mrf.mxu0
      %v752 = vadd.f32 0.0, %v751
      %v753 = vpop.f32.mrf.mxu0
      %v754 = vadd.f32 0.0, %v753
      %755 = vmatmul.bf16.gmra.mxu0 %v650
      %v756 = vpop.f32.mrf.mxu0
      %v757 = vadd.f32 0.0, %v756
      %v758 = vpop.f32.mrf.mxu0
      %v759 = vadd.f32 0.0, %v758
      %760 = vmatmul.bf16.gmra.mxu0 %v651
      %v761 = vpop.f32.mrf.mxu0
      %v762 = vadd.f32 0.0, %v761
      %v763 = vpop.f32.mrf.mxu0
      %v764 = vadd.f32 0.0, %v763
      %765 = vmatmul.bf16.gmra.mxu0 %v652
      %v766 = vpop.f32.mrf.mxu0
      %v767 = vadd.f32 0.0, %v766
      %v768 = vpop.f32.mrf.mxu0
      %v769 = vadd.f32 0.0, %v768
      %770 = vmatmul.bf16.gmra.mxu0 %v653
      %v771 = vpop.f32.mrf.mxu0
      %v772 = vadd.f32 0.0, %v771
      %v773 = vpop.f32.mrf.mxu0
      %v774 = vadd.f32 0.0, %v773
      %775 = vmatmul.bf16.gmra.mxu0 %v654
      %v776 = vpop.f32.mrf.mxu0
      %v777 = vadd.f32 0.0, %v776
      %v778 = vpop.f32.mrf.mxu0
      %v779 = vadd.f32 0.0, %v778
      %780 = vmatmul.bf16.gmra.mxu0 %v655
      %v781 = vpop.f32.mrf.mxu0
      %v782 = vadd.f32 0.0, %v781
      %v783 = vpop.f32.mrf.mxu0
      %v784 = vadd.f32 0.0, %v783
      %785 = vmatmul.bf16.gmra.mxu0 %v656
      %v786 = vpop.f32.mrf.mxu0
      %v787 = vadd.f32 0.0, %v786
      %v788 = vpop.f32.mrf.mxu0
      %v789 = vadd.f32 0.0, %v788
      %790 = vmatmul.bf16.gmra.mxu0 %v657
      %v791 = vpop.f32.mrf.mxu0
      %v792 = vadd.f32 0.0, %v791
      %v793 = vpop.f32.mrf.mxu0
      %v794 = vadd.f32 0.0, %v793
      %795 = vmatmul.bf16.gmra.mxu0 %v658
      %v796 = vpop.f32.mrf.mxu0
      %v797 = vadd.f32 0.0, %v796
      %v798 = vpop.f32.mrf.mxu0
      %v799 = vadd.f32 0.0, %v798
      %800 = vmatmul.bf16.gmra.mxu0 %v659
      %v801 = vpop.f32.mrf.mxu0
      %v802 = vadd.f32 0.0, %v801
      %v803 = vpop.f32.mrf.mxu0
      %v804 = vadd.f32 0.0, %v803
      %805 = vmatmul.bf16.gmra.mxu0 %v660
      %v806 = vpop.f32.mrf.mxu0
      %v807 = vadd.f32 0.0, %v806
      %v808 = vpop.f32.mrf.mxu0
      %v809 = vadd.f32 0.0, %v808
      %810 = vmatmul.bf16.gmra.mxu0 %v661
      %v811 = vpop.f32.mrf.mxu0
      %v812 = vadd.f32 0.0, %v811
      %v813 = vpop.f32.mrf.mxu0
      %v814 = vadd.f32 0.0, %v813
      %815 = vdwg.mxu0
      %v832 = vunpack.c.l.b16 %v598
      %v833 = vunpack.c.l.b16 %v599
      %v834 = vunpack.c.l.b16 %v600
      %v835 = vunpack.c.l.b16 %v601
      %v836 = vunpack.c.l.b16 %v602
      %v837 = vunpack.c.l.b16 %v603
      %v838 = vunpack.c.l.b16 %v604
      %v839 = vunpack.c.l.b16 %v605
      %v840 = vunpack.c.l.b16 %v606
      %v841 = vunpack.c.l.b16 %v607
      %v842 = vunpack.c.l.b16 %v608
      %v843 = vunpack.c.l.b16 %v609
      %v844 = vunpack.c.l.b16 %v610
      %v845 = vunpack.c.l.b16 %v611
      %v846 = vunpack.c.l.b16 %v612
      %v847 = vunpack.c.l.b16 %v613
      %v848 = vpack.c.b16 %v833, %v832
      %v849 = vpack.c.b16 %v835, %v834
      %v850 = vpack.c.b16 %v837, %v836
      %v851 = vpack.c.b16 %v839, %v838
      %v852 = vpack.c.b16 %v841, %v840
      %v853 = vpack.c.b16 %v843, %v842
      %v854 = vpack.c.b16 %v845, %v844
      %v855 = vpack.c.b16 %v847, %v846
      %864 = vmatpush.bf16.msra.mxu0 %v855
      %865 = vmatpush.bf16.msra.mxu0 %v854
      %866 = vmatpush.bf16.msra.mxu0 %v853
      %867 = vmatpush.bf16.msra.mxu0 %v852
      %868 = vmatpush.bf16.msra.mxu0 %v851
      %869 = vmatpush.bf16.msra.mxu0 %v850
      %870 = vmatpush.bf16.msra.mxu0 %v849
      %871 = vmatpush.bf16.msra.mxu0 %v848
      %872 = vmatmul.bf16.gmra.mxu0 %v582
      %v873 = vpop.f32.mrf.mxu0
      %v874 = vadd.f32 %v737, %v873
      %v875 = vpop.f32.mrf.mxu0
      %v876 = vadd.f32 %v739, %v875
      %877 = vmatmul.bf16.gmra.mxu0 %v583
      %v878 = vpop.f32.mrf.mxu0
      %v879 = vadd.f32 %v742, %v878
      %v880 = vpop.f32.mrf.mxu0
      %v881 = vadd.f32 %v744, %v880
      %882 = vmatmul.bf16.gmra.mxu0 %v584
      %v883 = vpop.f32.mrf.mxu0
      %v884 = vadd.f32 %v747, %v883
      %v885 = vpop.f32.mrf.mxu0
      %v886 = vadd.f32 %v749, %v885
      %887 = vmatmul.bf16.gmra.mxu0 %v585
      %v888 = vpop.f32.mrf.mxu0
      %v889 = vadd.f32 %v752, %v888
      %v890 = vpop.f32.mrf.mxu0
      %v891 = vadd.f32 %v754, %v890
      %892 = vmatmul.bf16.gmra.mxu0 %v586
      %v893 = vpop.f32.mrf.mxu0
      %v894 = vadd.f32 %v757, %v893
      %v895 = vpop.f32.mrf.mxu0
      %v896 = vadd.f32 %v759, %v895
      %897 = vmatmul.bf16.gmra.mxu0 %v587
      %v898 = vpop.f32.mrf.mxu0
      %v899 = vadd.f32 %v762, %v898
      %v900 = vpop.f32.mrf.mxu0
      %v901 = vadd.f32 %v764, %v900
      %902 = vmatmul.bf16.gmra.mxu0 %v588
      %v903 = vpop.f32.mrf.mxu0
      %v904 = vadd.f32 %v767, %v903
      %v905 = vpop.f32.mrf.mxu0
      %v906 = vadd.f32 %v769, %v905
      %907 = vmatmul.bf16.gmra.mxu0 %v589
      %v908 = vpop.f32.mrf.mxu0
      %v909 = vadd.f32 %v772, %v908
      %v910 = vpop.f32.mrf.mxu0
      %v911 = vadd.f32 %v774, %v910
      %912 = vmatmul.bf16.gmra.mxu0 %v590
      %v913 = vpop.f32.mrf.mxu0
      %v914 = vadd.f32 %v777, %v913
      %v915 = vpop.f32.mrf.mxu0
      %v916 = vadd.f32 %v779, %v915
      %917 = vmatmul.bf16.gmra.mxu0 %v591
      %v918 = vpop.f32.mrf.mxu0
      %v919 = vadd.f32 %v782, %v918
      %v920 = vpop.f32.mrf.mxu0
      %v921 = vadd.f32 %v784, %v920
      %922 = vmatmul.bf16.gmra.mxu0 %v592
      %v923 = vpop.f32.mrf.mxu0
      %v924 = vadd.f32 %v787, %v923
      %v925 = vpop.f32.mrf.mxu0
      %v926 = vadd.f32 %v789, %v925
      %927 = vmatmul.bf16.gmra.mxu0 %v593
      %v928 = vpop.f32.mrf.mxu0
      %v929 = vadd.f32 %v792, %v928
      %v930 = vpop.f32.mrf.mxu0
      %v931 = vadd.f32 %v794, %v930
      %932 = vmatmul.bf16.gmra.mxu0 %v594
      %v933 = vpop.f32.mrf.mxu0
      %v934 = vadd.f32 %v797, %v933
      %v935 = vpop.f32.mrf.mxu0
      %v936 = vadd.f32 %v799, %v935
      %937 = vmatmul.bf16.gmra.mxu0 %v595
      %v938 = vpop.f32.mrf.mxu0
      %v939 = vadd.f32 %v802, %v938
      %v940 = vpop.f32.mrf.mxu0
      %v941 = vadd.f32 %v804, %v940
      %942 = vmatmul.bf16.gmra.mxu0 %v596
      %v943 = vpop.f32.mrf.mxu0
      %v944 = vadd.f32 %v807, %v943
      %v945 = vpop.f32.mrf.mxu0
      %v946 = vadd.f32 %v809, %v945
      %947 = vmatmul.bf16.gmra.mxu0 %v597
      %v948 = vpop.f32.mrf.mxu0
      %v949 = vadd.f32 %v812, %v948
      %v950 = vpop.f32.mrf.mxu0
      %v951 = vadd.f32 %v814, %v950
      %952 = vdwg.mxu0
      %v953 = vld [vmem:[%s549 + $0x11] sm:$0xff]
      %v954 = vld [vmem:[%s549 + $0x19] sm:$0xff]
      %v955 = vld [vmem:[%s549 + $0x39] sm:$0xff]
      %v956 = vld [vmem:[%s549 + $0x41] sm:$0xff]
      %v957 = vld [vmem:[%s549 + $0x61] sm:$0xff]
      %v958 = vld [vmem:[%s549 + $0x69] sm:$0xff]
      %v959 = vld [vmem:[%s549 + $0x89] sm:$0xff]
      %v960 = vld [vmem:[%s549 + $0x91] sm:$0xff]
      %v961 = vld [vmem:[%s549 + $0xb1] sm:$0xff]
      %v962 = vld [vmem:[%s549 + $0xb9] sm:$0xff]
      %v963 = vld [vmem:[%s549 + $0xd9] sm:$0xff]
      %v964 = vld [vmem:[%s549 + $0xe1] sm:$0xff]
      %v965 = vld [vmem:[%s549 + $0x101] sm:$0xff]
      %v966 = vld [vmem:[%s549 + $0x109] sm:$0xff]
      %v967 = vld [vmem:[%s549 + $0x129] sm:$0xff]
      %v968 = vld [vmem:[%s549 + $0x131] sm:$0xff]
      %v969 = vld [vmem:[%s549 + $0x151] sm:$0xff]
      %v970 = vld [vmem:[%s549 + $0x159] sm:$0xff]
      %v971 = vld [vmem:[%s549 + $0x179] sm:$0xff]
      %v972 = vld [vmem:[%s549 + $0x181] sm:$0xff]
      %v973 = vld [vmem:[%s549 + $0x1a1] sm:$0xff]
      %v974 = vld [vmem:[%s549 + $0x1a9] sm:$0xff]
      %v975 = vld [vmem:[%s549 + $0x1c9] sm:$0xff]
      %v976 = vld [vmem:[%s549 + $0x1d1] sm:$0xff]
      %v977 = vld [vmem:[%s549 + $0x1f1] sm:$0xff]
      %v978 = vld [vmem:[%s549 + $0x1f9] sm:$0xff]
      %v979 = vld [vmem:[%s549 + $0x219] sm:$0xff]
      %v980 = vld [vmem:[%s549 + $0x221] sm:$0xff]
      %v981 = vld [vmem:[%s549 + $0x241] sm:$0xff]
      %v982 = vld [vmem:[%s549 + $0x249] sm:$0xff]
      %v983 = vld [vmem:[%s549 + $0x269] sm:$0xff]
      %v984 = vld [vmem:[%s549 + $0x271] sm:$0xff]
      %v985 = vpack.c.bf16 %v954, %v953
      %v986 = vpack.c.bf16 %v956, %v955
      %v987 = vpack.c.bf16 %v958, %v957
      %v988 = vpack.c.bf16 %v960, %v959
      %v989 = vpack.c.bf16 %v962, %v961
      %v990 = vpack.c.bf16 %v964, %v963
      %v991 = vpack.c.bf16 %v966, %v965
      %v992 = vpack.c.bf16 %v968, %v967
      %v993 = vpack.c.bf16 %v970, %v969
      %v994 = vpack.c.bf16 %v972, %v971
      %v995 = vpack.c.bf16 %v974, %v973
      %v996 = vpack.c.bf16 %v976, %v975
      %v997 = vpack.c.bf16 %v978, %v977
      %v998 = vpack.c.bf16 %v980, %v979
      %v999 = vpack.c.bf16 %v982, %v981
      %v1000 = vpack.c.bf16 %v984, %v983
      %s1001 = scalar_lea.vmem %s1, 128
      %v1002 = vld [vmem:[%s1001] sm:$0xf]
      %v1003 = vld [vmem:[%s1001 + $0x4] sm:$0xf]
      %v1004 = vld [vmem:[%s1001 + $0x8] sm:$0xf]
      %v1005 = vld [vmem:[%s1001 + $0xc] sm:$0xf]
      %v1006 = vld [vmem:[%s1001 + $0x10] sm:$0xf]
      %v1007 = vld [vmem:[%s1001 + $0x14] sm:$0xf]
      %v1008 = vld [vmem:[%s1001 + $0x18] sm:$0xf]
      %v1009 = vld [vmem:[%s1001 + $0x1c] sm:$0xf]
      %v1010 = vld [vmem:[%s1001 + $0x20] sm:$0xf]
      %v1011 = vld [vmem:[%s1001 + $0x24] sm:$0xf]
      %v1012 = vld [vmem:[%s1001 + $0x28] sm:$0xf]
      %v1013 = vld [vmem:[%s1001 + $0x2c] sm:$0xf]
      %v1014 = vld [vmem:[%s1001 + $0x30] sm:$0xf]
      %v1015 = vld [vmem:[%s1001 + $0x34] sm:$0xf]
      %v1016 = vld [vmem:[%s1001 + $0x38] sm:$0xf]
      %v1017 = vld [vmem:[%s1001 + $0x3c] sm:$0xf]
      %v1034 = vunpack.c.l.b16 %v1002
      %v1035 = vunpack.c.l.b16 %v1003
      %v1036 = vunpack.c.l.b16 %v1004
      %v1037 = vunpack.c.l.b16 %v1005
      %v1038 = vunpack.c.l.b16 %v1006
      %v1039 = vunpack.c.l.b16 %v1007
      %v1040 = vunpack.c.l.b16 %v1008
      %v1041 = vunpack.c.l.b16 %v1009
      %v1042 = vunpack.c.l.b16 %v1010
      %v1043 = vunpack.c.l.b16 %v1011
      %v1044 = vunpack.c.l.b16 %v1012
      %v1045 = vunpack.c.l.b16 %v1013
      %v1046 = vunpack.c.l.b16 %v1014
      %v1047 = vunpack.c.l.b16 %v1015
      %v1048 = vunpack.c.l.b16 %v1016
      %v1049 = vunpack.c.l.b16 %v1017
      %v1050 = vpack.c.b16 %v1035, %v1034
      %v1051 = vpack.c.b16 %v1037, %v1036
      %v1052 = vpack.c.b16 %v1039, %v1038
      %v1053 = vpack.c.b16 %v1041, %v1040
      %v1054 = vpack.c.b16 %v1043, %v1042
      %v1055 = vpack.c.b16 %v1045, %v1044
      %v1056 = vpack.c.b16 %v1047, %v1046
      %v1057 = vpack.c.b16 %v1049, %v1048
      %1066 = vmatpush.bf16.msra.mxu0 %v1057
      %1067 = vmatpush.bf16.msra.mxu0 %v1056
      %1068 = vmatpush.bf16.msra.mxu0 %v1055
      %1069 = vmatpush.bf16.msra.mxu0 %v1054
      %1070 = vmatpush.bf16.msra.mxu0 %v1053
      %1071 = vmatpush.bf16.msra.mxu0 %v1052
      %1072 = vmatpush.bf16.msra.mxu0 %v1051
      %1073 = vmatpush.bf16.msra.mxu0 %v1050
      %1074 = vmatmul.bf16.gmra.mxu0 %v985
      %v1075 = vpop.f32.mrf.mxu0
      %v1076 = vadd.f32 0.0, %v1075
      %v1077 = vpop.f32.mrf.mxu0
      %v1078 = vadd.f32 0.0, %v1077
      %1079 = vmatmul.bf16.gmra.mxu0 %v986
      %v1080 = vpop.f32.mrf.mxu0
      %v1081 = vadd.f32 0.0, %v1080
      %v1082 = vpop.f32.mrf.mxu0
      %v1083 = vadd.f32 0.0, %v1082
      %1084 = vmatmul.bf16.gmra.mxu0 %v987
      %v1085 = vpop.f32.mrf.mxu0
      %v1086 = vadd.f32 0.0, %v1085
      %v1087 = vpop.f32.mrf.mxu0
      %v1088 = vadd.f32 0.0, %v1087
      %1089 = vmatmul.bf16.gmra.mxu0 %v988
      %v1090 = vpop.f32.mrf.mxu0
      %v1091 = vadd.f32 0.0, %v1090
      %v1092 = vpop.f32.mrf.mxu0
      %v1093 = vadd.f32 0.0, %v1092
      %1094 = vmatmul.bf16.gmra.mxu0 %v989
      %v1095 = vpop.f32.mrf.mxu0
      %v1096 = vadd.f32 0.0, %v1095
      %v1097 = vpop.f32.mrf.mxu0
      %v1098 = vadd.f32 0.0, %v1097
      %1099 = vmatmul.bf16.gmra.mxu0 %v990
      %v1100 = vpop.f32.mrf.mxu0
      %v1101 = vadd.f32 0.0, %v1100
      %v1102 = vpop.f32.mrf.mxu0
      %v1103 = vadd.f32 0.0, %v1102
      %1104 = vmatmul.bf16.gmra.mxu0 %v991
      %v1105 = vpop.f32.mrf.mxu0
      %v1106 = vadd.f32 0.0, %v1105
      %v1107 = vpop.f32.mrf.mxu0
      %v1108 = vadd.f32 0.0, %v1107
      %1109 = vmatmul.bf16.gmra.mxu0 %v992
      %v1110 = vpop.f32.mrf.mxu0
      %v1111 = vadd.f32 0.0, %v1110
      %v1112 = vpop.f32.mrf.mxu0
      %v1113 = vadd.f32 0.0, %v1112
      %1114 = vmatmul.bf16.gmra.mxu0 %v993
      %v1115 = vpop.f32.mrf.mxu0
      %v1116 = vadd.f32 0.0, %v1115
      %v1117 = vpop.f32.mrf.mxu0
      %v1118 = vadd.f32 0.0, %v1117
      %1119 = vmatmul.bf16.gmra.mxu0 %v994
      %v1120 = vpop.f32.mrf.mxu0
      %v1121 = vadd.f32 0.0, %v1120
      %v1122 = vpop.f32.mrf.mxu0
      %v1123 = vadd.f32 0.0, %v1122
      %1124 = vmatmul.bf16.gmra.mxu0 %v995
      %v1125 = vpop.f32.mrf.mxu0
      %v1126 = vadd.f32 0.0, %v1125
      %v1127 = vpop.f32.mrf.mxu0
      %v1128 = vadd.f32 0.0, %v1127
      %1129 = vmatmul.bf16.gmra.mxu0 %v996
      %v1130 = vpop.f32.mrf.mxu0
      %v1131 = vadd.f32 0.0, %v1130
      %v1132 = vpop.f32.mrf.mxu0
      %v1133 = vadd.f32 0.0, %v1132
      %1134 = vmatmul.bf16.gmra.mxu0 %v997
      %v1135 = vpop.f32.mrf.mxu0
      %v1136 = vadd.f32 0.0, %v1135
      %v1137 = vpop.f32.mrf.mxu0
      %v1138 = vadd.f32 0.0, %v1137
      %1139 = vmatmul.bf16.gmra.mxu0 %v998
      %v1140 = vpop.f32.mrf.mxu0
      %v1141 = vadd.f32 0.0, %v1140
      %v1142 = vpop.f32.mrf.mxu0
      %v1143 = vadd.f32 0.0, %v1142
      %1144 = vmatmul.bf16.gmra.mxu0 %v999
      %v1145 = vpop.f32.mrf.mxu0
      %v1146 = vadd.f32 0.0, %v1145
      %v1147 = vpop.f32.mrf.mxu0
      %v1148 = vadd.f32 0.0, %v1147
      %1149 = vmatmul.bf16.gmra.mxu0 %v1000
      %v1150 = vpop.f32.mrf.mxu0
      %v1151 = vadd.f32 0.0, %v1150
      %v1152 = vpop.f32.mrf.mxu0
      %v1153 = vadd.f32 0.0, %v1152
      %1154 = vdwg.mxu0
      %v1155 = vadd.f32 %v874, %v1076
      %v1156 = vadd.f32 %v876, %v1078
      %v1157 = vadd.f32 %v879, %v1081
      %v1158 = vadd.f32 %v881, %v1083
      %v1159 = vadd.f32 %v884, %v1086
      %v1160 = vadd.f32 %v886, %v1088
      %v1161 = vadd.f32 %v889, %v1091
      %v1162 = vadd.f32 %v891, %v1093
      %v1163 = vadd.f32 %v894, %v1096
      %v1164 = vadd.f32 %v896, %v1098
      %v1165 = vadd.f32 %v899, %v1101
      %v1166 = vadd.f32 %v901, %v1103
      %v1167 = vadd.f32 %v904, %v1106
      %v1168 = vadd.f32 %v906, %v1108
      %v1169 = vadd.f32 %v909, %v1111
      %v1170 = vadd.f32 %v911, %v1113
      %v1171 = vadd.f32 %v914, %v1116
      %v1172 = vadd.f32 %v916, %v1118
      %v1173 = vadd.f32 %v919, %v1121
      %v1174 = vadd.f32 %v921, %v1123
      %v1175 = vadd.f32 %v924, %v1126
      %v1176 = vadd.f32 %v926, %v1128
      %v1177 = vadd.f32 %v929, %v1131
      %v1178 = vadd.f32 %v931, %v1133
      %v1179 = vadd.f32 %v934, %v1136
      %v1180 = vadd.f32 %v936, %v1138
      %v1181 = vadd.f32 %v939, %v1141
      %v1182 = vadd.f32 %v941, %v1143
      %v1183 = vadd.f32 %v944, %v1146
      %v1184 = vadd.f32 %v946, %v1148
      %v1185 = vadd.f32 %v949, %v1151
      %v1186 = vadd.f32 %v951, %v1153
      %v1187 = vld [vmem:[%s516 + $0xf] sm:$0xff]
      %v1188 = vld [vmem:[%s516 + $0x17] sm:$0xff]
      %v1189 = vld [vmem:[%s516 + $0x37] sm:$0xff]
      %v1190 = vld [vmem:[%s516 + $0x3f] sm:$0xff]
      %v1191 = vld [vmem:[%s516 + $0x5f] sm:$0xff]
      %v1192 = vld [vmem:[%s516 + $0x67] sm:$0xff]
      %v1193 = vld [vmem:[%s516 + $0x87] sm:$0xff]
      %v1194 = vld [vmem:[%s516 + $0x8f] sm:$0xff]
      %v1195 = vld [vmem:[%s516 + $0xaf] sm:$0xff]
      %v1196 = vld [vmem:[%s516 + $0xb7] sm:$0xff]
      %v1197 = vld [vmem:[%s516 + $0xd7] sm:$0xff]
      %v1198 = vld [vmem:[%s516 + $0xdf] sm:$0xff]
      %v1199 = vld [vmem:[%s516 + $0xff] sm:$0xff]
      %v1200 = vld [vmem:[%s516 + $0x107] sm:$0xff]
      %v1201 = vld [vmem:[%s516 + $0x127] sm:$0xff]
      %v1202 = vld [vmem:[%s516 + $0x12f] sm:$0xff]
      %v1203 = vld [vmem:[%s516 + $0x14f] sm:$0xff]
      %v1204 = vld [vmem:[%s516 + $0x157] sm:$0xff]
      %v1205 = vld [vmem:[%s516 + $0x177] sm:$0xff]
      %v1206 = vld [vmem:[%s516 + $0x17f] sm:$0xff]
      %v1207 = vld [vmem:[%s516 + $0x19f] sm:$0xff]
      %v1208 = vld [vmem:[%s516 + $0x1a7] sm:$0xff]
      %v1209 = vld [vmem:[%s516 + $0x1c7] sm:$0xff]
      %v1210 = vld [vmem:[%s516 + $0x1cf] sm:$0xff]
      %v1211 = vld [vmem:[%s516 + $0x1ef] sm:$0xff]
      %v1212 = vld [vmem:[%s516 + $0x1f7] sm:$0xff]
      %v1213 = vld [vmem:[%s516 + $0x217] sm:$0xff]
      %v1214 = vld [vmem:[%s516 + $0x21f] sm:$0xff]
      %v1215 = vld [vmem:[%s516 + $0x23f] sm:$0xff]
      %v1216 = vld [vmem:[%s516 + $0x247] sm:$0xff]
      %v1217 = vld [vmem:[%s516 + $0x267] sm:$0xff]
      %v1218 = vld [vmem:[%s516 + $0x26f] sm:$0xff]
      %v1219 = vpack.c.bf16 %v1188, %v1187
      %v1220 = vpack.c.bf16 %v1190, %v1189
      %v1221 = vpack.c.bf16 %v1192, %v1191
      %v1222 = vpack.c.bf16 %v1194, %v1193
      %v1223 = vpack.c.bf16 %v1196, %v1195
      %v1224 = vpack.c.bf16 %v1198, %v1197
      %v1225 = vpack.c.bf16 %v1200, %v1199
      %v1226 = vpack.c.bf16 %v1202, %v1201
      %v1227 = vpack.c.bf16 %v1204, %v1203
      %v1228 = vpack.c.bf16 %v1206, %v1205
      %v1229 = vpack.c.bf16 %v1208, %v1207
      %v1230 = vpack.c.bf16 %v1210, %v1209
      %v1231 = vpack.c.bf16 %v1212, %v1211
      %v1232 = vpack.c.bf16 %v1214, %v1213
      %v1233 = vpack.c.bf16 %v1216, %v1215
      %v1234 = vpack.c.bf16 %v1218, %v1217
      %s1235 = scalar_lea.vmem %s1, 192
      %v1236 = vld [vmem:[%s1235] sm:$0xf]
      %v1237 = vld [vmem:[%s1235 + $0x4] sm:$0xf]
      %v1238 = vld [vmem:[%s1235 + $0x8] sm:$0xf]
      %v1239 = vld [vmem:[%s1235 + $0xc] sm:$0xf]
      %v1240 = vld [vmem:[%s1235 + $0x10] sm:$0xf]
      %v1241 = vld [vmem:[%s1235 + $0x14] sm:$0xf]
      %v1242 = vld [vmem:[%s1235 + $0x18] sm:$0xf]
      %v1243 = vld [vmem:[%s1235 + $0x1c] sm:$0xf]
      %v1244 = vld [vmem:[%s1235 + $0x20] sm:$0xf]
      %v1245 = vld [vmem:[%s1235 + $0x24] sm:$0xf]
      %v1246 = vld [vmem:[%s1235 + $0x28] sm:$0xf]
      %v1247 = vld [vmem:[%s1235 + $0x2c] sm:$0xf]
      %v1248 = vld [vmem:[%s1235 + $0x30] sm:$0xf]
      %v1249 = vld [vmem:[%s1235 + $0x34] sm:$0xf]
      %v1250 = vld [vmem:[%s1235 + $0x38] sm:$0xf]
      %v1251 = vld [vmem:[%s1235 + $0x3c] sm:$0xf]
      %v1268 = vunpack.c.l.b16 %v1236
      %v1269 = vunpack.c.l.b16 %v1237
      %v1270 = vunpack.c.l.b16 %v1238
      %v1271 = vunpack.c.l.b16 %v1239
      %v1272 = vunpack.c.l.b16 %v1240
      %v1273 = vunpack.c.l.b16 %v1241
      %v1274 = vunpack.c.l.b16 %v1242
      %v1275 = vunpack.c.l.b16 %v1243
      %v1276 = vunpack.c.l.b16 %v1244
      %v1277 = vunpack.c.l.b16 %v1245
      %v1278 = vunpack.c.l.b16 %v1246
      %v1279 = vunpack.c.l.b16 %v1247
      %v1280 = vunpack.c.l.b16 %v1248
      %v1281 = vunpack.c.l.b16 %v1249
      %v1282 = vunpack.c.l.b16 %v1250
      %v1283 = vunpack.c.l.b16 %v1251
      %v1284 = vpack.c.b16 %v1269, %v1268
      %v1285 = vpack.c.b16 %v1271, %v1270
      %v1286 = vpack.c.b16 %v1273, %v1272
      %v1287 = vpack.c.b16 %v1275, %v1274
      %v1288 = vpack.c.b16 %v1277, %v1276
      %v1289 = vpack.c.b16 %v1279, %v1278
      %v1290 = vpack.c.b16 %v1281, %v1280
      %v1291 = vpack.c.b16 %v1283, %v1282
      %1300 = vmatpush.bf16.msra.mxu0 %v1291
      %1301 = vmatpush.bf16.msra.mxu0 %v1290
      %1302 = vmatpush.bf16.msra.mxu0 %v1289
      %1303 = vmatpush.bf16.msra.mxu0 %v1288
      %1304 = vmatpush.bf16.msra.mxu0 %v1287
      %1305 = vmatpush.bf16.msra.mxu0 %v1286
      %1306 = vmatpush.bf16.msra.mxu0 %v1285
      %1307 = vmatpush.bf16.msra.mxu0 %v1284
      %1308 = vmatmul.bf16.gmra.mxu0 %v1219
      %v1309 = vpop.f32.mrf.mxu0
      %v1310 = vadd.f32 0.0, %v1309
      %v1311 = vpop.f32.mrf.mxu0
      %v1312 = vadd.f32 0.0, %v1311
      %1313 = vmatmul.bf16.gmra.mxu0 %v1220
      %v1314 = vpop.f32.mrf.mxu0
      %v1315 = vadd.f32 0.0, %v1314
      %v1316 = vpop.f32.mrf.mxu0
      %v1317 = vadd.f32 0.0, %v1316
      %1318 = vmatmul.bf16.gmra.mxu0 %v1221
      %v1319 = vpop.f32.mrf.mxu0
      %v1320 = vadd.f32 0.0, %v1319
      %v1321 = vpop.f32.mrf.mxu0
      %v1322 = vadd.f32 0.0, %v1321
      %1323 = vmatmul.bf16.gmra.mxu0 %v1222
      %v1324 = vpop.f32.mrf.mxu0
      %v1325 = vadd.f32 0.0, %v1324
      %v1326 = vpop.f32.mrf.mxu0
      %v1327 = vadd.f32 0.0, %v1326
      %1328 = vmatmul.bf16.gmra.mxu0 %v1223
      %v1329 = vpop.f32.mrf.mxu0
      %v1330 = vadd.f32 0.0, %v1329
      %v1331 = vpop.f32.mrf.mxu0
      %v1332 = vadd.f32 0.0, %v1331
      %1333 = vmatmul.bf16.gmra.mxu0 %v1224
      %v1334 = vpop.f32.mrf.mxu0
      %v1335 = vadd.f32 0.0, %v1334
      %v1336 = vpop.f32.mrf.mxu0
      %v1337 = vadd.f32 0.0, %v1336
      %1338 = vmatmul.bf16.gmra.mxu0 %v1225
      %v1339 = vpop.f32.mrf.mxu0
      %v1340 = vadd.f32 0.0, %v1339
      %v1341 = vpop.f32.mrf.mxu0
      %v1342 = vadd.f32 0.0, %v1341
      %1343 = vmatmul.bf16.gmra.mxu0 %v1226
      %v1344 = vpop.f32.mrf.mxu0
      %v1345 = vadd.f32 0.0, %v1344
      %v1346 = vpop.f32.mrf.mxu0
      %v1347 = vadd.f32 0.0, %v1346
      %1348 = vmatmul.bf16.gmra.mxu0 %v1227
      %v1349 = vpop.f32.mrf.mxu0
      %v1350 = vadd.f32 0.0, %v1349
      %v1351 = vpop.f32.mrf.mxu0
      %v1352 = vadd.f32 0.0, %v1351
      %1353 = vmatmul.bf16.gmra.mxu0 %v1228
      %v1354 = vpop.f32.mrf.mxu0
      %v1355 = vadd.f32 0.0, %v1354
      %v1356 = vpop.f32.mrf.mxu0
      %v1357 = vadd.f32 0.0, %v1356
      %1358 = vmatmul.bf16.gmra.mxu0 %v1229
      %v1359 = vpop.f32.mrf.mxu0
      %v1360 = vadd.f32 0.0, %v1359
      %v1361 = vpop.f32.mrf.mxu0
      %v1362 = vadd.f32 0.0, %v1361
      %1363 = vmatmul.bf16.gmra.mxu0 %v1230
      %v1364 = vpop.f32.mrf.mxu0
      %v1365 = vadd.f32 0.0, %v1364
      %v1366 = vpop.f32.mrf.mxu0
      %v1367 = vadd.f32 0.0, %v1366
      %1368 = vmatmul.bf16.gmra.mxu0 %v1231
      %v1369 = vpop.f32.mrf.mxu0
      %v1370 = vadd.f32 0.0, %v1369
      %v1371 = vpop.f32.mrf.mxu0
      %v1372 = vadd.f32 0.0, %v1371
      %1373 = vmatmul.bf16.gmra.mxu0 %v1232
      %v1374 = vpop.f32.mrf.mxu0
      %v1375 = vadd.f32 0.0, %v1374
      %v1376 = vpop.f32.mrf.mxu0
      %v1377 = vadd.f32 0.0, %v1376
      %1378 = vmatmul.bf16.gmra.mxu0 %v1233
      %v1379 = vpop.f32.mrf.mxu0
      %v1380 = vadd.f32 0.0, %v1379
      %v1381 = vpop.f32.mrf.mxu0
      %v1382 = vadd.f32 0.0, %v1381
      %1383 = vmatmul.bf16.gmra.mxu0 %v1234
      %v1384 = vpop.f32.mrf.mxu0
      %v1385 = vadd.f32 0.0, %v1384
      %v1386 = vpop.f32.mrf.mxu0
      %v1387 = vadd.f32 0.0, %v1386
      %1388 = vdwg.mxu0
      %v1389 = vadd.f32 %v1155, %v1310
      %v1390 = vadd.f32 %v1156, %v1312
      %v1391 = vadd.f32 %v1157, %v1315
      %v1392 = vadd.f32 %v1158, %v1317
      %v1393 = vadd.f32 %v1159, %v1320
      %v1394 = vadd.f32 %v1160, %v1322
      %v1395 = vadd.f32 %v1161, %v1325
      %v1396 = vadd.f32 %v1162, %v1327
      %v1397 = vadd.f32 %v1163, %v1330
      %v1398 = vadd.f32 %v1164, %v1332
      %v1399 = vadd.f32 %v1165, %v1335
      %v1400 = vadd.f32 %v1166, %v1337
      %v1401 = vadd.f32 %v1167, %v1340
      %v1402 = vadd.f32 %v1168, %v1342
      %v1403 = vadd.f32 %v1169, %v1345
      %v1404 = vadd.f32 %v1170, %v1347
      %v1405 = vadd.f32 %v1171, %v1350
      %v1406 = vadd.f32 %v1172, %v1352
      %v1407 = vadd.f32 %v1173, %v1355
      %v1408 = vadd.f32 %v1174, %v1357
      %v1409 = vadd.f32 %v1175, %v1360
      %v1410 = vadd.f32 %v1176, %v1362
      %v1411 = vadd.f32 %v1177, %v1365
      %v1412 = vadd.f32 %v1178, %v1367
      %v1413 = vadd.f32 %v1179, %v1370
      %v1414 = vadd.f32 %v1180, %v1372
      %v1415 = vadd.f32 %v1181, %v1375
      %v1416 = vadd.f32 %v1182, %v1377
      %v1417 = vadd.f32 %v1183, %v1380
      %v1418 = vadd.f32 %v1184, %v1382
      %v1419 = vadd.f32 %v1185, %v1385
      %v1420 = vadd.f32 %v1186, %v1387
      %v1421 = vld [vmem:[%s516 + $0x10] sm:$0xff]
      %v1422 = vld [vmem:[%s516 + $0x18] sm:$0xff]
      %v1423 = vld [vmem:[%s516 + $0x38] sm:$0xff]
      %v1424 = vld [vmem:[%s516 + $0x40] sm:$0xff]
      %v1425 = vld [vmem:[%s516 + $0x60] sm:$0xff]
      %v1426 = vld [vmem:[%s516 + $0x68] sm:$0xff]
      %v1427 = vld [vmem:[%s516 + $0x88] sm:$0xff]
      %v1428 = vld [vmem:[%s516 + $0x90] sm:$0xff]
      %v1429 = vld [vmem:[%s516 + $0xb0] sm:$0xff]
      %v1430 = vld [vmem:[%s516 + $0xb8] sm:$0xff]
      %v1431 = vld [vmem:[%s516 + $0xd8] sm:$0xff]
      %v1432 = vld [vmem:[%s516 + $0xe0] sm:$0xff]
      %v1433 = vld [vmem:[%s516 + $0x100] sm:$0xff]
      %v1434 = vld [vmem:[%s516 + $0x108] sm:$0xff]
      %v1435 = vld [vmem:[%s516 + $0x128] sm:$0xff]
      %v1436 = vld [vmem:[%s516 + $0x130] sm:$0xff]
      %v1437 = vld [vmem:[%s516 + $0x150] sm:$0xff]
      %v1438 = vld [vmem:[%s516 + $0x158] sm:$0xff]
      %v1439 = vld [vmem:[%s516 + $0x178] sm:$0xff]
      %v1440 = vld [vmem:[%s516 + $0x180] sm:$0xff]
      %v1441 = vld [vmem:[%s516 + $0x1a0] sm:$0xff]
      %v1442 = vld [vmem:[%s516 + $0x1a8] sm:$0xff]
      %v1443 = vld [vmem:[%s516 + $0x1c8] sm:$0xff]
      %v1444 = vld [vmem:[%s516 + $0x1d0] sm:$0xff]
      %v1445 = vld [vmem:[%s516 + $0x1f0] sm:$0xff]
      %v1446 = vld [vmem:[%s516 + $0x1f8] sm:$0xff]
      %v1447 = vld [vmem:[%s516 + $0x218] sm:$0xff]
      %v1448 = vld [vmem:[%s516 + $0x220] sm:$0xff]
      %v1449 = vld [vmem:[%s516 + $0x240] sm:$0xff]
      %v1450 = vld [vmem:[%s516 + $0x248] sm:$0xff]
      %v1451 = vld [vmem:[%s516 + $0x268] sm:$0xff]
      %v1452 = vld [vmem:[%s516 + $0x270] sm:$0xff]
      %v1453 = vpack.c.bf16 %v1422, %v1421
      %v1454 = vpack.c.bf16 %v1424, %v1423
      %v1455 = vpack.c.bf16 %v1426, %v1425
      %v1456 = vpack.c.bf16 %v1428, %v1427
      %v1457 = vpack.c.bf16 %v1430, %v1429
      %v1458 = vpack.c.bf16 %v1432, %v1431
      %v1459 = vpack.c.bf16 %v1434, %v1433
      %v1460 = vpack.c.bf16 %v1436, %v1435
      %v1461 = vpack.c.bf16 %v1438, %v1437
      %v1462 = vpack.c.bf16 %v1440, %v1439
      %v1463 = vpack.c.bf16 %v1442, %v1441
      %v1464 = vpack.c.bf16 %v1444, %v1443
      %v1465 = vpack.c.bf16 %v1446, %v1445
      %v1466 = vpack.c.bf16 %v1448, %v1447
      %v1467 = vpack.c.bf16 %v1450, %v1449
      %v1468 = vpack.c.bf16 %v1452, %v1451
      %s1469 = scalar_lea.vmem %s1, 256
      %v1470 = vld [vmem:[%s1469] sm:$0xf]
      %v1471 = vld [vmem:[%s1469 + $0x4] sm:$0xf]
      %v1472 = vld [vmem:[%s1469 + $0x8] sm:$0xf]
      %v1473 = vld [vmem:[%s1469 + $0xc] sm:$0xf]
      %v1474 = vld [vmem:[%s1469 + $0x10] sm:$0xf]
      %v1475 = vld [vmem:[%s1469 + $0x14] sm:$0xf]
      %v1476 = vld [vmem:[%s1469 + $0x18] sm:$0xf]
      %v1477 = vld [vmem:[%s1469 + $0x1c] sm:$0xf]
      %v1478 = vld [vmem:[%s1469 + $0x20] sm:$0xf]
      %v1479 = vld [vmem:[%s1469 + $0x24] sm:$0xf]
      %v1480 = vld [vmem:[%s1469 + $0x28] sm:$0xf]
      %v1481 = vld [vmem:[%s1469 + $0x2c] sm:$0xf]
      %v1482 = vld [vmem:[%s1469 + $0x30] sm:$0xf]
      %v1483 = vld [vmem:[%s1469 + $0x34] sm:$0xf]
      %v1484 = vld [vmem:[%s1469 + $0x38] sm:$0xf]
      %v1485 = vld [vmem:[%s1469 + $0x3c] sm:$0xf]
      %v1502 = vunpack.c.l.b16 %v1470
      %v1503 = vunpack.c.l.b16 %v1471
      %v1504 = vunpack.c.l.b16 %v1472
      %v1505 = vunpack.c.l.b16 %v1473
      %v1506 = vunpack.c.l.b16 %v1474
      %v1507 = vunpack.c.l.b16 %v1475
      %v1508 = vunpack.c.l.b16 %v1476
      %v1509 = vunpack.c.l.b16 %v1477
      %v1510 = vunpack.c.l.b16 %v1478
      %v1511 = vunpack.c.l.b16 %v1479
      %v1512 = vunpack.c.l.b16 %v1480
      %v1513 = vunpack.c.l.b16 %v1481
      %v1514 = vunpack.c.l.b16 %v1482
      %v1515 = vunpack.c.l.b16 %v1483
      %v1516 = vunpack.c.l.b16 %v1484
      %v1517 = vunpack.c.l.b16 %v1485
      %v1518 = vpack.c.b16 %v1503, %v1502
      %v1519 = vpack.c.b16 %v1505, %v1504
      %v1520 = vpack.c.b16 %v1507, %v1506
      %v1521 = vpack.c.b16 %v1509, %v1508
      %v1522 = vpack.c.b16 %v1511, %v1510
      %v1523 = vpack.c.b16 %v1513, %v1512
      %v1524 = vpack.c.b16 %v1515, %v1514
      %v1525 = vpack.c.b16 %v1517, %v1516
      %1534 = vmatpush.bf16.msra.mxu0 %v1525
      %1535 = vmatpush.bf16.msra.mxu0 %v1524
      %1536 = vmatpush.bf16.msra.mxu0 %v1523
      %1537 = vmatpush.bf16.msra.mxu0 %v1522
      %1538 = vmatpush.bf16.msra.mxu0 %v1521
      %1539 = vmatpush.bf16.msra.mxu0 %v1520
      %1540 = vmatpush.bf16.msra.mxu0 %v1519
      %1541 = vmatpush.bf16.msra.mxu0 %v1518
      %1542 = vmatmul.bf16.gmra.mxu0 %v1453
      %v1543 = vpop.f32.mrf.mxu0
      %v1544 = vadd.f32 0.0, %v1543
      %v1545 = vpop.f32.mrf.mxu0
      %v1546 = vadd.f32 0.0, %v1545
      %1547 = vmatmul.bf16.gmra.mxu0 %v1454
      %v1548 = vpop.f32.mrf.mxu0
      %v1549 = vadd.f32 0.0, %v1548
      %v1550 = vpop.f32.mrf.mxu0
      %v1551 = vadd.f32 0.0, %v1550
      %1552 = vmatmul.bf16.gmra.mxu0 %v1455
      %v1553 = vpop.f32.mrf.mxu0
      %v1554 = vadd.f32 0.0, %v1553
      %v1555 = vpop.f32.mrf.mxu0
      %v1556 = vadd.f32 0.0, %v1555
      %1557 = vmatmul.bf16.gmra.mxu0 %v1456
      %v1558 = vpop.f32.mrf.mxu0
      %v1559 = vadd.f32 0.0, %v1558
      %v1560 = vpop.f32.mrf.mxu0
      %v1561 = vadd.f32 0.0, %v1560
      %1562 = vmatmul.bf16.gmra.mxu0 %v1457
      %v1563 = vpop.f32.mrf.mxu0
      %v1564 = vadd.f32 0.0, %v1563
      %v1565 = vpop.f32.mrf.mxu0
      %v1566 = vadd.f32 0.0, %v1565
      %1567 = vmatmul.bf16.gmra.mxu0 %v1458
      %v1568 = vpop.f32.mrf.mxu0
      %v1569 = vadd.f32 0.0, %v1568
      %v1570 = vpop.f32.mrf.mxu0
      %v1571 = vadd.f32 0.0, %v1570
      %1572 = vmatmul.bf16.gmra.mxu0 %v1459
      %v1573 = vpop.f32.mrf.mxu0
      %v1574 = vadd.f32 0.0, %v1573
      %v1575 = vpop.f32.mrf.mxu0
      %v1576 = vadd.f32 0.0, %v1575
      %1577 = vmatmul.bf16.gmra.mxu0 %v1460
      %v1578 = vpop.f32.mrf.mxu0
      %v1579 = vadd.f32 0.0, %v1578
      %v1580 = vpop.f32.mrf.mxu0
      %v1581 = vadd.f32 0.0, %v1580
      %1582 = vmatmul.bf16.gmra.mxu0 %v1461
      %v1583 = vpop.f32.mrf.mxu0
      %v1584 = vadd.f32 0.0, %v1583
      %v1585 = vpop.f32.mrf.mxu0
      %v1586 = vadd.f32 0.0, %v1585
      %1587 = vmatmul.bf16.gmra.mxu0 %v1462
      %v1588 = vpop.f32.mrf.mxu0
      %v1589 = vadd.f32 0.0, %v1588
      %v1590 = vpop.f32.mrf.mxu0
      %v1591 = vadd.f32 0.0, %v1590
      %1592 = vmatmul.bf16.gmra.mxu0 %v1463
      %v1593 = vpop.f32.mrf.mxu0
      %v1594 = vadd.f32 0.0, %v1593
      %v1595 = vpop.f32.mrf.mxu0
      %v1596 = vadd.f32 0.0, %v1595
      %1597 = vmatmul.bf16.gmra.mxu0 %v1464
      %v1598 = vpop.f32.mrf.mxu0
      %v1599 = vadd.f32 0.0, %v1598
      %v1600 = vpop.f32.mrf.mxu0
      %v1601 = vadd.f32 0.0, %v1600
      %1602 = vmatmul.bf16.gmra.mxu0 %v1465
      %v1603 = vpop.f32.mrf.mxu0
      %v1604 = vadd.f32 0.0, %v1603
      %v1605 = vpop.f32.mrf.mxu0
      %v1606 = vadd.f32 0.0, %v1605
      %1607 = vmatmul.bf16.gmra.mxu0 %v1466
      %v1608 = vpop.f32.mrf.mxu0
      %v1609 = vadd.f32 0.0, %v1608
      %v1610 = vpop.f32.mrf.mxu0
      %v1611 = vadd.f32 0.0, %v1610
      %1612 = vmatmul.bf16.gmra.mxu0 %v1467
      %v1613 = vpop.f32.mrf.mxu0
      %v1614 = vadd.f32 0.0, %v1613
      %v1615 = vpop.f32.mrf.mxu0
      %v1616 = vadd.f32 0.0, %v1615
      %1617 = vmatmul.bf16.gmra.mxu0 %v1468
      %v1618 = vpop.f32.mrf.mxu0
      %v1619 = vadd.f32 0.0, %v1618
      %v1620 = vpop.f32.mrf.mxu0
      %v1621 = vadd.f32 0.0, %v1620
      %1622 = vdwg.mxu0
      %v1623 = vadd.f32 %v1389, %v1544
      %v1624 = vadd.f32 %v1390, %v1546
      %v1625 = vadd.f32 %v1391, %v1549
      %v1626 = vadd.f32 %v1392, %v1551
      %v1627 = vadd.f32 %v1393, %v1554
      %v1628 = vadd.f32 %v1394, %v1556
      %v1629 = vadd.f32 %v1395, %v1559
      %v1630 = vadd.f32 %v1396, %v1561
      %v1631 = vadd.f32 %v1397, %v1564
      %v1632 = vadd.f32 %v1398, %v1566
      %v1633 = vadd.f32 %v1399, %v1569
      %v1634 = vadd.f32 %v1400, %v1571
      %v1635 = vadd.f32 %v1401, %v1574
      %v1636 = vadd.f32 %v1402, %v1576
      %v1637 = vadd.f32 %v1403, %v1579
      %v1638 = vadd.f32 %v1404, %v1581
      %v1639 = vadd.f32 %v1405, %v1584
      %v1640 = vadd.f32 %v1406, %v1586
      %v1641 = vadd.f32 %v1407, %v1589
      %v1642 = vadd.f32 %v1408, %v1591
      %v1643 = vadd.f32 %v1409, %v1594
      %v1644 = vadd.f32 %v1410, %v1596
      %v1645 = vadd.f32 %v1411, %v1599
      %v1646 = vadd.f32 %v1412, %v1601
      %v1647 = vadd.f32 %v1413, %v1604
      %v1648 = vadd.f32 %v1414, %v1606
      %v1649 = vadd.f32 %v1415, %v1609
      %v1650 = vadd.f32 %v1416, %v1611
      %v1651 = vadd.f32 %v1417, %v1614
      %v1652 = vadd.f32 %v1418, %v1616
      %v1653 = vadd.f32 %v1419, %v1619
      %v1654 = vadd.f32 %v1420, %v1621
      %v1655 = vld [vmem:[%s516 + $0x11] sm:$0xff]
      %v1656 = vld [vmem:[%s516 + $0x19] sm:$0xff]
      %v1657 = vld [vmem:[%s516 + $0x39] sm:$0xff]
      %v1658 = vld [vmem:[%s516 + $0x41] sm:$0xff]
      %v1659 = vld [vmem:[%s516 + $0x61] sm:$0xff]
      %v1660 = vld [vmem:[%s516 + $0x69] sm:$0xff]
      %v1661 = vld [vmem:[%s516 + $0x89] sm:$0xff]
      %v1662 = vld [vmem:[%s516 + $0x91] sm:$0xff]
      %v1663 = vld [vmem:[%s516 + $0xb1] sm:$0xff]
      %v1664 = vld [vmem:[%s516 + $0xb9] sm:$0xff]
      %v1665 = vld [vmem:[%s516 + $0xd9] sm:$0xff]
      %v1666 = vld [vmem:[%s516 + $0xe1] sm:$0xff]
      %v1667 = vld [vmem:[%s516 + $0x101] sm:$0xff]
      %v1668 = vld [vmem:[%s516 + $0x109] sm:$0xff]
      %v1669 = vld [vmem:[%s516 + $0x129] sm:$0xff]
      %v1670 = vld [vmem:[%s516 + $0x131] sm:$0xff]
      %v1671 = vld [vmem:[%s516 + $0x151] sm:$0xff]
      %v1672 = vld [vmem:[%s516 + $0x159] sm:$0xff]
      %v1673 = vld [vmem:[%s516 + $0x179] sm:$0xff]
      %v1674 = vld [vmem:[%s516 + $0x181] sm:$0xff]
      %v1675 = vld [vmem:[%s516 + $0x1a1] sm:$0xff]
      %v1676 = vld [vmem:[%s516 + $0x1a9] sm:$0xff]
      %v1677 = vld [vmem:[%s516 + $0x1c9] sm:$0xff]
      %v1678 = vld [vmem:[%s516 + $0x1d1] sm:$0xff]
      %v1679 = vld [vmem:[%s516 + $0x1f1] sm:$0xff]
      %v1680 = vld [vmem:[%s516 + $0x1f9] sm:$0xff]
      %v1681 = vld [vmem:[%s516 + $0x219] sm:$0xff]
      %v1682 = vld [vmem:[%s516 + $0x221] sm:$0xff]
      %v1683 = vld [vmem:[%s516 + $0x241] sm:$0xff]
      %v1684 = vld [vmem:[%s516 + $0x249] sm:$0xff]
      %v1685 = vld [vmem:[%s516 + $0x269] sm:$0xff]
      %v1686 = vld [vmem:[%s516 + $0x271] sm:$0xff]
      %v1687 = vpack.c.bf16 %v1656, %v1655
      %v1688 = vpack.c.bf16 %v1658, %v1657
      %v1689 = vpack.c.bf16 %v1660, %v1659
      %v1690 = vpack.c.bf16 %v1662, %v1661
      %v1691 = vpack.c.bf16 %v1664, %v1663
      %v1692 = vpack.c.bf16 %v1666, %v1665
      %v1693 = vpack.c.bf16 %v1668, %v1667
      %v1694 = vpack.c.bf16 %v1670, %v1669
      %v1695 = vpack.c.bf16 %v1672, %v1671
      %v1696 = vpack.c.bf16 %v1674, %v1673
      %v1697 = vpack.c.bf16 %v1676, %v1675
      %v1698 = vpack.c.bf16 %v1678, %v1677
      %v1699 = vpack.c.bf16 %v1680, %v1679
      %v1700 = vpack.c.bf16 %v1682, %v1681
      %v1701 = vpack.c.bf16 %v1684, %v1683
      %v1702 = vpack.c.bf16 %v1686, %v1685
      %s1703 = scalar_lea.vmem %s1, 320
      %v1704 = vld [vmem:[%s1703] sm:$0xf]
      %v1705 = vld [vmem:[%s1703 + $0x4] sm:$0xf]
      %v1706 = vld [vmem:[%s1703 + $0x8] sm:$0xf]
      %v1707 = vld [vmem:[%s1703 + $0xc] sm:$0xf]
      %v1708 = vld [vmem:[%s1703 + $0x10] sm:$0xf]
      %v1709 = vld [vmem:[%s1703 + $0x14] sm:$0xf]
      %v1710 = vld [vmem:[%s1703 + $0x18] sm:$0xf]
      %v1711 = vld [vmem:[%s1703 + $0x1c] sm:$0xf]
      %v1712 = vld [vmem:[%s1703 + $0x20] sm:$0xf]
      %v1713 = vld [vmem:[%s1703 + $0x24] sm:$0xf]
      %v1714 = vld [vmem:[%s1703 + $0x28] sm:$0xf]
      %v1715 = vld [vmem:[%s1703 + $0x2c] sm:$0xf]
      %v1716 = vld [vmem:[%s1703 + $0x30] sm:$0xf]
      %v1717 = vld [vmem:[%s1703 + $0x34] sm:$0xf]
      %v1718 = vld [vmem:[%s1703 + $0x38] sm:$0xf]
      %v1719 = vld [vmem:[%s1703 + $0x3c] sm:$0xf]
      %v1736 = vunpack.c.l.b16 %v1704
      %v1737 = vunpack.c.l.b16 %v1705
      %v1738 = vunpack.c.l.b16 %v1706
      %v1739 = vunpack.c.l.b16 %v1707
      %v1740 = vunpack.c.l.b16 %v1708
      %v1741 = vunpack.c.l.b16 %v1709
      %v1742 = vunpack.c.l.b16 %v1710
      %v1743 = vunpack.c.l.b16 %v1711
      %v1744 = vunpack.c.l.b16 %v1712
      %v1745 = vunpack.c.l.b16 %v1713
      %v1746 = vunpack.c.l.b16 %v1714
      %v1747 = vunpack.c.l.b16 %v1715
      %v1748 = vunpack.c.l.b16 %v1716
      %v1749 = vunpack.c.l.b16 %v1717
      %v1750 = vunpack.c.l.b16 %v1718
      %v1751 = vunpack.c.l.b16 %v1719
      %v1752 = vpack.c.b16 %v1737, %v1736
      %v1753 = vpack.c.b16 %v1739, %v1738
      %v1754 = vpack.c.b16 %v1741, %v1740
      %v1755 = vpack.c.b16 %v1743, %v1742
      %v1756 = vpack.c.b16 %v1745, %v1744
      %v1757 = vpack.c.b16 %v1747, %v1746
      %v1758 = vpack.c.b16 %v1749, %v1748
      %v1759 = vpack.c.b16 %v1751, %v1750
      %1768 = vmatpush.bf16.msra.mxu0 %v1759
      %1769 = vmatpush.bf16.msra.mxu0 %v1758
      %1770 = vmatpush.bf16.msra.mxu0 %v1757
      %1771 = vmatpush.bf16.msra.mxu0 %v1756
      %1772 = vmatpush.bf16.msra.mxu0 %v1755
      %1773 = vmatpush.bf16.msra.mxu0 %v1754
      %1774 = vmatpush.bf16.msra.mxu0 %v1753
      %1775 = vmatpush.bf16.msra.mxu0 %v1752
      %1776 = vmatmul.bf16.gmra.mxu0 %v1687
      %v1777 = vpop.f32.mrf.mxu0
      %v1778 = vadd.f32 0.0, %v1777
      %v1779 = vpop.f32.mrf.mxu0
      %v1780 = vadd.f32 0.0, %v1779
      %1781 = vmatmul.bf16.gmra.mxu0 %v1688
      %v1782 = vpop.f32.mrf.mxu0
      %v1783 = vadd.f32 0.0, %v1782
      %v1784 = vpop.f32.mrf.mxu0
      %v1785 = vadd.f32 0.0, %v1784
      %1786 = vmatmul.bf16.gmra.mxu0 %v1689
      %v1787 = vpop.f32.mrf.mxu0
      %v1788 = vadd.f32 0.0, %v1787
      %v1789 = vpop.f32.mrf.mxu0
      %v1790 = vadd.f32 0.0, %v1789
      %1791 = vmatmul.bf16.gmra.mxu0 %v1690
      %v1792 = vpop.f32.mrf.mxu0
      %v1793 = vadd.f32 0.0, %v1792
      %v1794 = vpop.f32.mrf.mxu0
      %v1795 = vadd.f32 0.0, %v1794
      %1796 = vmatmul.bf16.gmra.mxu0 %v1691
      %v1797 = vpop.f32.mrf.mxu0
      %v1798 = vadd.f32 0.0, %v1797
      %v1799 = vpop.f32.mrf.mxu0
      %v1800 = vadd.f32 0.0, %v1799
      %1801 = vmatmul.bf16.gmra.mxu0 %v1692
      %v1802 = vpop.f32.mrf.mxu0
      %v1803 = vadd.f32 0.0, %v1802
      %v1804 = vpop.f32.mrf.mxu0
      %v1805 = vadd.f32 0.0, %v1804
      %1806 = vmatmul.bf16.gmra.mxu0 %v1693
      %v1807 = vpop.f32.mrf.mxu0
      %v1808 = vadd.f32 0.0, %v1807
      %v1809 = vpop.f32.mrf.mxu0
      %v1810 = vadd.f32 0.0, %v1809
      %1811 = vmatmul.bf16.gmra.mxu0 %v1694
      %v1812 = vpop.f32.mrf.mxu0
      %v1813 = vadd.f32 0.0, %v1812
      %v1814 = vpop.f32.mrf.mxu0
      %v1815 = vadd.f32 0.0, %v1814
      %1816 = vmatmul.bf16.gmra.mxu0 %v1695
      %v1817 = vpop.f32.mrf.mxu0
      %v1818 = vadd.f32 0.0, %v1817
      %v1819 = vpop.f32.mrf.mxu0
      %v1820 = vadd.f32 0.0, %v1819
      %1821 = vmatmul.bf16.gmra.mxu0 %v1696
      %v1822 = vpop.f32.mrf.mxu0
      %v1823 = vadd.f32 0.0, %v1822
      %v1824 = vpop.f32.mrf.mxu0
      %v1825 = vadd.f32 0.0, %v1824
      %1826 = vmatmul.bf16.gmra.mxu0 %v1697
      %v1827 = vpop.f32.mrf.mxu0
      %v1828 = vadd.f32 0.0, %v1827
      %v1829 = vpop.f32.mrf.mxu0
      %v1830 = vadd.f32 0.0, %v1829
      %1831 = vmatmul.bf16.gmra.mxu0 %v1698
      %v1832 = vpop.f32.mrf.mxu0
      %v1833 = vadd.f32 0.0, %v1832
      %v1834 = vpop.f32.mrf.mxu0
      %v1835 = vadd.f32 0.0, %v1834
      %1836 = vmatmul.bf16.gmra.mxu0 %v1699
      %v1837 = vpop.f32.mrf.mxu0
      %v1838 = vadd.f32 0.0, %v1837
      %v1839 = vpop.f32.mrf.mxu0
      %v1840 = vadd.f32 0.0, %v1839
      %1841 = vmatmul.bf16.gmra.mxu0 %v1700
      %v1842 = vpop.f32.mrf.mxu0
      %v1843 = vadd.f32 0.0, %v1842
      %v1844 = vpop.f32.mrf.mxu0
      %v1845 = vadd.f32 0.0, %v1844
      %1846 = vmatmul.bf16.gmra.mxu0 %v1701
      %v1847 = vpop.f32.mrf.mxu0
      %v1848 = vadd.f32 0.0, %v1847
      %v1849 = vpop.f32.mrf.mxu0
      %v1850 = vadd.f32 0.0, %v1849
      %1851 = vmatmul.bf16.gmra.mxu0 %v1702
      %v1852 = vpop.f32.mrf.mxu0
      %v1853 = vadd.f32 0.0, %v1852
      %v1854 = vpop.f32.mrf.mxu0
      %v1855 = vadd.f32 0.0, %v1854
      %1856 = vdwg.mxu0
      %v1857 = vadd.f32 %v1623, %v1778
      %v1858 = vadd.f32 %v1624, %v1780
      %v1859 = vadd.f32 %v1625, %v1783
      %v1860 = vadd.f32 %v1626, %v1785
      %v1861 = vadd.f32 %v1627, %v1788
      %v1862 = vadd.f32 %v1628, %v1790
      %v1863 = vadd.f32 %v1629, %v1793
      %v1864 = vadd.f32 %v1630, %v1795
      %v1865 = vadd.f32 %v1631, %v1798
      %v1866 = vadd.f32 %v1632, %v1800
      %v1867 = vadd.f32 %v1633, %v1803
      %v1868 = vadd.f32 %v1634, %v1805
      %v1869 = vadd.f32 %v1635, %v1808
      %v1870 = vadd.f32 %v1636, %v1810
      %v1871 = vadd.f32 %v1637, %v1813
      %v1872 = vadd.f32 %v1638, %v1815
      %v1873 = vadd.f32 %v1639, %v1818
      %v1874 = vadd.f32 %v1640, %v1820
      %v1875 = vadd.f32 %v1641, %v1823
      %v1876 = vadd.f32 %v1642, %v1825
      %v1877 = vadd.f32 %v1643, %v1828
      %v1878 = vadd.f32 %v1644, %v1830
      %v1879 = vadd.f32 %v1645, %v1833
      %v1880 = vadd.f32 %v1646, %v1835
      %v1881 = vadd.f32 %v1647, %v1838
      %v1882 = vadd.f32 %v1648, %v1840
      %v1883 = vadd.f32 %v1649, %v1843
      %v1884 = vadd.f32 %v1650, %v1845
      %v1885 = vadd.f32 %v1651, %v1848
      %v1886 = vadd.f32 %v1652, %v1850
      %v1887 = vadd.f32 %v1653, %v1853
      %v1888 = vadd.f32 %v1654, %v1855
      %s1889 = scalar_lea.vmem [#allocation2], 680
      %v1890 = vld [vmem:[%s1889 + $0xf] sm:$0xff]
      %v1891 = vld [vmem:[%s1889 + $0x17] sm:$0xff]
      %v1892 = vld [vmem:[%s1889 + $0x37] sm:$0xff]
      %v1893 = vld [vmem:[%s1889 + $0x3f] sm:$0xff]
      %v1894 = vld [vmem:[%s1889 + $0x5f] sm:$0xff]
      %v1895 = vld [vmem:[%s1889 + $0x67] sm:$0xff]
      %v1896 = vld [vmem:[%s1889 + $0x87] sm:$0xff]
      %v1897 = vld [vmem:[%s1889 + $0x8f] sm:$0xff]
      %v1898 = vld [vmem:[%s1889 + $0xaf] sm:$0xff]
      %v1899 = vld [vmem:[%s1889 + $0xb7] sm:$0xff]
      %v1900 = vld [vmem:[%s1889 + $0xd7] sm:$0xff]
      %v1901 = vld [vmem:[%s1889 + $0xdf] sm:$0xff]
      %v1902 = vld [vmem:[%s1889 + $0xff] sm:$0xff]
      %v1903 = vld [vmem:[%s1889 + $0x107] sm:$0xff]
      %v1904 = vld [vmem:[%s1889 + $0x127] sm:$0xff]
      %v1905 = vld [vmem:[%s1889 + $0x12f] sm:$0xff]
      %v1906 = vld [vmem:[%s1889 + $0x14f] sm:$0xff]
      %v1907 = vld [vmem:[%s1889 + $0x157] sm:$0xff]
      %v1908 = vld [vmem:[%s1889 + $0x177] sm:$0xff]
      %v1909 = vld [vmem:[%s1889 + $0x17f] sm:$0xff]
      %v1910 = vld [vmem:[%s1889 + $0x19f] sm:$0xff]
      %v1911 = vld [vmem:[%s1889 + $0x1a7] sm:$0xff]
      %v1912 = vld [vmem:[%s1889 + $0x1c7] sm:$0xff]
      %v1913 = vld [vmem:[%s1889 + $0x1cf] sm:$0xff]
      %v1914 = vld [vmem:[%s1889 + $0x1ef] sm:$0xff]
      %v1915 = vld [vmem:[%s1889 + $0x1f7] sm:$0xff]
      %v1916 = vld [vmem:[%s1889 + $0x217] sm:$0xff]
      %v1917 = vld [vmem:[%s1889 + $0x21f] sm:$0xff]
      %v1918 = vld [vmem:[%s1889 + $0x23f] sm:$0xff]
      %v1919 = vld [vmem:[%s1889 + $0x247] sm:$0xff]
      %v1920 = vld [vmem:[%s1889 + $0x267] sm:$0xff]
      %v1921 = vld [vmem:[%s1889 + $0x26f] sm:$0xff]
      %v1922 = vpack.c.bf16 %v1891, %v1890
      %v1923 = vpack.c.bf16 %v1893, %v1892
      %v1924 = vpack.c.bf16 %v1895, %v1894
      %v1925 = vpack.c.bf16 %v1897, %v1896
      %v1926 = vpack.c.bf16 %v1899, %v1898
      %v1927 = vpack.c.bf16 %v1901, %v1900
      %v1928 = vpack.c.bf16 %v1903, %v1902
      %v1929 = vpack.c.bf16 %v1905, %v1904
      %v1930 = vpack.c.bf16 %v1907, %v1906
      %v1931 = vpack.c.bf16 %v1909, %v1908
      %v1932 = vpack.c.bf16 %v1911, %v1910
      %v1933 = vpack.c.bf16 %v1913, %v1912
      %v1934 = vpack.c.bf16 %v1915, %v1914
      %v1935 = vpack.c.bf16 %v1917, %v1916
      %v1936 = vpack.c.bf16 %v1919, %v1918
      %v1937 = vpack.c.bf16 %v1921, %v1920
      %s1938 = scalar_lea.vmem %s1, 384
      %v1939 = vld [vmem:[%s1938] sm:$0xf]
      %v1940 = vld [vmem:[%s1938 + $0x4] sm:$0xf]
      %v1941 = vld [vmem:[%s1938 + $0x8] sm:$0xf]
      %v1942 = vld [vmem:[%s1938 + $0xc] sm:$0xf]
      %v1943 = vld [vmem:[%s1938 + $0x10] sm:$0xf]
      %v1944 = vld [vmem:[%s1938 + $0x14] sm:$0xf]
      %v1945 = vld [vmem:[%s1938 + $0x18] sm:$0xf]
      %v1946 = vld [vmem:[%s1938 + $0x1c] sm:$0xf]
      %v1947 = vld [vmem:[%s1938 + $0x20] sm:$0xf]
      %v1948 = vld [vmem:[%s1938 + $0x24] sm:$0xf]
      %v1949 = vld [vmem:[%s1938 + $0x28] sm:$0xf]
      %v1950 = vld [vmem:[%s1938 + $0x2c] sm:$0xf]
      %v1951 = vld [vmem:[%s1938 + $0x30] sm:$0xf]
      %v1952 = vld [vmem:[%s1938 + $0x34] sm:$0xf]
      %v1953 = vld [vmem:[%s1938 + $0x38] sm:$0xf]
      %v1954 = vld [vmem:[%s1938 + $0x3c] sm:$0xf]
      %v1971 = vunpack.c.l.b16 %v1939
      %v1972 = vunpack.c.l.b16 %v1940
      %v1973 = vunpack.c.l.b16 %v1941
      %v1974 = vunpack.c.l.b16 %v1942
      %v1975 = vunpack.c.l.b16 %v1943
      %v1976 = vunpack.c.l.b16 %v1944
      %v1977 = vunpack.c.l.b16 %v1945
      %v1978 = vunpack.c.l.b16 %v1946
      %v1979 = vunpack.c.l.b16 %v1947
      %v1980 = vunpack.c.l.b16 %v1948
      %v1981 = vunpack.c.l.b16 %v1949
      %v1982 = vunpack.c.l.b16 %v1950
      %v1983 = vunpack.c.l.b16 %v1951
      %v1984 = vunpack.c.l.b16 %v1952
      %v1985 = vunpack.c.l.b16 %v1953
      %v1986 = vunpack.c.l.b16 %v1954
      %v1987 = vpack.c.b16 %v1972, %v1971
      %v1988 = vpack.c.b16 %v1974, %v1973
      %v1989 = vpack.c.b16 %v1976, %v1975
      %v1990 = vpack.c.b16 %v1978, %v1977
      %v1991 = vpack.c.b16 %v1980, %v1979
      %v1992 = vpack.c.b16 %v1982, %v1981
      %v1993 = vpack.c.b16 %v1984, %v1983
      %v1994 = vpack.c.b16 %v1986, %v1985
      %2003 = vmatpush.bf16.msra.mxu0 %v1994
      %2004 = vmatpush.bf16.msra.mxu0 %v1993
      %2005 = vmatpush.bf16.msra.mxu0 %v1992
      %2006 = vmatpush.bf16.msra.mxu0 %v1991
      %2007 = vmatpush.bf16.msra.mxu0 %v1990
      %2008 = vmatpush.bf16.msra.mxu0 %v1989
      %2009 = vmatpush.bf16.msra.mxu0 %v1988
      %2010 = vmatpush.bf16.msra.mxu0 %v1987
      %2011 = vmatmul.bf16.gmra.mxu0 %v1922
      %v2012 = vpop.f32.mrf.mxu0
      %v2013 = vadd.f32 0.0, %v2012
      %v2014 = vpop.f32.mrf.mxu0
      %v2015 = vadd.f32 0.0, %v2014
      %2016 = vmatmul.bf16.gmra.mxu0 %v1923
      %v2017 = vpop.f32.mrf.mxu0
      %v2018 = vadd.f32 0.0, %v2017
      %v2019 = vpop.f32.mrf.mxu0
      %v2020 = vadd.f32 0.0, %v2019
      %2021 = vmatmul.bf16.gmra.mxu0 %v1924
      %v2022 = vpop.f32.mrf.mxu0
      %v2023 = vadd.f32 0.0, %v2022
      %v2024 = vpop.f32.mrf.mxu0
      %v2025 = vadd.f32 0.0, %v2024
      %2026 = vmatmul.bf16.gmra.mxu0 %v1925
      %v2027 = vpop.f32.mrf.mxu0
      %v2028 = vadd.f32 0.0, %v2027
      %v2029 = vpop.f32.mrf.mxu0
      %v2030 = vadd.f32 0.0, %v2029
      %2031 = vmatmul.bf16.gmra.mxu0 %v1926
      %v2032 = vpop.f32.mrf.mxu0
      %v2033 = vadd.f32 0.0, %v2032
      %v2034 = vpop.f32.mrf.mxu0
      %v2035 = vadd.f32 0.0, %v2034
      %2036 = vmatmul.bf16.gmra.mxu0 %v1927
      %v2037 = vpop.f32.mrf.mxu0
      %v2038 = vadd.f32 0.0, %v2037
      %v2039 = vpop.f32.mrf.mxu0
      %v2040 = vadd.f32 0.0, %v2039
      %2041 = vmatmul.bf16.gmra.mxu0 %v1928
      %v2042 = vpop.f32.mrf.mxu0
      %v2043 = vadd.f32 0.0, %v2042
      %v2044 = vpop.f32.mrf.mxu0
      %v2045 = vadd.f32 0.0, %v2044
      %2046 = vmatmul.bf16.gmra.mxu0 %v1929
      %v2047 = vpop.f32.mrf.mxu0
      %v2048 = vadd.f32 0.0, %v2047
      %v2049 = vpop.f32.mrf.mxu0
      %v2050 = vadd.f32 0.0, %v2049
      %2051 = vmatmul.bf16.gmra.mxu0 %v1930
      %v2052 = vpop.f32.mrf.mxu0
      %v2053 = vadd.f32 0.0, %v2052
      %v2054 = vpop.f32.mrf.mxu0
      %v2055 = vadd.f32 0.0, %v2054
      %2056 = vmatmul.bf16.gmra.mxu0 %v1931
      %v2057 = vpop.f32.mrf.mxu0
      %v2058 = vadd.f32 0.0, %v2057
      %v2059 = vpop.f32.mrf.mxu0
      %v2060 = vadd.f32 0.0, %v2059
      %2061 = vmatmul.bf16.gmra.mxu0 %v1932
      %v2062 = vpop.f32.mrf.mxu0
      %v2063 = vadd.f32 0.0, %v2062
      %v2064 = vpop.f32.mrf.mxu0
      %v2065 = vadd.f32 0.0, %v2064
      %2066 = vmatmul.bf16.gmra.mxu0 %v1933
      %v2067 = vpop.f32.mrf.mxu0
      %v2068 = vadd.f32 0.0, %v2067
      %v2069 = vpop.f32.mrf.mxu0
      %v2070 = vadd.f32 0.0, %v2069
      %2071 = vmatmul.bf16.gmra.mxu0 %v1934
      %v2072 = vpop.f32.mrf.mxu0
      %v2073 = vadd.f32 0.0, %v2072
      %v2074 = vpop.f32.mrf.mxu0
      %v2075 = vadd.f32 0.0, %v2074
      %2076 = vmatmul.bf16.gmra.mxu0 %v1935
      %v2077 = vpop.f32.mrf.mxu0
      %v2078 = vadd.f32 0.0, %v2077
      %v2079 = vpop.f32.mrf.mxu0
      %v2080 = vadd.f32 0.0, %v2079
      %2081 = vmatmul.bf16.gmra.mxu0 %v1936
      %v2082 = vpop.f32.mrf.mxu0
      %v2083 = vadd.f32 0.0, %v2082
      %v2084 = vpop.f32.mrf.mxu0
      %v2085 = vadd.f32 0.0, %v2084
      %2086 = vmatmul.bf16.gmra.mxu0 %v1937
      %v2087 = vpop.f32.mrf.mxu0
      %v2088 = vadd.f32 0.0, %v2087
      %v2089 = vpop.f32.mrf.mxu0
      %v2090 = vadd.f32 0.0, %v2089
      %2091 = vdwg.mxu0
      %v2092 = vadd.f32 %v1857, %v2013
      %v2093 = vadd.f32 %v1858, %v2015
      %v2094 = vadd.f32 %v1859, %v2018
      %v2095 = vadd.f32 %v1860, %v2020
      %v2096 = vadd.f32 %v1861, %v2023
      %v2097 = vadd.f32 %v1862, %v2025
      %v2098 = vadd.f32 %v1863, %v2028
      %v2099 = vadd.f32 %v1864, %v2030
      %v2100 = vadd.f32 %v1865, %v2033
      %v2101 = vadd.f32 %v1866, %v2035
      %v2102 = vadd.f32 %v1867, %v2038
      %v2103 = vadd.f32 %v1868, %v2040
      %v2104 = vadd.f32 %v1869, %v2043
      %v2105 = vadd.f32 %v1870, %v2045
      %v2106 = vadd.f32 %v1871, %v2048
      %v2107 = vadd.f32 %v1872, %v2050
      %v2108 = vadd.f32 %v1873, %v2053
      %v2109 = vadd.f32 %v1874, %v2055
      %v2110 = vadd.f32 %v1875, %v2058
      %v2111 = vadd.f32 %v1876, %v2060
      %v2112 = vadd.f32 %v1877, %v2063
      %v2113 = vadd.f32 %v1878, %v2065
      %v2114 = vadd.f32 %v1879, %v2068
      %v2115 = vadd.f32 %v1880, %v2070
      %v2116 = vadd.f32 %v1881, %v2073
      %v2117 = vadd.f32 %v1882, %v2075
      %v2118 = vadd.f32 %v1883, %v2078
      %v2119 = vadd.f32 %v1884, %v2080
      %v2120 = vadd.f32 %v1885, %v2083
      %v2121 = vadd.f32 %v1886, %v2085
      %v2122 = vadd.f32 %v1887, %v2088
      %v2123 = vadd.f32 %v1888, %v2090
      %v2124 = vld [vmem:[%s1889 + $0x10] sm:$0xff]
      %v2125 = vld [vmem:[%s1889 + $0x18] sm:$0xff]
      %v2126 = vld [vmem:[%s1889 + $0x38] sm:$0xff]
      %v2127 = vld [vmem:[%s1889 + $0x40] sm:$0xff]
      %v2128 = vld [vmem:[%s1889 + $0x60] sm:$0xff]
      %v2129 = vld [vmem:[%s1889 + $0x68] sm:$0xff]
      %v2130 = vld [vmem:[%s1889 + $0x88] sm:$0xff]
      %v2131 = vld [vmem:[%s1889 + $0x90] sm:$0xff]
      %v2132 = vld [vmem:[%s1889 + $0xb0] sm:$0xff]
      %v2133 = vld [vmem:[%s1889 + $0xb8] sm:$0xff]
      %v2134 = vld [vmem:[%s1889 + $0xd8] sm:$0xff]
      %v2135 = vld [vmem:[%s1889 + $0xe0] sm:$0xff]
      %v2136 = vld [vmem:[%s1889 + $0x100] sm:$0xff]
      %v2137 = vld [vmem:[%s1889 + $0x108] sm:$0xff]
      %v2138 = vld [vmem:[%s1889 + $0x128] sm:$0xff]
      %v2139 = vld [vmem:[%s1889 + $0x130] sm:$0xff]
      %v2140 = vld [vmem:[%s1889 + $0x150] sm:$0xff]
      %v2141 = vld [vmem:[%s1889 + $0x158] sm:$0xff]
      %v2142 = vld [vmem:[%s1889 + $0x178] sm:$0xff]
      %v2143 = vld [vmem:[%s1889 + $0x180] sm:$0xff]
      %v2144 = vld [vmem:[%s1889 + $0x1a0] sm:$0xff]
      %v2145 = vld [vmem:[%s1889 + $0x1a8] sm:$0xff]
      %v2146 = vld [vmem:[%s1889 + $0x1c8] sm:$0xff]
      %v2147 = vld [vmem:[%s1889 + $0x1d0] sm:$0xff]
      %v2148 = vld [vmem:[%s1889 + $0x1f0] sm:$0xff]
      %v2149 = vld [vmem:[%s1889 + $0x1f8] sm:$0xff]
      %v2150 = vld [vmem:[%s1889 + $0x218] sm:$0xff]
      %v2151 = vld [vmem:[%s1889 + $0x220] sm:$0xff]
      %v2152 = vld [vmem:[%s1889 + $0x240] sm:$0xff]
      %v2153 = vld [vmem:[%s1889 + $0x248] sm:$0xff]
      %v2154 = vld [vmem:[%s1889 + $0x268] sm:$0xff]
      %v2155 = vld [vmem:[%s1889 + $0x270] sm:$0xff]
      %v2156 = vpack.c.bf16 %v2125, %v2124
      %v2157 = vpack.c.bf16 %v2127, %v2126
      %v2158 = vpack.c.bf16 %v2129, %v2128
      %v2159 = vpack.c.bf16 %v2131, %v2130
      %v2160 = vpack.c.bf16 %v2133, %v2132
      %v2161 = vpack.c.bf16 %v2135, %v2134
      %v2162 = vpack.c.bf16 %v2137, %v2136
      %v2163 = vpack.c.bf16 %v2139, %v2138
      %v2164 = vpack.c.bf16 %v2141, %v2140
      %v2165 = vpack.c.bf16 %v2143, %v2142
      %v2166 = vpack.c.bf16 %v2145, %v2144
      %v2167 = vpack.c.bf16 %v2147, %v2146
      %v2168 = vpack.c.bf16 %v2149, %v2148
      %v2169 = vpack.c.bf16 %v2151, %v2150
      %v2170 = vpack.c.bf16 %v2153, %v2152
      %v2171 = vpack.c.bf16 %v2155, %v2154
      %s2172 = scalar_lea.vmem %s1, 448
      %v2173 = vld [vmem:[%s2172] sm:$0xf]
      %v2174 = vld [vmem:[%s2172 + $0x4] sm:$0xf]
      %v2175 = vld [vmem:[%s2172 + $0x8] sm:$0xf]
      %v2176 = vld [vmem:[%s2172 + $0xc] sm:$0xf]
      %v2177 = vld [vmem:[%s2172 + $0x10] sm:$0xf]
      %v2178 = vld [vmem:[%s2172 + $0x14] sm:$0xf]
      %v2179 = vld [vmem:[%s2172 + $0x18] sm:$0xf]
      %v2180 = vld [vmem:[%s2172 + $0x1c] sm:$0xf]
      %v2181 = vld [vmem:[%s2172 + $0x20] sm:$0xf]
      %v2182 = vld [vmem:[%s2172 + $0x24] sm:$0xf]
      %v2183 = vld [vmem:[%s2172 + $0x28] sm:$0xf]
      %v2184 = vld [vmem:[%s2172 + $0x2c] sm:$0xf]
      %v2185 = vld [vmem:[%s2172 + $0x30] sm:$0xf]
      %v2186 = vld [vmem:[%s2172 + $0x34] sm:$0xf]
      %v2187 = vld [vmem:[%s2172 + $0x38] sm:$0xf]
      %v2188 = vld [vmem:[%s2172 + $0x3c] sm:$0xf]
      %v2205 = vunpack.c.l.b16 %v2173
      %v2206 = vunpack.c.l.b16 %v2174
      %v2207 = vunpack.c.l.b16 %v2175
      %v2208 = vunpack.c.l.b16 %v2176
      %v2209 = vunpack.c.l.b16 %v2177
      %v2210 = vunpack.c.l.b16 %v2178
      %v2211 = vunpack.c.l.b16 %v2179
      %v2212 = vunpack.c.l.b16 %v2180
      %v2213 = vunpack.c.l.b16 %v2181
      %v2214 = vunpack.c.l.b16 %v2182
      %v2215 = vunpack.c.l.b16 %v2183
      %v2216 = vunpack.c.l.b16 %v2184
      %v2217 = vunpack.c.l.b16 %v2185
      %v2218 = vunpack.c.l.b16 %v2186
      %v2219 = vunpack.c.l.b16 %v2187
      %v2220 = vunpack.c.l.b16 %v2188
      %v2221 = vpack.c.b16 %v2206, %v2205
      %v2222 = vpack.c.b16 %v2208, %v2207
      %v2223 = vpack.c.b16 %v2210, %v2209
      %v2224 = vpack.c.b16 %v2212, %v2211
      %v2225 = vpack.c.b16 %v2214, %v2213
      %v2226 = vpack.c.b16 %v2216, %v2215
      %v2227 = vpack.c.b16 %v2218, %v2217
      %v2228 = vpack.c.b16 %v2220, %v2219
      %2237 = vmatpush.bf16.msra.mxu0 %v2228
      %2238 = vmatpush.bf16.msra.mxu0 %v2227
      %2239 = vmatpush.bf16.msra.mxu0 %v2226
      %2240 = vmatpush.bf16.msra.mxu0 %v2225
      %2241 = vmatpush.bf16.msra.mxu0 %v2224
      %2242 = vmatpush.bf16.msra.mxu0 %v2223
      %2243 = vmatpush.bf16.msra.mxu0 %v2222
      %2244 = vmatpush.bf16.msra.mxu0 %v2221
      %2245 = vmatmul.bf16.gmra.mxu0 %v2156
      %v2246 = vpop.f32.mrf.mxu0
      %v2247 = vadd.f32 0.0, %v2246
      %v2248 = vpop.f32.mrf.mxu0
      %v2249 = vadd.f32 0.0, %v2248
      %2250 = vmatmul.bf16.gmra.mxu0 %v2157
      %v2251 = vpop.f32.mrf.mxu0
      %v2252 = vadd.f32 0.0, %v2251
      %v2253 = vpop.f32.mrf.mxu0
      %v2254 = vadd.f32 0.0, %v2253
      %2255 = vmatmul.bf16.gmra.mxu0 %v2158
      %v2256 = vpop.f32.mrf.mxu0
      %v2257 = vadd.f32 0.0, %v2256
      %v2258 = vpop.f32.mrf.mxu0
      %v2259 = vadd.f32 0.0, %v2258
      %2260 = vmatmul.bf16.gmra.mxu0 %v2159
      %v2261 = vpop.f32.mrf.mxu0
      %v2262 = vadd.f32 0.0, %v2261
      %v2263 = vpop.f32.mrf.mxu0
      %v2264 = vadd.f32 0.0, %v2263
      %2265 = vmatmul.bf16.gmra.mxu0 %v2160
      %v2266 = vpop.f32.mrf.mxu0
      %v2267 = vadd.f32 0.0, %v2266
      %v2268 = vpop.f32.mrf.mxu0
      %v2269 = vadd.f32 0.0, %v2268
      %2270 = vmatmul.bf16.gmra.mxu0 %v2161
      %v2271 = vpop.f32.mrf.mxu0
      %v2272 = vadd.f32 0.0, %v2271
      %v2273 = vpop.f32.mrf.mxu0
      %v2274 = vadd.f32 0.0, %v2273
      %2275 = vmatmul.bf16.gmra.mxu0 %v2162
      %v2276 = vpop.f32.mrf.mxu0
      %v2277 = vadd.f32 0.0, %v2276
      %v2278 = vpop.f32.mrf.mxu0
      %v2279 = vadd.f32 0.0, %v2278
      %2280 = vmatmul.bf16.gmra.mxu0 %v2163
      %v2281 = vpop.f32.mrf.mxu0
      %v2282 = vadd.f32 0.0, %v2281
      %v2283 = vpop.f32.mrf.mxu0
      %v2284 = vadd.f32 0.0, %v2283
      %2285 = vmatmul.bf16.gmra.mxu0 %v2164
      %v2286 = vpop.f32.mrf.mxu0
      %v2287 = vadd.f32 0.0, %v2286
      %v2288 = vpop.f32.mrf.mxu0
      %v2289 = vadd.f32 0.0, %v2288
      %2290 = vmatmul.bf16.gmra.mxu0 %v2165
      %v2291 = vpop.f32.mrf.mxu0
      %v2292 = vadd.f32 0.0, %v2291
      %v2293 = vpop.f32.mrf.mxu0
      %v2294 = vadd.f32 0.0, %v2293
      %2295 = vmatmul.bf16.gmra.mxu0 %v2166
      %v2296 = vpop.f32.mrf.mxu0
      %v2297 = vadd.f32 0.0, %v2296
      %v2298 = vpop.f32.mrf.mxu0
      %v2299 = vadd.f32 0.0, %v2298
      %2300 = vmatmul.bf16.gmra.mxu0 %v2167
      %v2301 = vpop.f32.mrf.mxu0
      %v2302 = vadd.f32 0.0, %v2301
      %v2303 = vpop.f32.mrf.mxu0
      %v2304 = vadd.f32 0.0, %v2303
      %2305 = vmatmul.bf16.gmra.mxu0 %v2168
      %v2306 = vpop.f32.mrf.mxu0
      %v2307 = vadd.f32 0.0, %v2306
      %v2308 = vpop.f32.mrf.mxu0
      %v2309 = vadd.f32 0.0, %v2308
      %2310 = vmatmul.bf16.gmra.mxu0 %v2169
      %v2311 = vpop.f32.mrf.mxu0
      %v2312 = vadd.f32 0.0, %v2311
      %v2313 = vpop.f32.mrf.mxu0
      %v2314 = vadd.f32 0.0, %v2313
      %2315 = vmatmul.bf16.gmra.mxu0 %v2170
      %v2316 = vpop.f32.mrf.mxu0
      %v2317 = vadd.f32 0.0, %v2316
      %v2318 = vpop.f32.mrf.mxu0
      %v2319 = vadd.f32 0.0, %v2318
      %2320 = vmatmul.bf16.gmra.mxu0 %v2171
      %v2321 = vpop.f32.mrf.mxu0
      %v2322 = vadd.f32 0.0, %v2321
      %v2323 = vpop.f32.mrf.mxu0
      %v2324 = vadd.f32 0.0, %v2323
      %2325 = vdwg.mxu0
      %v2326 = vadd.f32 %v2092, %v2247
      %v2327 = vadd.f32 %v2093, %v2249
      %v2328 = vadd.f32 %v2094, %v2252
      %v2329 = vadd.f32 %v2095, %v2254
      %v2330 = vadd.f32 %v2096, %v2257
      %v2331 = vadd.f32 %v2097, %v2259
      %v2332 = vadd.f32 %v2098, %v2262
      %v2333 = vadd.f32 %v2099, %v2264
      %v2334 = vadd.f32 %v2100, %v2267
      %v2335 = vadd.f32 %v2101, %v2269
      %v2336 = vadd.f32 %v2102, %v2272
      %v2337 = vadd.f32 %v2103, %v2274
      %v2338 = vadd.f32 %v2104, %v2277
      %v2339 = vadd.f32 %v2105, %v2279
      %v2340 = vadd.f32 %v2106, %v2282
      %v2341 = vadd.f32 %v2107, %v2284
      %v2342 = vadd.f32 %v2108, %v2287
      %v2343 = vadd.f32 %v2109, %v2289
      %v2344 = vadd.f32 %v2110, %v2292
      %v2345 = vadd.f32 %v2111, %v2294
      %v2346 = vadd.f32 %v2112, %v2297
      %v2347 = vadd.f32 %v2113, %v2299
      %v2348 = vadd.f32 %v2114, %v2302
      %v2349 = vadd.f32 %v2115, %v2304
      %v2350 = vadd.f32 %v2116, %v2307
      %v2351 = vadd.f32 %v2117, %v2309
      %v2352 = vadd.f32 %v2118, %v2312
      %v2353 = vadd.f32 %v2119, %v2314
      %v2354 = vadd.f32 %v2120, %v2317
      %v2355 = vadd.f32 %v2121, %v2319
      %v2356 = vadd.f32 %v2122, %v2322
      %v2357 = vadd.f32 %v2123, %v2324
      %v2358 = vld [vmem:[%s1889 + $0x11] sm:$0xff]
      %v2359 = vld [vmem:[%s1889 + $0x19] sm:$0xff]
      %v2360 = vld [vmem:[%s1889 + $0x39] sm:$0xff]
      %v2361 = vld [vmem:[%s1889 + $0x41] sm:$0xff]
      %v2362 = vld [vmem:[%s1889 + $0x61] sm:$0xff]
      %v2363 = vld [vmem:[%s1889 + $0x69] sm:$0xff]
      %v2364 = vld [vmem:[%s1889 + $0x89] sm:$0xff]
      %v2365 = vld [vmem:[%s1889 + $0x91] sm:$0xff]
      %v2366 = vld [vmem:[%s1889 + $0xb1] sm:$0xff]
      %v2367 = vld [vmem:[%s1889 + $0xb9] sm:$0xff]
      %v2368 = vld [vmem:[%s1889 + $0xd9] sm:$0xff]
      %v2369 = vld [vmem:[%s1889 + $0xe1] sm:$0xff]
      %v2370 = vld [vmem:[%s1889 + $0x101] sm:$0xff]
      %v2371 = vld [vmem:[%s1889 + $0x109] sm:$0xff]
      %v2372 = vld [vmem:[%s1889 + $0x129] sm:$0xff]
      %v2373 = vld [vmem:[%s1889 + $0x131] sm:$0xff]
      %v2374 = vld [vmem:[%s1889 + $0x151] sm:$0xff]
      %v2375 = vld [vmem:[%s1889 + $0x159] sm:$0xff]
      %v2376 = vld [vmem:[%s1889 + $0x179] sm:$0xff]
      %v2377 = vld [vmem:[%s1889 + $0x181] sm:$0xff]
      %v2378 = vld [vmem:[%s1889 + $0x1a1] sm:$0xff]
      %v2379 = vld [vmem:[%s1889 + $0x1a9] sm:$0xff]
      %v2380 = vld [vmem:[%s1889 + $0x1c9] sm:$0xff]
      %v2381 = vld [vmem:[%s1889 + $0x1d1] sm:$0xff]
      %v2382 = vld [vmem:[%s1889 + $0x1f1] sm:$0xff]
      %v2383 = vld [vmem:[%s1889 + $0x1f9] sm:$0xff]
      %v2384 = vld [vmem:[%s1889 + $0x219] sm:$0xff]
      %v2385 = vld [vmem:[%s1889 + $0x221] sm:$0xff]
      %v2386 = vld [vmem:[%s1889 + $0x241] sm:$0xff]
      %v2387 = vld [vmem:[%s1889 + $0x249] sm:$0xff]
      %v2388 = vld [vmem:[%s1889 + $0x269] sm:$0xff]
      %v2389 = vld [vmem:[%s1889 + $0x271] sm:$0xff]
      %v2390 = vpack.c.bf16 %v2359, %v2358
      %v2391 = vpack.c.bf16 %v2361, %v2360
      %v2392 = vpack.c.bf16 %v2363, %v2362
      %v2393 = vpack.c.bf16 %v2365, %v2364
      %v2394 = vpack.c.bf16 %v2367, %v2366
      %v2395 = vpack.c.bf16 %v2369, %v2368
      %v2396 = vpack.c.bf16 %v2371, %v2370
      %v2397 = vpack.c.bf16 %v2373, %v2372
      %v2398 = vpack.c.bf16 %v2375, %v2374
      %v2399 = vpack.c.bf16 %v2377, %v2376
      %v2400 = vpack.c.bf16 %v2379, %v2378
      %v2401 = vpack.c.bf16 %v2381, %v2380
      %v2402 = vpack.c.bf16 %v2383, %v2382
      %v2403 = vpack.c.bf16 %v2385, %v2384
      %v2404 = vpack.c.bf16 %v2387, %v2386
      %v2405 = vpack.c.bf16 %v2389, %v2388
      %s2406 = scalar_lea.vmem %s1, 512
      %v2407 = vld [vmem:[%s2406] sm:$0xf]
      %v2408 = vld [vmem:[%s2406 + $0x4] sm:$0xf]
      %v2409 = vld [vmem:[%s2406 + $0x8] sm:$0xf]
      %v2410 = vld [vmem:[%s2406 + $0xc] sm:$0xf]
      %v2411 = vld [vmem:[%s2406 + $0x10] sm:$0xf]
      %v2412 = vld [vmem:[%s2406 + $0x14] sm:$0xf]
      %v2413 = vld [vmem:[%s2406 + $0x18] sm:$0xf]
      %v2414 = vld [vmem:[%s2406 + $0x1c] sm:$0xf]
      %v2415 = vld [vmem:[%s2406 + $0x20] sm:$0xf]
      %v2416 = vld [vmem:[%s2406 + $0x24] sm:$0xf]
      %v2417 = vld [vmem:[%s2406 + $0x28] sm:$0xf]
      %v2418 = vld [vmem:[%s2406 + $0x2c] sm:$0xf]
      %v2419 = vld [vmem:[%s2406 + $0x30] sm:$0xf]
      %v2420 = vld [vmem:[%s2406 + $0x34] sm:$0xf]
      %v2421 = vld [vmem:[%s2406 + $0x38] sm:$0xf]
      %v2422 = vld [vmem:[%s2406 + $0x3c] sm:$0xf]
      %v2439 = vunpack.c.l.b16 %v2407
      %v2440 = vunpack.c.l.b16 %v2408
      %v2441 = vunpack.c.l.b16 %v2409
      %v2442 = vunpack.c.l.b16 %v2410
      %v2443 = vunpack.c.l.b16 %v2411
      %v2444 = vunpack.c.l.b16 %v2412
      %v2445 = vunpack.c.l.b16 %v2413
      %v2446 = vunpack.c.l.b16 %v2414
      %v2447 = vunpack.c.l.b16 %v2415
      %v2448 = vunpack.c.l.b16 %v2416
      %v2449 = vunpack.c.l.b16 %v2417
      %v2450 = vunpack.c.l.b16 %v2418
      %v2451 = vunpack.c.l.b16 %v2419
      %v2452 = vunpack.c.l.b16 %v2420
      %v2453 = vunpack.c.l.b16 %v2421
      %v2454 = vunpack.c.l.b16 %v2422
      %v2455 = vpack.c.b16 %v2440, %v2439
      %v2456 = vpack.c.b16 %v2442, %v2441
      %v2457 = vpack.c.b16 %v2444, %v2443
      %v2458 = vpack.c.b16 %v2446, %v2445
      %v2459 = vpack.c.b16 %v2448, %v2447
      %v2460 = vpack.c.b16 %v2450, %v2449
      %v2461 = vpack.c.b16 %v2452, %v2451
      %v2462 = vpack.c.b16 %v2454, %v2453
      %2471 = vmatpush.bf16.msra.mxu0 %v2462
      %2472 = vmatpush.bf16.msra.mxu0 %v2461
      %2473 = vmatpush.bf16.msra.mxu0 %v2460
      %2474 = vmatpush.bf16.msra.mxu0 %v2459
      %2475 = vmatpush.bf16.msra.mxu0 %v2458
      %2476 = vmatpush.bf16.msra.mxu0 %v2457
      %2477 = vmatpush.bf16.msra.mxu0 %v2456
      %2478 = vmatpush.bf16.msra.mxu0 %v2455
      %2479 = vmatmul.bf16.gmra.mxu0 %v2390
      %v2480 = vpop.f32.mrf.mxu0
      %v2481 = vadd.f32 0.0, %v2480
      %v2482 = vpop.f32.mrf.mxu0
      %v2483 = vadd.f32 0.0, %v2482
      %2484 = vmatmul.bf16.gmra.mxu0 %v2391
      %v2485 = vpop.f32.mrf.mxu0
      %v2486 = vadd.f32 0.0, %v2485
      %v2487 = vpop.f32.mrf.mxu0
      %v2488 = vadd.f32 0.0, %v2487
      %2489 = vmatmul.bf16.gmra.mxu0 %v2392
      %v2490 = vpop.f32.mrf.mxu0
      %v2491 = vadd.f32 0.0, %v2490
      %v2492 = vpop.f32.mrf.mxu0
      %v2493 = vadd.f32 0.0, %v2492
      %2494 = vmatmul.bf16.gmra.mxu0 %v2393
      %v2495 = vpop.f32.mrf.mxu0
      %v2496 = vadd.f32 0.0, %v2495
      %v2497 = vpop.f32.mrf.mxu0
      %v2498 = vadd.f32 0.0, %v2497
      %2499 = vmatmul.bf16.gmra.mxu0 %v2394
      %v2500 = vpop.f32.mrf.mxu0
      %v2501 = vadd.f32 0.0, %v2500
      %v2502 = vpop.f32.mrf.mxu0
      %v2503 = vadd.f32 0.0, %v2502
      %2504 = vmatmul.bf16.gmra.mxu0 %v2395
      %v2505 = vpop.f32.mrf.mxu0
      %v2506 = vadd.f32 0.0, %v2505
      %v2507 = vpop.f32.mrf.mxu0
      %v2508 = vadd.f32 0.0, %v2507
      %2509 = vmatmul.bf16.gmra.mxu0 %v2396
      %v2510 = vpop.f32.mrf.mxu0
      %v2511 = vadd.f32 0.0, %v2510
      %v2512 = vpop.f32.mrf.mxu0
      %v2513 = vadd.f32 0.0, %v2512
      %2514 = vmatmul.bf16.gmra.mxu0 %v2397
      %v2515 = vpop.f32.mrf.mxu0
      %v2516 = vadd.f32 0.0, %v2515
      %v2517 = vpop.f32.mrf.mxu0
      %v2518 = vadd.f32 0.0, %v2517
      %2519 = vmatmul.bf16.gmra.mxu0 %v2398
      %v2520 = vpop.f32.mrf.mxu0
      %v2521 = vadd.f32 0.0, %v2520
      %v2522 = vpop.f32.mrf.mxu0
      %v2523 = vadd.f32 0.0, %v2522
      %2524 = vmatmul.bf16.gmra.mxu0 %v2399
      %v2525 = vpop.f32.mrf.mxu0
      %v2526 = vadd.f32 0.0, %v2525
      %v2527 = vpop.f32.mrf.mxu0
      %v2528 = vadd.f32 0.0, %v2527
      %2529 = vmatmul.bf16.gmra.mxu0 %v2400
      %v2530 = vpop.f32.mrf.mxu0
      %v2531 = vadd.f32 0.0, %v2530
      %v2532 = vpop.f32.mrf.mxu0
      %v2533 = vadd.f32 0.0, %v2532
      %2534 = vmatmul.bf16.gmra.mxu0 %v2401
      %v2535 = vpop.f32.mrf.mxu0
      %v2536 = vadd.f32 0.0, %v2535
      %v2537 = vpop.f32.mrf.mxu0
      %v2538 = vadd.f32 0.0, %v2537
      %2539 = vmatmul.bf16.gmra.mxu0 %v2402
      %v2540 = vpop.f32.mrf.mxu0
      %v2541 = vadd.f32 0.0, %v2540
      %v2542 = vpop.f32.mrf.mxu0
      %v2543 = vadd.f32 0.0, %v2542
      %2544 = vmatmul.bf16.gmra.mxu0 %v2403
      %v2545 = vpop.f32.mrf.mxu0
      %v2546 = vadd.f32 0.0, %v2545
      %v2547 = vpop.f32.mrf.mxu0
      %v2548 = vadd.f32 0.0, %v2547
      %2549 = vmatmul.bf16.gmra.mxu0 %v2404
      %v2550 = vpop.f32.mrf.mxu0
      %v2551 = vadd.f32 0.0, %v2550
      %v2552 = vpop.f32.mrf.mxu0
      %v2553 = vadd.f32 0.0, %v2552
      %2554 = vmatmul.bf16.gmra.mxu0 %v2405
      %v2555 = vpop.f32.mrf.mxu0
      %v2556 = vadd.f32 0.0, %v2555
      %v2557 = vpop.f32.mrf.mxu0
      %v2558 = vadd.f32 0.0, %v2557
      %2559 = vdwg.mxu0
      %v2560 = vadd.f32 %v2326, %v2481
      %v2561 = vadd.f32 %v2327, %v2483
      %v2562 = vadd.f32 %v2328, %v2486
      %v2563 = vadd.f32 %v2329, %v2488
      %v2564 = vadd.f32 %v2330, %v2491
      %v2565 = vadd.f32 %v2331, %v2493
      %v2566 = vadd.f32 %v2332, %v2496
      %v2567 = vadd.f32 %v2333, %v2498
      %v2568 = vadd.f32 %v2334, %v2501
      %v2569 = vadd.f32 %v2335, %v2503
      %v2570 = vadd.f32 %v2336, %v2506
      %v2571 = vadd.f32 %v2337, %v2508
      %v2572 = vadd.f32 %v2338, %v2511
      %v2573 = vadd.f32 %v2339, %v2513
      %v2574 = vadd.f32 %v2340, %v2516
      %v2575 = vadd.f32 %v2341, %v2518
      %v2576 = vadd.f32 %v2342, %v2521
      %v2577 = vadd.f32 %v2343, %v2523
      %v2578 = vadd.f32 %v2344, %v2526
      %v2579 = vadd.f32 %v2345, %v2528
      %v2580 = vadd.f32 %v2346, %v2531
      %v2581 = vadd.f32 %v2347, %v2533
      %v2582 = vadd.f32 %v2348, %v2536
      %v2583 = vadd.f32 %v2349, %v2538
      %v2584 = vadd.f32 %v2350, %v2541
      %v2585 = vadd.f32 %v2351, %v2543
      %v2586 = vadd.f32 %v2352, %v2546
      %v2587 = vadd.f32 %v2353, %v2548
      %v2588 = vadd.f32 %v2354, %v2551
      %v2589 = vadd.f32 %v2355, %v2553
      %v2590 = vadd.f32 %v2356, %v2556
      %v2591 = vadd.f32 %v2357, %v2558
      %v2592 = vld [vmem:[%s2] sm:$0x1]
      %v2594 = vperm.slane %v2592, 0
      %v2596 = vmul.f32 %v2560, %v2594
      %v2597 = vmul.f32 %v2561, %v2594
      %v2598 = vmul.f32 %v2562, %v2594
      %v2599 = vmul.f32 %v2563, %v2594
      %v2600 = vmul.f32 %v2564, %v2594
      %v2601 = vmul.f32 %v2565, %v2594
      %v2602 = vmul.f32 %v2566, %v2594
      %v2603 = vmul.f32 %v2567, %v2594
      %v2604 = vmul.f32 %v2568, %v2594
      %v2605 = vmul.f32 %v2569, %v2594
      %v2606 = vmul.f32 %v2570, %v2594
      %v2607 = vmul.f32 %v2571, %v2594
      %v2608 = vmul.f32 %v2572, %v2594
      %v2609 = vmul.f32 %v2573, %v2594
      %v2610 = vmul.f32 %v2574, %v2594
      %v2611 = vmul.f32 %v2575, %v2594
      %v2612 = vmul.f32 %v2576, %v2594
      %v2613 = vmul.f32 %v2577, %v2594
      %v2614 = vmul.f32 %v2578, %v2594
      %v2615 = vmul.f32 %v2579, %v2594
      %v2616 = vmul.f32 %v2580, %v2594
      %v2617 = vmul.f32 %v2581, %v2594
      %v2618 = vmul.f32 %v2582, %v2594
      %v2619 = vmul.f32 %v2583, %v2594
      %v2620 = vmul.f32 %v2584, %v2594
      %v2621 = vmul.f32 %v2585, %v2594
      %v2622 = vmul.f32 %v2586, %v2594
      %v2623 = vmul.f32 %v2587, %v2594
      %v2624 = vmul.f32 %v2588, %v2594
      %v2625 = vmul.f32 %v2589, %v2594
      %v2626 = vmul.f32 %v2590, %v2594
      %v2627 = vmul.f32 %v2591, %v2594
      %v2628 = vld [vmem:[%s3] sm:$0x1]
      %v2630 = vperm.slane %v2628, 0
      %v2632 = vadd.f32 %v2596, %v2630
      %v2633 = vadd.f32 %v2597, %v2630
      %v2634 = vadd.f32 %v2598, %v2630
      %v2635 = vadd.f32 %v2599, %v2630
      %v2636 = vadd.f32 %v2600, %v2630
      %v2637 = vadd.f32 %v2601, %v2630
      %v2638 = vadd.f32 %v2602, %v2630
      %v2639 = vadd.f32 %v2603, %v2630
      %v2640 = vadd.f32 %v2604, %v2630
      %v2641 = vadd.f32 %v2605, %v2630
      %v2642 = vadd.f32 %v2606, %v2630
      %v2643 = vadd.f32 %v2607, %v2630
      %v2644 = vadd.f32 %v2608, %v2630
      %v2645 = vadd.f32 %v2609, %v2630
      %v2646 = vadd.f32 %v2610, %v2630
      %v2647 = vadd.f32 %v2611, %v2630
      %v2648 = vadd.f32 %v2612, %v2630
      %v2649 = vadd.f32 %v2613, %v2630
      %v2650 = vadd.f32 %v2614, %v2630
      %v2651 = vadd.f32 %v2615, %v2630
      %v2652 = vadd.f32 %v2616, %v2630
      %v2653 = vadd.f32 %v2617, %v2630
      %v2654 = vadd.f32 %v2618, %v2630
      %v2655 = vadd.f32 %v2619, %v2630
      %v2656 = vadd.f32 %v2620, %v2630
      %v2657 = vadd.f32 %v2621, %v2630
      %v2658 = vadd.f32 %v2622, %v2630
      %v2659 = vadd.f32 %v2623, %v2630
      %v2660 = vadd.f32 %v2624, %v2630
      %v2661 = vadd.f32 %v2625, %v2630
      %v2662 = vadd.f32 %v2626, %v2630
      %v2663 = vadd.f32 %v2627, %v2630
      %v2664 = vmax.f32 %v2632, 0.0
      %v2665 = vmax.f32 %v2633, 0.0
      %v2666 = vmax.f32 %v2634, 0.0
      %v2667 = vmax.f32 %v2635, 0.0
      %v2668 = vmax.f32 %v2636, 0.0
      %v2669 = vmax.f32 %v2637, 0.0
      %v2670 = vmax.f32 %v2638, 0.0
      %v2671 = vmax.f32 %v2639, 0.0
      %v2672 = vmax.f32 %v2640, 0.0
      %v2673 = vmax.f32 %v2641, 0.0
      %v2674 = vmax.f32 %v2642, 0.0
      %v2675 = vmax.f32 %v2643, 0.0
      %v2676 = vmax.f32 %v2644, 0.0
      %v2677 = vmax.f32 %v2645, 0.0
      %v2678 = vmax.f32 %v2646, 0.0
      %v2679 = vmax.f32 %v2647, 0.0
      %v2680 = vmax.f32 %v2648, 0.0
      %v2681 = vmax.f32 %v2649, 0.0
      %v2682 = vmax.f32 %v2650, 0.0
      %v2683 = vmax.f32 %v2651, 0.0
      %v2684 = vmax.f32 %v2652, 0.0
      %v2685 = vmax.f32 %v2653, 0.0
      %v2686 = vmax.f32 %v2654, 0.0
      %v2687 = vmax.f32 %v2655, 0.0
      %v2688 = vmax.f32 %v2656, 0.0
      %v2689 = vmax.f32 %v2657, 0.0
      %v2690 = vmax.f32 %v2658, 0.0
      %v2691 = vmax.f32 %v2659, 0.0
      %v2692 = vmax.f32 %v2660, 0.0
      %v2693 = vmax.f32 %v2661, 0.0
      %v2694 = vmax.f32 %v2662, 0.0
      %v2695 = vmax.f32 %v2663, 0.0
      %2696 = vst [vmem:[#allocation3] sm:$0xff] 0.0
      %2697 = vst [vmem:[#allocation3 + $0x8] sm:$0xff] 0.0
      %2698 = vst [vmem:[#allocation3 + $0x10] sm:$0xff] 0.0
      %2699 = vst [vmem:[#allocation3 + $0x18] sm:$0xff] 0.0
      %2700 = vst [vmem:[#allocation3 + $0x20] sm:$0x1] 0.0
      %2701 = vst [vmem:[#allocation3 + $0x28] sm:$0xff] 0.0
      %2702 = vst [vmem:[#allocation3 + $0x30] sm:$0xff] 0.0
      %2703 = vst [vmem:[#allocation3 + $0x38] sm:$0xff] 0.0
      %2704 = vst [vmem:[#allocation3 + $0x40] sm:$0xff] 0.0
      %2705 = vst [vmem:[#allocation3 + $0x48] sm:$0x1] 0.0
      %2706 = vst [vmem:[#allocation3 + $0x50] sm:$0xff] 0.0
      %2707 = vst [vmem:[#allocation3 + $0x58] sm:$0xff] 0.0
      %2708 = vst [vmem:[#allocation3 + $0x60] sm:$0xff] 0.0
      %2709 = vst [vmem:[#allocation3 + $0x68] sm:$0xff] 0.0
      %2710 = vst [vmem:[#allocation3 + $0x70] sm:$0x1] 0.0
      %2711 = vst [vmem:[#allocation3 + $0x78] sm:$0xff] 0.0
      %2712 = vst [vmem:[#allocation3 + $0x80] sm:$0xff] 0.0
      %2713 = vst [vmem:[#allocation3 + $0x88] sm:$0xff] 0.0
      %2714 = vst [vmem:[#allocation3 + $0x90] sm:$0xff] 0.0
      %2715 = vst [vmem:[#allocation3 + $0x98] sm:$0x1] 0.0
      %2716 = vst [vmem:[#allocation3 + $0xa0] sm:$0xff] 0.0
      %2717 = vst [vmem:[#allocation3 + $0xa8] sm:$0xff] 0.0
      %2718 = vst [vmem:[#allocation3 + $0xb0] sm:$0xff] 0.0
      %2719 = vst [vmem:[#allocation3 + $0xb8] sm:$0xff] 0.0
      %2720 = vst [vmem:[#allocation3 + $0xc0] sm:$0x1] 0.0
      %2721 = vst [vmem:[#allocation3 + $0xc8] sm:$0xff] 0.0
      %2722 = vst [vmem:[#allocation3 + $0xd0] sm:$0xff] 0.0
      %2723 = vst [vmem:[#allocation3 + $0xd8] sm:$0xff] 0.0
      %2724 = vst [vmem:[#allocation3 + $0xe0] sm:$0xff] 0.0
      %2725 = vst [vmem:[#allocation3 + $0xe8] sm:$0x1] 0.0
      %2726 = vst [vmem:[#allocation3 + $0xf0] sm:$0xff] 0.0
      %2727 = vst [vmem:[#allocation3 + $0xf8] sm:$0xff] 0.0
      %2728 = vst [vmem:[#allocation3 + $0x100] sm:$0xff] 0.0
      %2729 = vst [vmem:[#allocation3 + $0x108] sm:$0xff] 0.0
      %2730 = vst [vmem:[#allocation3 + $0x110] sm:$0x1] 0.0
      %2731 = vst [vmem:[#allocation3 + $0x118] sm:$0xff] 0.0
      %2732 = vst [vmem:[#allocation3 + $0x120] sm:$0xff] 0.0
      %2733 = vst [vmem:[#allocation3 + $0x128] sm:$0xff] 0.0
      %2734 = vst [vmem:[#allocation3 + $0x130] sm:$0xff] 0.0
      %2735 = vst [vmem:[#allocation3 + $0x138] sm:$0x1] 0.0
      %2736 = vst [vmem:[#allocation3 + $0x140] sm:$0xff] 0.0
      %2737 = vst [vmem:[#allocation3 + $0x148] sm:$0xff] 0.0
      %2738 = vst [vmem:[#allocation3 + $0x150] sm:$0xff] 0.0
      %2739 = vst [vmem:[#allocation3 + $0x158] sm:$0xff] 0.0
      %2740 = vst [vmem:[#allocation3 + $0x160] sm:$0x1] 0.0
      %2741 = vst [vmem:[#allocation3 + $0x168] sm:$0xff] 0.0
      %2742 = vst [vmem:[#allocation3 + $0x170] sm:$0xff] 0.0
      %2743 = vst [vmem:[#allocation3 + $0x178] sm:$0xff] 0.0
      %2744 = vst [vmem:[#allocation3 + $0x180] sm:$0xff] 0.0
      %2745 = vst [vmem:[#allocation3 + $0x188] sm:$0x1] 0.0
      %2746 = vst [vmem:[#allocation3 + $0x190] sm:$0xff] 0.0
      %2747 = vst [vmem:[#allocation3 + $0x198] sm:$0xff] 0.0
      %2748 = vst [vmem:[#allocation3 + $0x1a0] sm:$0xff] 0.0
      %2749 = vst [vmem:[#allocation3 + $0x1a8] sm:$0xff] 0.0
      %2750 = vst [vmem:[#allocation3 + $0x1b0] sm:$0x1] 0.0
      %2751 = vst [vmem:[#allocation3 + $0x1b8] sm:$0xff] 0.0
      %2752 = vst [vmem:[#allocation3 + $0x1c0] sm:$0xff] 0.0
      %2753 = vst [vmem:[#allocation3 + $0x1c8] sm:$0xff] 0.0
      %2754 = vst [vmem:[#allocation3 + $0x1d0] sm:$0xff] 0.0
      %2755 = vst [vmem:[#allocation3 + $0x1d8] sm:$0x1] 0.0
      %2756 = vst [vmem:[#allocation3 + $0x1e0] sm:$0xff] 0.0
      %2757 = vst [vmem:[#allocation3 + $0x1e8] sm:$0xff] 0.0
      %2758 = vst [vmem:[#allocation3 + $0x1f0] sm:$0xff] 0.0
      %2759 = vst [vmem:[#allocation3 + $0x1f8] sm:$0xff] 0.0
      %2760 = vst [vmem:[#allocation3 + $0x200] sm:$0x1] 0.0
      %2761 = vst [vmem:[#allocation3 + $0x208] sm:$0xff] 0.0
      %2762 = vst [vmem:[#allocation3 + $0x210] sm:$0xff] 0.0
      %2763 = vst [vmem:[#allocation3 + $0x218] sm:$0xff] 0.0
      %2764 = vst [vmem:[#allocation3 + $0x220] sm:$0xff] 0.0
      %2765 = vst [vmem:[#allocation3 + $0x228] sm:$0x1] 0.0
      %2766 = vst [vmem:[#allocation3 + $0x230] sm:$0xff] 0.0
      %2767 = vst [vmem:[#allocation3 + $0x238] sm:$0xff] 0.0
      %2768 = vst [vmem:[#allocation3 + $0x240] sm:$0xff] 0.0
      %2769 = vst [vmem:[#allocation3 + $0x248] sm:$0xff] 0.0
      %2770 = vst [vmem:[#allocation3 + $0x250] sm:$0x1] 0.0
      %2771 = vst [vmem:[#allocation3 + $0x258] sm:$0xff] 0.0
      %2772 = vst [vmem:[#allocation3 + $0x260] sm:$0xff] 0.0
      %2773 = vst [vmem:[#allocation3 + $0x268] sm:$0xff] 0.0
      %2774 = vst [vmem:[#allocation3 + $0x270] sm:$0xff] 0.0
      %2775 = vst [vmem:[#allocation3 + $0x278] sm:$0x1] 0.0
      %2776 = vst [vmem:[#allocation3 + $0x280] sm:$0xff] 0.0
      %2777 = vst [vmem:[#allocation3 + $0x288] sm:$0xff] 0.0
      %2778 = vst [vmem:[#allocation3 + $0x290] sm:$0xff] 0.0
      %2779 = vst [vmem:[#allocation3 + $0x298] sm:$0xff] 0.0
      %2780 = vst [vmem:[#allocation3 + $0x2a0] sm:$0x1] 0.0
      %2781 = vst [vmem:[#allocation3 + $0x2a8] sm:$0xff] 0.0
      %2782 = vst [vmem:[#allocation3 + $0x2b0] sm:$0xff] 0.0
      %2783 = vst [vmem:[#allocation3 + $0x2b8] sm:$0xff] 0.0
      %2784 = vst [vmem:[#allocation3 + $0x2c0] sm:$0xff] 0.0
      %2785 = vst [vmem:[#allocation3 + $0x2c8] sm:$0x1] 0.0
      %2786 = vst [vmem:[#allocation3 + $0x2d0] sm:$0xff] 0.0
      %2787 = vst [vmem:[#allocation3 + $0x2d8] sm:$0xff] 0.0
      %2788 = vst [vmem:[#allocation3 + $0x2e0] sm:$0xff] 0.0
      %2789 = vst [vmem:[#allocation3 + $0x2e8] sm:$0xff] 0.0
      %2790 = vst [vmem:[#allocation3 + $0x2f0] sm:$0x1] 0.0
      %2791 = vst [vmem:[#allocation3 + $0x2f8] sm:$0xff] 0.0
      %2792 = vst [vmem:[#allocation3 + $0x300] sm:$0xff] 0.0
      %2793 = vst [vmem:[#allocation3 + $0x308] sm:$0xff] 0.0
      %2794 = vst [vmem:[#allocation3 + $0x310] sm:$0xff] 0.0
      %2795 = vst [vmem:[#allocation3 + $0x318] sm:$0x1] 0.0
      %2796 = vst [vmem:[#allocation3 + $0x320] sm:$0xff] 0.0
      %2797 = vst [vmem:[#allocation3 + $0x328] sm:$0xff] 0.0
      %2798 = vst [vmem:[#allocation3 + $0x330] sm:$0xff] 0.0
      %2799 = vst [vmem:[#allocation3 + $0x338] sm:$0xff] 0.0
      %2800 = vst [vmem:[#allocation3 + $0x340] sm:$0x1] 0.0
      %2801 = vst [vmem:[#allocation3 + $0x348] sm:$0xff] 0.0
      %2802 = vst [vmem:[#allocation3 + $0x350] sm:$0xff] 0.0
      %2803 = vst [vmem:[#allocation3 + $0x358] sm:$0xff] 0.0
      %2804 = vst [vmem:[#allocation3 + $0x360] sm:$0xff] 0.0
      %2805 = vst [vmem:[#allocation3 + $0x368] sm:$0x1] 0.0
      %2806 = vst [vmem:[#allocation3 + $0x370] sm:$0xff] 0.0
      %2807 = vst [vmem:[#allocation3 + $0x378] sm:$0xff] 0.0
      %2808 = vst [vmem:[#allocation3 + $0x380] sm:$0xff] 0.0
      %2809 = vst [vmem:[#allocation3 + $0x388] sm:$0xff] 0.0
      %2810 = vst [vmem:[#allocation3 + $0x390] sm:$0x1] 0.0
      %2811 = vst [vmem:[#allocation3 + $0x398] sm:$0xff] 0.0
      %2812 = vst [vmem:[#allocation3 + $0x3a0] sm:$0xff] 0.0
      %2813 = vst [vmem:[#allocation3 + $0x3a8] sm:$0xff] 0.0
      %2814 = vst [vmem:[#allocation3 + $0x3b0] sm:$0xff] 0.0
      %2815 = vst [vmem:[#allocation3 + $0x3b8] sm:$0x1] 0.0
      %2816 = vst [vmem:[#allocation3 + $0x3c0] sm:$0xff] 0.0
      %2817 = vst [vmem:[#allocation3 + $0x3c8] sm:$0xff] 0.0
      %2818 = vst [vmem:[#allocation3 + $0x3d0] sm:$0xff] 0.0
      %2819 = vst [vmem:[#allocation3 + $0x3d8] sm:$0xff] 0.0
      %2820 = vst [vmem:[#allocation3 + $0x3e0] sm:$0x1] 0.0
      %2821 = vst [vmem:[#allocation3 + $0x3e8] sm:$0xff] 0.0
      %2822 = vst [vmem:[#allocation3 + $0x3f0] sm:$0xff] 0.0
      %2823 = vst [vmem:[#allocation3 + $0x3f8] sm:$0xff] 0.0
      %2824 = vst [vmem:[#allocation3 + $0x400] sm:$0xff] 0.0
      %2825 = vst [vmem:[#allocation3 + $0x408] sm:$0x1] 0.0
      %2826 = vst [vmem:[#allocation3 + $0x410] sm:$0xff] 0.0
      %2827 = vst [vmem:[#allocation3 + $0x418] sm:$0xff] 0.0
      %2828 = vst [vmem:[#allocation3 + $0x420] sm:$0xff] 0.0
      %2829 = vst [vmem:[#allocation3 + $0x428] sm:$0xff] 0.0
      %2830 = vst [vmem:[#allocation3 + $0x430] sm:$0x1] 0.0
      %2831 = vst [vmem:[#allocation3 + $0x438] sm:$0xff] 0.0
      %2832 = vst [vmem:[#allocation3 + $0x440] sm:$0xff] 0.0
      %2833 = vst [vmem:[#allocation3 + $0x448] sm:$0xff] 0.0
      %2834 = vst [vmem:[#allocation3 + $0x450] sm:$0xff] 0.0
      %2835 = vst [vmem:[#allocation3 + $0x458] sm:$0x1] 0.0
      %2836 = vst [vmem:[#allocation3 + $0x460] sm:$0xff] 0.0
      %2837 = vst [vmem:[#allocation3 + $0x468] sm:$0xff] 0.0
      %2838 = vst [vmem:[#allocation3 + $0x470] sm:$0xff] 0.0
      %2839 = vst [vmem:[#allocation3 + $0x478] sm:$0xff] 0.0
      %2840 = vst [vmem:[#allocation3 + $0x480] sm:$0x1] 0.0
      %2841 = vst [vmem:[#allocation3 + $0x488] sm:$0xff] 0.0
      %2842 = vst [vmem:[#allocation3 + $0x490] sm:$0xff] 0.0
      %2843 = vst [vmem:[#allocation3 + $0x498] sm:$0xff] 0.0
      %2844 = vst [vmem:[#allocation3 + $0x4a0] sm:$0xff] 0.0
      %2845 = vst [vmem:[#allocation3 + $0x4a8] sm:$0x1] 0.0
      %2846 = vst [vmem:[#allocation3 + $0x4b0] sm:$0xff] 0.0
      %2847 = vst [vmem:[#allocation3 + $0x4b8] sm:$0xff] 0.0
      %2848 = vst [vmem:[#allocation3 + $0x4c0] sm:$0xff] 0.0
      %2849 = vst [vmem:[#allocation3 + $0x4c8] sm:$0xff] 0.0
      %2850 = vst [vmem:[#allocation3 + $0x4d0] sm:$0x1] 0.0
      %2851 = vst [vmem:[#allocation3 + $0x4d8] sm:$0xff] 0.0
      %2852 = vst [vmem:[#allocation3 + $0x4e0] sm:$0xff] 0.0
      %2853 = vst [vmem:[#allocation3 + $0x4e8] sm:$0xff] 0.0
      %2854 = vst [vmem:[#allocation3 + $0x4f0] sm:$0xff] 0.0
      %2855 = vst [vmem:[#allocation3 + $0x4f8] sm:$0x1] 0.0
      %2856 = vst [vmem:[#allocation3 + $0x500] sm:$0xff] 0.0
      %2857 = vst [vmem:[#allocation3 + $0x508] sm:$0xff] 0.0
      %2858 = vst [vmem:[#allocation3 + $0x510] sm:$0xff] 0.0
      %2859 = vst [vmem:[#allocation3 + $0x518] sm:$0xff] 0.0
      %2860 = vst [vmem:[#allocation3 + $0x520] sm:$0x1] 0.0
      %s2861 = scalar_lea.vmem [#allocation3], 640
      %2862 = vst [vmem:[%s2861 + $0x10] sm:$0xff] %v2664
      %2863 = vst [vmem:[%s2861 + $0x18] sm:$0xff] %v2665
      %2864 = vst [vmem:[%s2861 + $0x38] sm:$0xff] %v2666
      %2865 = vst [vmem:[%s2861 + $0x40] sm:$0xff] %v2667
      %2866 = vst [vmem:[%s2861 + $0x60] sm:$0xff] %v2668
      %2867 = vst [vmem:[%s2861 + $0x68] sm:$0xff] %v2669
      %2868 = vst [vmem:[%s2861 + $0x88] sm:$0xff] %v2670
      %2869 = vst [vmem:[%s2861 + $0x90] sm:$0xff] %v2671
      %2870 = vst [vmem:[%s2861 + $0xb0] sm:$0xff] %v2672
      %2871 = vst [vmem:[%s2861 + $0xb8] sm:$0xff] %v2673
      %2872 = vst [vmem:[%s2861 + $0xd8] sm:$0xff] %v2674
      %2873 = vst [vmem:[%s2861 + $0xe0] sm:$0xff] %v2675
      %2874 = vst [vmem:[%s2861 + $0x100] sm:$0xff] %v2676
      %2875 = vst [vmem:[%s2861 + $0x108] sm:$0xff] %v2677
      %2876 = vst [vmem:[%s2861 + $0x128] sm:$0xff] %v2678
      %2877 = vst [vmem:[%s2861 + $0x130] sm:$0xff] %v2679
      %2878 = vst [vmem:[%s2861 + $0x150] sm:$0xff] %v2680
      %2879 = vst [vmem:[%s2861 + $0x158] sm:$0xff] %v2681
      %2880 = vst [vmem:[%s2861 + $0x178] sm:$0xff] %v2682
      %2881 = vst [vmem:[%s2861 + $0x180] sm:$0xff] %v2683
      %2882 = vst [vmem:[%s2861 + $0x1a0] sm:$0xff] %v2684
      %2883 = vst [vmem:[%s2861 + $0x1a8] sm:$0xff] %v2685
      %2884 = vst [vmem:[%s2861 + $0x1c8] sm:$0xff] %v2686
      %2885 = vst [vmem:[%s2861 + $0x1d0] sm:$0xff] %v2687
      %2886 = vst [vmem:[%s2861 + $0x1f0] sm:$0xff] %v2688
      %2887 = vst [vmem:[%s2861 + $0x1f8] sm:$0xff] %v2689
      %2888 = vst [vmem:[%s2861 + $0x218] sm:$0xff] %v2690
      %2889 = vst [vmem:[%s2861 + $0x220] sm:$0xff] %v2691
      %2890 = vst [vmem:[%s2861 + $0x240] sm:$0xff] %v2692
      %2891 = vst [vmem:[%s2861 + $0x248] sm:$0xff] %v2693
      %2892 = vst [vmem:[%s2861 + $0x268] sm:$0xff] %v2694
      %2893 = vst [vmem:[%s2861 + $0x270] sm:$0xff] %v2695
      %s2894 = scalar_lea.vmem [#allocation3], 600
      %v2895 = vld [vmem:[%s2894 + $0xf] sm:$0xff]
      %v2896 = vld [vmem:[%s2894 + $0x17] sm:$0xff]
      %v2897 = vld [vmem:[%s2894 + $0x37] sm:$0xff]
      %v2898 = vld [vmem:[%s2894 + $0x3f] sm:$0xff]
      %v2899 = vld [vmem:[%s2894 + $0x5f] sm:$0xff]
      %v2900 = vld [vmem:[%s2894 + $0x67] sm:$0xff]
      %v2901 = vld [vmem:[%s2894 + $0x87] sm:$0xff]
      %v2902 = vld [vmem:[%s2894 + $0x8f] sm:$0xff]
      %v2903 = vld [vmem:[%s2894 + $0xaf] sm:$0xff]
      %v2904 = vld [vmem:[%s2894 + $0xb7] sm:$0xff]
      %v2905 = vld [vmem:[%s2894 + $0xd7] sm:$0xff]
      %v2906 = vld [vmem:[%s2894 + $0xdf] sm:$0xff]
      %v2907 = vld [vmem:[%s2894 + $0xff] sm:$0xff]
      %v2908 = vld [vmem:[%s2894 + $0x107] sm:$0xff]
      %v2909 = vld [vmem:[%s2894 + $0x127] sm:$0xff]
      %v2910 = vld [vmem:[%s2894 + $0x12f] sm:$0xff]
      %v2911 = vld [vmem:[%s2894 + $0x14f] sm:$0xff]
      %v2912 = vld [vmem:[%s2894 + $0x157] sm:$0xff]
      %v2913 = vld [vmem:[%s2894 + $0x177] sm:$0xff]
      %v2914 = vld [vmem:[%s2894 + $0x17f] sm:$0xff]
      %v2915 = vld [vmem:[%s2894 + $0x19f] sm:$0xff]
      %v2916 = vld [vmem:[%s2894 + $0x1a7] sm:$0xff]
      %v2917 = vld [vmem:[%s2894 + $0x1c7] sm:$0xff]
      %v2918 = vld [vmem:[%s2894 + $0x1cf] sm:$0xff]
      %v2919 = vld [vmem:[%s2894 + $0x1ef] sm:$0xff]
      %v2920 = vld [vmem:[%s2894 + $0x1f7] sm:$0xff]
      %v2921 = vld [vmem:[%s2894 + $0x217] sm:$0xff]
      %v2922 = vld [vmem:[%s2894 + $0x21f] sm:$0xff]
      %v2923 = vld [vmem:[%s2894 + $0x23f] sm:$0xff]
      %v2924 = vld [vmem:[%s2894 + $0x247] sm:$0xff]
      %v2925 = vld [vmem:[%s2894 + $0x267] sm:$0xff]
      %v2926 = vld [vmem:[%s2894 + $0x26f] sm:$0xff]
      %v2927 = vpack.c.bf16 %v2896, %v2895
      %v2928 = vpack.c.bf16 %v2898, %v2897
      %v2929 = vpack.c.bf16 %v2900, %v2899
      %v2930 = vpack.c.bf16 %v2902, %v2901
      %v2931 = vpack.c.bf16 %v2904, %v2903
      %v2932 = vpack.c.bf16 %v2906, %v2905
      %v2933 = vpack.c.bf16 %v2908, %v2907
      %v2934 = vpack.c.bf16 %v2910, %v2909
      %v2935 = vpack.c.bf16 %v2912, %v2911
      %v2936 = vpack.c.bf16 %v2914, %v2913
      %v2937 = vpack.c.bf16 %v2916, %v2915
      %v2938 = vpack.c.bf16 %v2918, %v2917
      %v2939 = vpack.c.bf16 %v2920, %v2919
      %v2940 = vpack.c.bf16 %v2922, %v2921
      %v2941 = vpack.c.bf16 %v2924, %v2923
      %v2942 = vpack.c.bf16 %v2926, %v2925
      %v2943 = vld [vmem:[%s4] sm:$0xf]
      %v2944 = vld [vmem:[%s4 + $0x4] sm:$0xf]
      %v2945 = vld [vmem:[%s4 + $0x8] sm:$0xf]
      %v2946 = vld [vmem:[%s4 + $0xc] sm:$0xf]
      %v2947 = vld [vmem:[%s4 + $0x10] sm:$0xf]
      %v2948 = vld [vmem:[%s4 + $0x14] sm:$0xf]
      %v2949 = vld [vmem:[%s4 + $0x18] sm:$0xf]
      %v2950 = vld [vmem:[%s4 + $0x1c] sm:$0xf]
      %v2951 = vld [vmem:[%s4 + $0x20] sm:$0xf]
      %v2952 = vld [vmem:[%s4 + $0x24] sm:$0xf]
      %v2953 = vld [vmem:[%s4 + $0x28] sm:$0xf]
      %v2954 = vld [vmem:[%s4 + $0x2c] sm:$0xf]
      %v2955 = vld [vmem:[%s4 + $0x30] sm:$0xf]
      %v2956 = vld [vmem:[%s4 + $0x34] sm:$0xf]
      %v2957 = vld [vmem:[%s4 + $0x38] sm:$0xf]
      %v2958 = vld [vmem:[%s4 + $0x3c] sm:$0xf]
      %v2959 = vld [vmem:[%s2894 + $0x10] sm:$0xff]
      %v2960 = vld [vmem:[%s2894 + $0x18] sm:$0xff]
      %v2961 = vld [vmem:[%s2894 + $0x38] sm:$0xff]
      %v2962 = vld [vmem:[%s2894 + $0x40] sm:$0xff]
      %v2963 = vld [vmem:[%s2894 + $0x60] sm:$0xff]
      %v2964 = vld [vmem:[%s2894 + $0x68] sm:$0xff]
      %v2965 = vld [vmem:[%s2894 + $0x88] sm:$0xff]
      %v2966 = vld [vmem:[%s2894 + $0x90] sm:$0xff]
      %v2967 = vld [vmem:[%s2894 + $0xb0] sm:$0xff]
      %v2968 = vld [vmem:[%s2894 + $0xb8] sm:$0xff]
      %v2969 = vld [vmem:[%s2894 + $0xd8] sm:$0xff]
      %v2970 = vld [vmem:[%s2894 + $0xe0] sm:$0xff]
      %v2971 = vld [vmem:[%s2894 + $0x100] sm:$0xff]
      %v2972 = vld [vmem:[%s2894 + $0x108] sm:$0xff]
      %v2973 = vld [vmem:[%s2894 + $0x128] sm:$0xff]
      %v2974 = vld [vmem:[%s2894 + $0x130] sm:$0xff]
      %v2975 = vld [vmem:[%s2894 + $0x150] sm:$0xff]
      %v2976 = vld [vmem:[%s2894 + $0x158] sm:$0xff]
      %v2977 = vld [vmem:[%s2894 + $0x178] sm:$0xff]
      %v2978 = vld [vmem:[%s2894 + $0x180] sm:$0xff]
      %v2979 = vld [vmem:[%s2894 + $0x1a0] sm:$0xff]
      %v2980 = vld [vmem:[%s2894 + $0x1a8] sm:$0xff]
      %v2981 = vld [vmem:[%s2894 + $0x1c8] sm:$0xff]
      %v2982 = vld [vmem:[%s2894 + $0x1d0] sm:$0xff]
      %v2983 = vld [vmem:[%s2894 + $0x1f0] sm:$0xff]
      %v2984 = vld [vmem:[%s2894 + $0x1f8] sm:$0xff]
      %v2985 = vld [vmem:[%s2894 + $0x218] sm:$0xff]
      %v2986 = vld [vmem:[%s2894 + $0x220] sm:$0xff]
      %v2987 = vld [vmem:[%s2894 + $0x240] sm:$0xff]
      %v2988 = vld [vmem:[%s2894 + $0x248] sm:$0xff]
      %v2989 = vld [vmem:[%s2894 + $0x268] sm:$0xff]
      %v2990 = vld [vmem:[%s2894 + $0x270] sm:$0xff]
      %v2991 = vpack.c.bf16 %v2960, %v2959
      %v2992 = vpack.c.bf16 %v2962, %v2961
      %v2993 = vpack.c.bf16 %v2964, %v2963
      %v2994 = vpack.c.bf16 %v2966, %v2965
      %v2995 = vpack.c.bf16 %v2968, %v2967
      %v2996 = vpack.c.bf16 %v2970, %v2969
      %v2997 = vpack.c.bf16 %v2972, %v2971
      %v2998 = vpack.c.bf16 %v2974, %v2973
      %v2999 = vpack.c.bf16 %v2976, %v2975
      %v3000 = vpack.c.bf16 %v2978, %v2977
      %v3001 = vpack.c.bf16 %v2980, %v2979
      %v3002 = vpack.c.bf16 %v2982, %v2981
      %v3003 = vpack.c.bf16 %v2984, %v2983
      %v3004 = vpack.c.bf16 %v2986, %v2985
      %v3005 = vpack.c.bf16 %v2988, %v2987
      %v3006 = vpack.c.bf16 %v2990, %v2989
      %s3007 = scalar_lea.vmem %s4, 64
      %v3008 = vld [vmem:[%s3007] sm:$0xf]
      %v3009 = vld [vmem:[%s3007 + $0x4] sm:$0xf]
      %v3010 = vld [vmem:[%s3007 + $0x8] sm:$0xf]
      %v3011 = vld [vmem:[%s3007 + $0xc] sm:$0xf]
      %v3012 = vld [vmem:[%s3007 + $0x10] sm:$0xf]
      %v3013 = vld [vmem:[%s3007 + $0x14] sm:$0xf]
      %v3014 = vld [vmem:[%s3007 + $0x18] sm:$0xf]
      %v3015 = vld [vmem:[%s3007 + $0x1c] sm:$0xf]
      %v3016 = vld [vmem:[%s3007 + $0x20] sm:$0xf]
      %v3017 = vld [vmem:[%s3007 + $0x24] sm:$0xf]
      %v3018 = vld [vmem:[%s3007 + $0x28] sm:$0xf]
      %v3019 = vld [vmem:[%s3007 + $0x2c] sm:$0xf]
      %v3020 = vld [vmem:[%s3007 + $0x30] sm:$0xf]
      %v3021 = vld [vmem:[%s3007 + $0x34] sm:$0xf]
      %v3022 = vld [vmem:[%s3007 + $0x38] sm:$0xf]
      %v3023 = vld [vmem:[%s3007 + $0x3c] sm:$0xf]
      %v3040 = vunpack.c.l.b16 %v3008
      %v3041 = vunpack.c.l.b16 %v3009
      %v3042 = vunpack.c.l.b16 %v3010
      %v3043 = vunpack.c.l.b16 %v3011
      %v3044 = vunpack.c.l.b16 %v3012
      %v3045 = vunpack.c.l.b16 %v3013
      %v3046 = vunpack.c.l.b16 %v3014
      %v3047 = vunpack.c.l.b16 %v3015
      %v3048 = vunpack.c.l.b16 %v3016
      %v3049 = vunpack.c.l.b16 %v3017
      %v3050 = vunpack.c.l.b16 %v3018
      %v3051 = vunpack.c.l.b16 %v3019
      %v3052 = vunpack.c.l.b16 %v3020
      %v3053 = vunpack.c.l.b16 %v3021
      %v3054 = vunpack.c.l.b16 %v3022
      %v3055 = vunpack.c.l.b16 %v3023
      %v3056 = vpack.c.b16 %v3041, %v3040
      %v3057 = vpack.c.b16 %v3043, %v3042
      %v3058 = vpack.c.b16 %v3045, %v3044
      %v3059 = vpack.c.b16 %v3047, %v3046
      %v3060 = vpack.c.b16 %v3049, %v3048
      %v3061 = vpack.c.b16 %v3051, %v3050
      %v3062 = vpack.c.b16 %v3053, %v3052
      %v3063 = vpack.c.b16 %v3055, %v3054
      %3072 = vmatpush.bf16.msra.mxu0 %v3063
      %3073 = vmatpush.bf16.msra.mxu0 %v3062
      %3074 = vmatpush.bf16.msra.mxu0 %v3061
      %3075 = vmatpush.bf16.msra.mxu0 %v3060
      %3076 = vmatpush.bf16.msra.mxu0 %v3059
      %3077 = vmatpush.bf16.msra.mxu0 %v3058
      %3078 = vmatpush.bf16.msra.mxu0 %v3057
      %3079 = vmatpush.bf16.msra.mxu0 %v3056
      %3080 = vmatmul.bf16.gmra.mxu0 %v2991
      %v3081 = vpop.f32.mrf.mxu0
      %v3082 = vadd.f32 0.0, %v3081
      %v3083 = vpop.f32.mrf.mxu0
      %v3084 = vadd.f32 0.0, %v3083
      %3085 = vmatmul.bf16.gmra.mxu0 %v2992
      %v3086 = vpop.f32.mrf.mxu0
      %v3087 = vadd.f32 0.0, %v3086
      %v3088 = vpop.f32.mrf.mxu0
      %v3089 = vadd.f32 0.0, %v3088
      %3090 = vmatmul.bf16.gmra.mxu0 %v2993
      %v3091 = vpop.f32.mrf.mxu0
      %v3092 = vadd.f32 0.0, %v3091
      %v3093 = vpop.f32.mrf.mxu0
      %v3094 = vadd.f32 0.0, %v3093
      %3095 = vmatmul.bf16.gmra.mxu0 %v2994
      %v3096 = vpop.f32.mrf.mxu0
      %v3097 = vadd.f32 0.0, %v3096
      %v3098 = vpop.f32.mrf.mxu0
      %v3099 = vadd.f32 0.0, %v3098
      %3100 = vmatmul.bf16.gmra.mxu0 %v2995
      %v3101 = vpop.f32.mrf.mxu0
      %v3102 = vadd.f32 0.0, %v3101
      %v3103 = vpop.f32.mrf.mxu0
      %v3104 = vadd.f32 0.0, %v3103
      %3105 = vmatmul.bf16.gmra.mxu0 %v2996
      %v3106 = vpop.f32.mrf.mxu0
      %v3107 = vadd.f32 0.0, %v3106
      %v3108 = vpop.f32.mrf.mxu0
      %v3109 = vadd.f32 0.0, %v3108
      %3110 = vmatmul.bf16.gmra.mxu0 %v2997
      %v3111 = vpop.f32.mrf.mxu0
      %v3112 = vadd.f32 0.0, %v3111
      %v3113 = vpop.f32.mrf.mxu0
      %v3114 = vadd.f32 0.0, %v3113
      %3115 = vmatmul.bf16.gmra.mxu0 %v2998
      %v3116 = vpop.f32.mrf.mxu0
      %v3117 = vadd.f32 0.0, %v3116
      %v3118 = vpop.f32.mrf.mxu0
      %v3119 = vadd.f32 0.0, %v3118
      %3120 = vmatmul.bf16.gmra.mxu0 %v2999
      %v3121 = vpop.f32.mrf.mxu0
      %v3122 = vadd.f32 0.0, %v3121
      %v3123 = vpop.f32.mrf.mxu0
      %v3124 = vadd.f32 0.0, %v3123
      %3125 = vmatmul.bf16.gmra.mxu0 %v3000
      %v3126 = vpop.f32.mrf.mxu0
      %v3127 = vadd.f32 0.0, %v3126
      %v3128 = vpop.f32.mrf.mxu0
      %v3129 = vadd.f32 0.0, %v3128
      %3130 = vmatmul.bf16.gmra.mxu0 %v3001
      %v3131 = vpop.f32.mrf.mxu0
      %v3132 = vadd.f32 0.0, %v3131
      %v3133 = vpop.f32.mrf.mxu0
      %v3134 = vadd.f32 0.0, %v3133
      %3135 = vmatmul.bf16.gmra.mxu0 %v3002
      %v3136 = vpop.f32.mrf.mxu0
      %v3137 = vadd.f32 0.0, %v3136
      %v3138 = vpop.f32.mrf.mxu0
      %v3139 = vadd.f32 0.0, %v3138
      %3140 = vmatmul.bf16.gmra.mxu0 %v3003
      %v3141 = vpop.f32.mrf.mxu0
      %v3142 = vadd.f32 0.0, %v3141
      %v3143 = vpop.f32.mrf.mxu0
      %v3144 = vadd.f32 0.0, %v3143
      %3145 = vmatmul.bf16.gmra.mxu0 %v3004
      %v3146 = vpop.f32.mrf.mxu0
      %v3147 = vadd.f32 0.0, %v3146
      %v3148 = vpop.f32.mrf.mxu0
      %v3149 = vadd.f32 0.0, %v3148
      %3150 = vmatmul.bf16.gmra.mxu0 %v3005
      %v3151 = vpop.f32.mrf.mxu0
      %v3152 = vadd.f32 0.0, %v3151
      %v3153 = vpop.f32.mrf.mxu0
      %v3154 = vadd.f32 0.0, %v3153
      %3155 = vmatmul.bf16.gmra.mxu0 %v3006
      %v3156 = vpop.f32.mrf.mxu0
      %v3157 = vadd.f32 0.0, %v3156
      %v3158 = vpop.f32.mrf.mxu0
      %v3159 = vadd.f32 0.0, %v3158
      %3160 = vdwg.mxu0
      %v3177 = vunpack.c.l.b16 %v2943
      %v3178 = vunpack.c.l.b16 %v2944
      %v3179 = vunpack.c.l.b16 %v2945
      %v3180 = vunpack.c.l.b16 %v2946
      %v3181 = vunpack.c.l.b16 %v2947
      %v3182 = vunpack.c.l.b16 %v2948
      %v3183 = vunpack.c.l.b16 %v2949
      %v3184 = vunpack.c.l.b16 %v2950
      %v3185 = vunpack.c.l.b16 %v2951
      %v3186 = vunpack.c.l.b16 %v2952
      %v3187 = vunpack.c.l.b16 %v2953
      %v3188 = vunpack.c.l.b16 %v2954
      %v3189 = vunpack.c.l.b16 %v2955
      %v3190 = vunpack.c.l.b16 %v2956
      %v3191 = vunpack.c.l.b16 %v2957
      %v3192 = vunpack.c.l.b16 %v2958
      %v3193 = vpack.c.b16 %v3178, %v3177
      %v3194 = vpack.c.b16 %v3180, %v3179
      %v3195 = vpack.c.b16 %v3182, %v3181
      %v3196 = vpack.c.b16 %v3184, %v3183
      %v3197 = vpack.c.b16 %v3186, %v3185
      %v3198 = vpack.c.b16 %v3188, %v3187
      %v3199 = vpack.c.b16 %v3190, %v3189
      %v3200 = vpack.c.b16 %v3192, %v3191
      %3209 = vmatpush.bf16.msra.mxu0 %v3200
      %3210 = vmatpush.bf16.msra.mxu0 %v3199
      %3211 = vmatpush.bf16.msra.mxu0 %v3198
      %3212 = vmatpush.bf16.msra.mxu0 %v3197
      %3213 = vmatpush.bf16.msra.mxu0 %v3196
      %3214 = vmatpush.bf16.msra.mxu0 %v3195
      %3215 = vmatpush.bf16.msra.mxu0 %v3194
      %3216 = vmatpush.bf16.msra.mxu0 %v3193
      %3217 = vmatmul.bf16.gmra.mxu0 %v2927
      %v3218 = vpop.f32.mrf.mxu0
      %v3219 = vadd.f32 %v3082, %v3218
      %v3220 = vpop.f32.mrf.mxu0
      %v3221 = vadd.f32 %v3084, %v3220
      %3222 = vmatmul.bf16.gmra.mxu0 %v2928
      %v3223 = vpop.f32.mrf.mxu0
      %v3224 = vadd.f32 %v3087, %v3223
      %v3225 = vpop.f32.mrf.mxu0
      %v3226 = vadd.f32 %v3089, %v3225
      %3227 = vmatmul.bf16.gmra.mxu0 %v2929
      %v3228 = vpop.f32.mrf.mxu0
      %v3229 = vadd.f32 %v3092, %v3228
      %v3230 = vpop.f32.mrf.mxu0
      %v3231 = vadd.f32 %v3094, %v3230
      %3232 = vmatmul.bf16.gmra.mxu0 %v2930
      %v3233 = vpop.f32.mrf.mxu0
      %v3234 = vadd.f32 %v3097, %v3233
      %v3235 = vpop.f32.mrf.mxu0
      %v3236 = vadd.f32 %v3099, %v3235
      %3237 = vmatmul.bf16.gmra.mxu0 %v2931
      %v3238 = vpop.f32.mrf.mxu0
      %v3239 = vadd.f32 %v3102, %v3238
      %v3240 = vpop.f32.mrf.mxu0
      %v3241 = vadd.f32 %v3104, %v3240
      %3242 = vmatmul.bf16.gmra.mxu0 %v2932
      %v3243 = vpop.f32.mrf.mxu0
      %v3244 = vadd.f32 %v3107, %v3243
      %v3245 = vpop.f32.mrf.mxu0
      %v3246 = vadd.f32 %v3109, %v3245
      %3247 = vmatmul.bf16.gmra.mxu0 %v2933
      %v3248 = vpop.f32.mrf.mxu0
      %v3249 = vadd.f32 %v3112, %v3248
      %v3250 = vpop.f32.mrf.mxu0
      %v3251 = vadd.f32 %v3114, %v3250
      %3252 = vmatmul.bf16.gmra.mxu0 %v2934
      %v3253 = vpop.f32.mrf.mxu0
      %v3254 = vadd.f32 %v3117, %v3253
      %v3255 = vpop.f32.mrf.mxu0
      %v3256 = vadd.f32 %v3119, %v3255
      %3257 = vmatmul.bf16.gmra.mxu0 %v2935
      %v3258 = vpop.f32.mrf.mxu0
      %v3259 = vadd.f32 %v3122, %v3258
      %v3260 = vpop.f32.mrf.mxu0
      %v3261 = vadd.f32 %v3124, %v3260
      %3262 = vmatmul.bf16.gmra.mxu0 %v2936
      %v3263 = vpop.f32.mrf.mxu0
      %v3264 = vadd.f32 %v3127, %v3263
      %v3265 = vpop.f32.mrf.mxu0
      %v3266 = vadd.f32 %v3129, %v3265
      %3267 = vmatmul.bf16.gmra.mxu0 %v2937
      %v3268 = vpop.f32.mrf.mxu0
      %v3269 = vadd.f32 %v3132, %v3268
      %v3270 = vpop.f32.mrf.mxu0
      %v3271 = vadd.f32 %v3134, %v3270
      %3272 = vmatmul.bf16.gmra.mxu0 %v2938
      %v3273 = vpop.f32.mrf.mxu0
      %v3274 = vadd.f32 %v3137, %v3273
      %v3275 = vpop.f32.mrf.mxu0
      %v3276 = vadd.f32 %v3139, %v3275
      %3277 = vmatmul.bf16.gmra.mxu0 %v2939
      %v3278 = vpop.f32.mrf.mxu0
      %v3279 = vadd.f32 %v3142, %v3278
      %v3280 = vpop.f32.mrf.mxu0
      %v3281 = vadd.f32 %v3144, %v3280
      %3282 = vmatmul.bf16.gmra.mxu0 %v2940
      %v3283 = vpop.f32.mrf.mxu0
      %v3284 = vadd.f32 %v3147, %v3283
      %v3285 = vpop.f32.mrf.mxu0
      %v3286 = vadd.f32 %v3149, %v3285
      %3287 = vmatmul.bf16.gmra.mxu0 %v2941
      %v3288 = vpop.f32.mrf.mxu0
      %v3289 = vadd.f32 %v3152, %v3288
      %v3290 = vpop.f32.mrf.mxu0
      %v3291 = vadd.f32 %v3154, %v3290
      %3292 = vmatmul.bf16.gmra.mxu0 %v2942
      %v3293 = vpop.f32.mrf.mxu0
      %v3294 = vadd.f32 %v3157, %v3293
      %v3295 = vpop.f32.mrf.mxu0
      %v3296 = vadd.f32 %v3159, %v3295
      %3297 = vdwg.mxu0
      %v3298 = vld [vmem:[%s2894 + $0x11] sm:$0xff]
      %v3299 = vld [vmem:[%s2894 + $0x19] sm:$0xff]
      %v3300 = vld [vmem:[%s2894 + $0x39] sm:$0xff]
      %v3301 = vld [vmem:[%s2894 + $0x41] sm:$0xff]
      %v3302 = vld [vmem:[%s2894 + $0x61] sm:$0xff]
      %v3303 = vld [vmem:[%s2894 + $0x69] sm:$0xff]
      %v3304 = vld [vmem:[%s2894 + $0x89] sm:$0xff]
      %v3305 = vld [vmem:[%s2894 + $0x91] sm:$0xff]
      %v3306 = vld [vmem:[%s2894 + $0xb1] sm:$0xff]
      %v3307 = vld [vmem:[%s2894 + $0xb9] sm:$0xff]
      %v3308 = vld [vmem:[%s2894 + $0xd9] sm:$0xff]
      %v3309 = vld [vmem:[%s2894 + $0xe1] sm:$0xff]
      %v3310 = vld [vmem:[%s2894 + $0x101] sm:$0xff]
      %v3311 = vld [vmem:[%s2894 + $0x109] sm:$0xff]
      %v3312 = vld [vmem:[%s2894 + $0x129] sm:$0xff]
      %v3313 = vld [vmem:[%s2894 + $0x131] sm:$0xff]
      %v3314 = vld [vmem:[%s2894 + $0x151] sm:$0xff]
      %v3315 = vld [vmem:[%s2894 + $0x159] sm:$0xff]
      %v3316 = vld [vmem:[%s2894 + $0x179] sm:$0xff]
      %v3317 = vld [vmem:[%s2894 + $0x181] sm:$0xff]
      %v3318 = vld [vmem:[%s2894 + $0x1a1] sm:$0xff]
      %v3319 = vld [vmem:[%s2894 + $0x1a9] sm:$0xff]
      %v3320 = vld [vmem:[%s2894 + $0x1c9] sm:$0xff]
      %v3321 = vld [vmem:[%s2894 + $0x1d1] sm:$0xff]
      %v3322 = vld [vmem:[%s2894 + $0x1f1] sm:$0xff]
      %v3323 = vld [vmem:[%s2894 + $0x1f9] sm:$0xff]
      %v3324 = vld [vmem:[%s2894 + $0x219] sm:$0xff]
      %v3325 = vld [vmem:[%s2894 + $0x221] sm:$0xff]
      %v3326 = vld [vmem:[%s2894 + $0x241] sm:$0xff]
      %v3327 = vld [vmem:[%s2894 + $0x249] sm:$0xff]
      %v3328 = vld [vmem:[%s2894 + $0x269] sm:$0xff]
      %v3329 = vld [vmem:[%s2894 + $0x271] sm:$0xff]
      %v3330 = vpack.c.bf16 %v3299, %v3298
      %v3331 = vpack.c.bf16 %v3301, %v3300
      %v3332 = vpack.c.bf16 %v3303, %v3302
      %v3333 = vpack.c.bf16 %v3305, %v3304
      %v3334 = vpack.c.bf16 %v3307, %v3306
      %v3335 = vpack.c.bf16 %v3309, %v3308
      %v3336 = vpack.c.bf16 %v3311, %v3310
      %v3337 = vpack.c.bf16 %v3313, %v3312
      %v3338 = vpack.c.bf16 %v3315, %v3314
      %v3339 = vpack.c.bf16 %v3317, %v3316
      %v3340 = vpack.c.bf16 %v3319, %v3318
      %v3341 = vpack.c.bf16 %v3321, %v3320
      %v3342 = vpack.c.bf16 %v3323, %v3322
      %v3343 = vpack.c.bf16 %v3325, %v3324
      %v3344 = vpack.c.bf16 %v3327, %v3326
      %v3345 = vpack.c.bf16 %v3329, %v3328
      %s3346 = scalar_lea.vmem %s4, 128
      %v3347 = vld [vmem:[%s3346] sm:$0xf]
      %v3348 = vld [vmem:[%s3346 + $0x4] sm:$0xf]
      %v3349 = vld [vmem:[%s3346 + $0x8] sm:$0xf]
      %v3350 = vld [vmem:[%s3346 + $0xc] sm:$0xf]
      %v3351 = vld [vmem:[%s3346 + $0x10] sm:$0xf]
      %v3352 = vld [vmem:[%s3346 + $0x14] sm:$0xf]
      %v3353 = vld [vmem:[%s3346 + $0x18] sm:$0xf]
      %v3354 = vld [vmem:[%s3346 + $0x1c] sm:$0xf]
      %v3355 = vld [vmem:[%s3346 + $0x20] sm:$0xf]
      %v3356 = vld [vmem:[%s3346 + $0x24] sm:$0xf]
      %v3357 = vld [vmem:[%s3346 + $0x28] sm:$0xf]
      %v3358 = vld [vmem:[%s3346 + $0x2c] sm:$0xf]
      %v3359 = vld [vmem:[%s3346 + $0x30] sm:$0xf]
      %v3360 = vld [vmem:[%s3346 + $0x34] sm:$0xf]
      %v3361 = vld [vmem:[%s3346 + $0x38] sm:$0xf]
      %v3362 = vld [vmem:[%s3346 + $0x3c] sm:$0xf]
      %v3379 = vunpack.c.l.b16 %v3347
      %v3380 = vunpack.c.l.b16 %v3348
      %v3381 = vunpack.c.l.b16 %v3349
      %v3382 = vunpack.c.l.b16 %v3350
      %v3383 = vunpack.c.l.b16 %v3351
      %v3384 = vunpack.c.l.b16 %v3352
      %v3385 = vunpack.c.l.b16 %v3353
      %v3386 = vunpack.c.l.b16 %v3354
      %v3387 = vunpack.c.l.b16 %v3355
      %v3388 = vunpack.c.l.b16 %v3356
      %v3389 = vunpack.c.l.b16 %v3357
      %v3390 = vunpack.c.l.b16 %v3358
      %v3391 = vunpack.c.l.b16 %v3359
      %v3392 = vunpack.c.l.b16 %v3360
      %v3393 = vunpack.c.l.b16 %v3361
      %v3394 = vunpack.c.l.b16 %v3362
      %v3395 = vpack.c.b16 %v3380, %v3379
      %v3396 = vpack.c.b16 %v3382, %v3381
      %v3397 = vpack.c.b16 %v3384, %v3383
      %v3398 = vpack.c.b16 %v3386, %v3385
      %v3399 = vpack.c.b16 %v3388, %v3387
      %v3400 = vpack.c.b16 %v3390, %v3389
      %v3401 = vpack.c.b16 %v3392, %v3391
      %v3402 = vpack.c.b16 %v3394, %v3393
      %3411 = vmatpush.bf16.msra.mxu0 %v3402
      %3412 = vmatpush.bf16.msra.mxu0 %v3401
      %3413 = vmatpush.bf16.msra.mxu0 %v3400
      %3414 = vmatpush.bf16.msra.mxu0 %v3399
      %3415 = vmatpush.bf16.msra.mxu0 %v3398
      %3416 = vmatpush.bf16.msra.mxu0 %v3397
      %3417 = vmatpush.bf16.msra.mxu0 %v3396
      %3418 = vmatpush.bf16.msra.mxu0 %v3395
      %3419 = vmatmul.bf16.gmra.mxu0 %v3330
      %v3420 = vpop.f32.mrf.mxu0
      %v3421 = vadd.f32 0.0, %v3420
      %v3422 = vpop.f32.mrf.mxu0
      %v3423 = vadd.f32 0.0, %v3422
      %3424 = vmatmul.bf16.gmra.mxu0 %v3331
      %v3425 = vpop.f32.mrf.mxu0
      %v3426 = vadd.f32 0.0, %v3425
      %v3427 = vpop.f32.mrf.mxu0
      %v3428 = vadd.f32 0.0, %v3427
      %3429 = vmatmul.bf16.gmra.mxu0 %v3332
      %v3430 = vpop.f32.mrf.mxu0
      %v3431 = vadd.f32 0.0, %v3430
      %v3432 = vpop.f32.mrf.mxu0
      %v3433 = vadd.f32 0.0, %v3432
      %3434 = vmatmul.bf16.gmra.mxu0 %v3333
      %v3435 = vpop.f32.mrf.mxu0
      %v3436 = vadd.f32 0.0, %v3435
      %v3437 = vpop.f32.mrf.mxu0
      %v3438 = vadd.f32 0.0, %v3437
      %3439 = vmatmul.bf16.gmra.mxu0 %v3334
      %v3440 = vpop.f32.mrf.mxu0
      %v3441 = vadd.f32 0.0, %v3440
      %v3442 = vpop.f32.mrf.mxu0
      %v3443 = vadd.f32 0.0, %v3442
      %3444 = vmatmul.bf16.gmra.mxu0 %v3335
      %v3445 = vpop.f32.mrf.mxu0
      %v3446 = vadd.f32 0.0, %v3445
      %v3447 = vpop.f32.mrf.mxu0
      %v3448 = vadd.f32 0.0, %v3447
      %3449 = vmatmul.bf16.gmra.mxu0 %v3336
      %v3450 = vpop.f32.mrf.mxu0
      %v3451 = vadd.f32 0.0, %v3450
      %v3452 = vpop.f32.mrf.mxu0
      %v3453 = vadd.f32 0.0, %v3452
      %3454 = vmatmul.bf16.gmra.mxu0 %v3337
      %v3455 = vpop.f32.mrf.mxu0
      %v3456 = vadd.f32 0.0, %v3455
      %v3457 = vpop.f32.mrf.mxu0
      %v3458 = vadd.f32 0.0, %v3457
      %3459 = vmatmul.bf16.gmra.mxu0 %v3338
      %v3460 = vpop.f32.mrf.mxu0
      %v3461 = vadd.f32 0.0, %v3460
      %v3462 = vpop.f32.mrf.mxu0
      %v3463 = vadd.f32 0.0, %v3462
      %3464 = vmatmul.bf16.gmra.mxu0 %v3339
      %v3465 = vpop.f32.mrf.mxu0
      %v3466 = vadd.f32 0.0, %v3465
      %v3467 = vpop.f32.mrf.mxu0
      %v3468 = vadd.f32 0.0, %v3467
      %3469 = vmatmul.bf16.gmra.mxu0 %v3340
      %v3470 = vpop.f32.mrf.mxu0
      %v3471 = vadd.f32 0.0, %v3470
      %v3472 = vpop.f32.mrf.mxu0
      %v3473 = vadd.f32 0.0, %v3472
      %3474 = vmatmul.bf16.gmra.mxu0 %v3341
      %v3475 = vpop.f32.mrf.mxu0
      %v3476 = vadd.f32 0.0, %v3475
      %v3477 = vpop.f32.mrf.mxu0
      %v3478 = vadd.f32 0.0, %v3477
      %3479 = vmatmul.bf16.gmra.mxu0 %v3342
      %v3480 = vpop.f32.mrf.mxu0
      %v3481 = vadd.f32 0.0, %v3480
      %v3482 = vpop.f32.mrf.mxu0
      %v3483 = vadd.f32 0.0, %v3482
      %3484 = vmatmul.bf16.gmra.mxu0 %v3343
      %v3485 = vpop.f32.mrf.mxu0
      %v3486 = vadd.f32 0.0, %v3485
      %v3487 = vpop.f32.mrf.mxu0
      %v3488 = vadd.f32 0.0, %v3487
      %3489 = vmatmul.bf16.gmra.mxu0 %v3344
      %v3490 = vpop.f32.mrf.mxu0
      %v3491 = vadd.f32 0.0, %v3490
      %v3492 = vpop.f32.mrf.mxu0
      %v3493 = vadd.f32 0.0, %v3492
      %3494 = vmatmul.bf16.gmra.mxu0 %v3345
      %v3495 = vpop.f32.mrf.mxu0
      %v3496 = vadd.f32 0.0, %v3495
      %v3497 = vpop.f32.mrf.mxu0
      %v3498 = vadd.f32 0.0, %v3497
      %3499 = vdwg.mxu0
      %v3500 = vadd.f32 %v3219, %v3421
      %v3501 = vadd.f32 %v3221, %v3423
      %v3502 = vadd.f32 %v3224, %v3426
      %v3503 = vadd.f32 %v3226, %v3428
      %v3504 = vadd.f32 %v3229, %v3431
      %v3505 = vadd.f32 %v3231, %v3433
      %v3506 = vadd.f32 %v3234, %v3436
      %v3507 = vadd.f32 %v3236, %v3438
      %v3508 = vadd.f32 %v3239, %v3441
      %v3509 = vadd.f32 %v3241, %v3443
      %v3510 = vadd.f32 %v3244, %v3446
      %v3511 = vadd.f32 %v3246, %v3448
      %v3512 = vadd.f32 %v3249, %v3451
      %v3513 = vadd.f32 %v3251, %v3453
      %v3514 = vadd.f32 %v3254, %v3456
      %v3515 = vadd.f32 %v3256, %v3458
      %v3516 = vadd.f32 %v3259, %v3461
      %v3517 = vadd.f32 %v3261, %v3463
      %v3518 = vadd.f32 %v3264, %v3466
      %v3519 = vadd.f32 %v3266, %v3468
      %v3520 = vadd.f32 %v3269, %v3471
      %v3521 = vadd.f32 %v3271, %v3473
      %v3522 = vadd.f32 %v3274, %v3476
      %v3523 = vadd.f32 %v3276, %v3478
      %v3524 = vadd.f32 %v3279, %v3481
      %v3525 = vadd.f32 %v3281, %v3483
      %v3526 = vadd.f32 %v3284, %v3486
      %v3527 = vadd.f32 %v3286, %v3488
      %v3528 = vadd.f32 %v3289, %v3491
      %v3529 = vadd.f32 %v3291, %v3493
      %v3530 = vadd.f32 %v3294, %v3496
      %v3531 = vadd.f32 %v3296, %v3498
      %v3532 = vld [vmem:[%s2861 + $0xf] sm:$0xff]
      %v3533 = vld [vmem:[%s2861 + $0x17] sm:$0xff]
      %v3534 = vld [vmem:[%s2861 + $0x37] sm:$0xff]
      %v3535 = vld [vmem:[%s2861 + $0x3f] sm:$0xff]
      %v3536 = vld [vmem:[%s2861 + $0x5f] sm:$0xff]
      %v3537 = vld [vmem:[%s2861 + $0x67] sm:$0xff]
      %v3538 = vld [vmem:[%s2861 + $0x87] sm:$0xff]
      %v3539 = vld [vmem:[%s2861 + $0x8f] sm:$0xff]
      %v3540 = vld [vmem:[%s2861 + $0xaf] sm:$0xff]
      %v3541 = vld [vmem:[%s2861 + $0xb7] sm:$0xff]
      %v3542 = vld [vmem:[%s2861 + $0xd7] sm:$0xff]
      %v3543 = vld [vmem:[%s2861 + $0xdf] sm:$0xff]
      %v3544 = vld [vmem:[%s2861 + $0xff] sm:$0xff]
      %v3545 = vld [vmem:[%s2861 + $0x107] sm:$0xff]
      %v3546 = vld [vmem:[%s2861 + $0x127] sm:$0xff]
      %v3547 = vld [vmem:[%s2861 + $0x12f] sm:$0xff]
      %v3548 = vld [vmem:[%s2861 + $0x14f] sm:$0xff]
      %v3549 = vld [vmem:[%s2861 + $0x157] sm:$0xff]
      %v3550 = vld [vmem:[%s2861 + $0x177] sm:$0xff]
      %v3551 = vld [vmem:[%s2861 + $0x17f] sm:$0xff]
      %v3552 = vld [vmem:[%s2861 + $0x19f] sm:$0xff]
      %v3553 = vld [vmem:[%s2861 + $0x1a7] sm:$0xff]
      %v3554 = vld [vmem:[%s2861 + $0x1c7] sm:$0xff]
      %v3555 = vld [vmem:[%s2861 + $0x1cf] sm:$0xff]
      %v3556 = vld [vmem:[%s2861 + $0x1ef] sm:$0xff]
      %v3557 = vld [vmem:[%s2861 + $0x1f7] sm:$0xff]
      %v3558 = vld [vmem:[%s2861 + $0x217] sm:$0xff]
      %v3559 = vld [vmem:[%s2861 + $0x21f] sm:$0xff]
      %v3560 = vld [vmem:[%s2861 + $0x23f] sm:$0xff]
      %v3561 = vld [vmem:[%s2861 + $0x247] sm:$0xff]
      %v3562 = vld [vmem:[%s2861 + $0x267] sm:$0xff]
      %v3563 = vld [vmem:[%s2861 + $0x26f] sm:$0xff]
      %v3564 = vpack.c.bf16 %v3533, %v3532
      %v3565 = vpack.c.bf16 %v3535, %v3534
      %v3566 = vpack.c.bf16 %v3537, %v3536
      %v3567 = vpack.c.bf16 %v3539, %v3538
      %v3568 = vpack.c.bf16 %v3541, %v3540
      %v3569 = vpack.c.bf16 %v3543, %v3542
      %v3570 = vpack.c.bf16 %v3545, %v3544
      %v3571 = vpack.c.bf16 %v3547, %v3546
      %v3572 = vpack.c.bf16 %v3549, %v3548
      %v3573 = vpack.c.bf16 %v3551, %v3550
      %v3574 = vpack.c.bf16 %v3553, %v3552
      %v3575 = vpack.c.bf16 %v3555, %v3554
      %v3576 = vpack.c.bf16 %v3557, %v3556
      %v3577 = vpack.c.bf16 %v3559, %v3558
      %v3578 = vpack.c.bf16 %v3561, %v3560
      %v3579 = vpack.c.bf16 %v3563, %v3562
      %s3580 = scalar_lea.vmem %s4, 192
      %v3581 = vld [vmem:[%s3580] sm:$0xf]
      %v3582 = vld [vmem:[%s3580 + $0x4] sm:$0xf]
      %v3583 = vld [vmem:[%s3580 + $0x8] sm:$0xf]
      %v3584 = vld [vmem:[%s3580 + $0xc] sm:$0xf]
      %v3585 = vld [vmem:[%s3580 + $0x10] sm:$0xf]
      %v3586 = vld [vmem:[%s3580 + $0x14] sm:$0xf]
      %v3587 = vld [vmem:[%s3580 + $0x18] sm:$0xf]
      %v3588 = vld [vmem:[%s3580 + $0x1c] sm:$0xf]
      %v3589 = vld [vmem:[%s3580 + $0x20] sm:$0xf]
      %v3590 = vld [vmem:[%s3580 + $0x24] sm:$0xf]
      %v3591 = vld [vmem:[%s3580 + $0x28] sm:$0xf]
      %v3592 = vld [vmem:[%s3580 + $0x2c] sm:$0xf]
      %v3593 = vld [vmem:[%s3580 + $0x30] sm:$0xf]
      %v3594 = vld [vmem:[%s3580 + $0x34] sm:$0xf]
      %v3595 = vld [vmem:[%s3580 + $0x38] sm:$0xf]
      %v3596 = vld [vmem:[%s3580 + $0x3c] sm:$0xf]
      %v3613 = vunpack.c.l.b16 %v3581
      %v3614 = vunpack.c.l.b16 %v3582
      %v3615 = vunpack.c.l.b16 %v3583
      %v3616 = vunpack.c.l.b16 %v3584
      %v3617 = vunpack.c.l.b16 %v3585
      %v3618 = vunpack.c.l.b16 %v3586
      %v3619 = vunpack.c.l.b16 %v3587
      %v3620 = vunpack.c.l.b16 %v3588
      %v3621 = vunpack.c.l.b16 %v3589
      %v3622 = vunpack.c.l.b16 %v3590
      %v3623 = vunpack.c.l.b16 %v3591
      %v3624 = vunpack.c.l.b16 %v3592
      %v3625 = vunpack.c.l.b16 %v3593
      %v3626 = vunpack.c.l.b16 %v3594
      %v3627 = vunpack.c.l.b16 %v3595
      %v3628 = vunpack.c.l.b16 %v3596
      %v3629 = vpack.c.b16 %v3614, %v3613
      %v3630 = vpack.c.b16 %v3616, %v3615
      %v3631 = vpack.c.b16 %v3618, %v3617
      %v3632 = vpack.c.b16 %v3620, %v3619
      %v3633 = vpack.c.b16 %v3622, %v3621
      %v3634 = vpack.c.b16 %v3624, %v3623
      %v3635 = vpack.c.b16 %v3626, %v3625
      %v3636 = vpack.c.b16 %v3628, %v3627
      %3645 = vmatpush.bf16.msra.mxu0 %v3636
      %3646 = vmatpush.bf16.msra.mxu0 %v3635
      %3647 = vmatpush.bf16.msra.mxu0 %v3634
      %3648 = vmatpush.bf16.msra.mxu0 %v3633
      %3649 = vmatpush.bf16.msra.mxu0 %v3632
      %3650 = vmatpush.bf16.msra.mxu0 %v3631
      %3651 = vmatpush.bf16.msra.mxu0 %v3630
      %3652 = vmatpush.bf16.msra.mxu0 %v3629
      %3653 = vmatmul.bf16.gmra.mxu0 %v3564
      %v3654 = vpop.f32.mrf.mxu0
      %v3655 = vadd.f32 0.0, %v3654
      %v3656 = vpop.f32.mrf.mxu0
      %v3657 = vadd.f32 0.0, %v3656
      %3658 = vmatmul.bf16.gmra.mxu0 %v3565
      %v3659 = vpop.f32.mrf.mxu0
      %v3660 = vadd.f32 0.0, %v3659
      %v3661 = vpop.f32.mrf.mxu0
      %v3662 = vadd.f32 0.0, %v3661
      %3663 = vmatmul.bf16.gmra.mxu0 %v3566
      %v3664 = vpop.f32.mrf.mxu0
      %v3665 = vadd.f32 0.0, %v3664
      %v3666 = vpop.f32.mrf.mxu0
      %v3667 = vadd.f32 0.0, %v3666
      %3668 = vmatmul.bf16.gmra.mxu0 %v3567
      %v3669 = vpop.f32.mrf.mxu0
      %v3670 = vadd.f32 0.0, %v3669
      %v3671 = vpop.f32.mrf.mxu0
      %v3672 = vadd.f32 0.0, %v3671
      %3673 = vmatmul.bf16.gmra.mxu0 %v3568
      %v3674 = vpop.f32.mrf.mxu0
      %v3675 = vadd.f32 0.0, %v3674
      %v3676 = vpop.f32.mrf.mxu0
      %v3677 = vadd.f32 0.0, %v3676
      %3678 = vmatmul.bf16.gmra.mxu0 %v3569
      %v3679 = vpop.f32.mrf.mxu0
      %v3680 = vadd.f32 0.0, %v3679
      %v3681 = vpop.f32.mrf.mxu0
      %v3682 = vadd.f32 0.0, %v3681
      %3683 = vmatmul.bf16.gmra.mxu0 %v3570
      %v3684 = vpop.f32.mrf.mxu0
      %v3685 = vadd.f32 0.0, %v3684
      %v3686 = vpop.f32.mrf.mxu0
      %v3687 = vadd.f32 0.0, %v3686
      %3688 = vmatmul.bf16.gmra.mxu0 %v3571
      %v3689 = vpop.f32.mrf.mxu0
      %v3690 = vadd.f32 0.0, %v3689
      %v3691 = vpop.f32.mrf.mxu0
      %v3692 = vadd.f32 0.0, %v3691
      %3693 = vmatmul.bf16.gmra.mxu0 %v3572
      %v3694 = vpop.f32.mrf.mxu0
      %v3695 = vadd.f32 0.0, %v3694
      %v3696 = vpop.f32.mrf.mxu0
      %v3697 = vadd.f32 0.0, %v3696
      %3698 = vmatmul.bf16.gmra.mxu0 %v3573
      %v3699 = vpop.f32.mrf.mxu0
      %v3700 = vadd.f32 0.0, %v3699
      %v3701 = vpop.f32.mrf.mxu0
      %v3702 = vadd.f32 0.0, %v3701
      %3703 = vmatmul.bf16.gmra.mxu0 %v3574
      %v3704 = vpop.f32.mrf.mxu0
      %v3705 = vadd.f32 0.0, %v3704
      %v3706 = vpop.f32.mrf.mxu0
      %v3707 = vadd.f32 0.0, %v3706
      %3708 = vmatmul.bf16.gmra.mxu0 %v3575
      %v3709 = vpop.f32.mrf.mxu0
      %v3710 = vadd.f32 0.0, %v3709
      %v3711 = vpop.f32.mrf.mxu0
      %v3712 = vadd.f32 0.0, %v3711
      %3713 = vmatmul.bf16.gmra.mxu0 %v3576
      %v3714 = vpop.f32.mrf.mxu0
      %v3715 = vadd.f32 0.0, %v3714
      %v3716 = vpop.f32.mrf.mxu0
      %v3717 = vadd.f32 0.0, %v3716
      %3718 = vmatmul.bf16.gmra.mxu0 %v3577
      %v3719 = vpop.f32.mrf.mxu0
      %v3720 = vadd.f32 0.0, %v3719
      %v3721 = vpop.f32.mrf.mxu0
      %v3722 = vadd.f32 0.0, %v3721
      %3723 = vmatmul.bf16.gmra.mxu0 %v3578
      %v3724 = vpop.f32.mrf.mxu0
      %v3725 = vadd.f32 0.0, %v3724
      %v3726 = vpop.f32.mrf.mxu0
      %v3727 = vadd.f32 0.0, %v3726
      %3728 = vmatmul.bf16.gmra.mxu0 %v3579
      %v3729 = vpop.f32.mrf.mxu0
      %v3730 = vadd.f32 0.0, %v3729
      %v3731 = vpop.f32.mrf.mxu0
      %v3732 = vadd.f32 0.0, %v3731
      %3733 = vdwg.mxu0
      %v3734 = vadd.f32 %v3500, %v3655
      %v3735 = vadd.f32 %v3501, %v3657
      %v3736 = vadd.f32 %v3502, %v3660
      %v3737 = vadd.f32 %v3503, %v3662
      %v3738 = vadd.f32 %v3504, %v3665
      %v3739 = vadd.f32 %v3505, %v3667
      %v3740 = vadd.f32 %v3506, %v3670
      %v3741 = vadd.f32 %v3507, %v3672
      %v3742 = vadd.f32 %v3508, %v3675
      %v3743 = vadd.f32 %v3509, %v3677
      %v3744 = vadd.f32 %v3510, %v3680
      %v3745 = vadd.f32 %v3511, %v3682
      %v3746 = vadd.f32 %v3512, %v3685
      %v3747 = vadd.f32 %v3513, %v3687
      %v3748 = vadd.f32 %v3514, %v3690
      %v3749 = vadd.f32 %v3515, %v3692
      %v3750 = vadd.f32 %v3516, %v3695
      %v3751 = vadd.f32 %v3517, %v3697
      %v3752 = vadd.f32 %v3518, %v3700
      %v3753 = vadd.f32 %v3519, %v3702
      %v3754 = vadd.f32 %v3520, %v3705
      %v3755 = vadd.f32 %v3521, %v3707
      %v3756 = vadd.f32 %v3522, %v3710
      %v3757 = vadd.f32 %v3523, %v3712
      %v3758 = vadd.f32 %v3524, %v3715
      %v3759 = vadd.f32 %v3525, %v3717
      %v3760 = vadd.f32 %v3526, %v3720
      %v3761 = vadd.f32 %v3527, %v3722
      %v3762 = vadd.f32 %v3528, %v3725
      %v3763 = vadd.f32 %v3529, %v3727
      %v3764 = vadd.f32 %v3530, %v3730
      %v3765 = vadd.f32 %v3531, %v3732
      %v3766 = vld [vmem:[%s2861 + $0x10] sm:$0xff]
      %v3767 = vld [vmem:[%s2861 + $0x18] sm:$0xff]
      %v3768 = vld [vmem:[%s2861 + $0x38] sm:$0xff]
      %v3769 = vld [vmem:[%s2861 + $0x40] sm:$0xff]
      %v3770 = vld [vmem:[%s2861 + $0x60] sm:$0xff]
      %v3771 = vld [vmem:[%s2861 + $0x68] sm:$0xff]
      %v3772 = vld [vmem:[%s2861 + $0x88] sm:$0xff]
      %v3773 = vld [vmem:[%s2861 + $0x90] sm:$0xff]
      %v3774 = vld [vmem:[%s2861 + $0xb0] sm:$0xff]
      %v3775 = vld [vmem:[%s2861 + $0xb8] sm:$0xff]
      %v3776 = vld [vmem:[%s2861 + $0xd8] sm:$0xff]
      %v3777 = vld [vmem:[%s2861 + $0xe0] sm:$0xff]
      %v3778 = vld [vmem:[%s2861 + $0x100] sm:$0xff]
      %v3779 = vld [vmem:[%s2861 + $0x108] sm:$0xff]
      %v3780 = vld [vmem:[%s2861 + $0x128] sm:$0xff]
      %v3781 = vld [vmem:[%s2861 + $0x130] sm:$0xff]
      %v3782 = vld [vmem:[%s2861 + $0x150] sm:$0xff]
      %v3783 = vld [vmem:[%s2861 + $0x158] sm:$0xff]
      %v3784 = vld [vmem:[%s2861 + $0x178] sm:$0xff]
      %v3785 = vld [vmem:[%s2861 + $0x180] sm:$0xff]
      %v3786 = vld [vmem:[%s2861 + $0x1a0] sm:$0xff]
      %v3787 = vld [vmem:[%s2861 + $0x1a8] sm:$0xff]
      %v3788 = vld [vmem:[%s2861 + $0x1c8] sm:$0xff]
      %v3789 = vld [vmem:[%s2861 + $0x1d0] sm:$0xff]
      %v3790 = vld [vmem:[%s2861 + $0x1f0] sm:$0xff]
      %v3791 = vld [vmem:[%s2861 + $0x1f8] sm:$0xff]
      %v3792 = vld [vmem:[%s2861 + $0x218] sm:$0xff]
      %v3793 = vld [vmem:[%s2861 + $0x220] sm:$0xff]
      %v3794 = vld [vmem:[%s2861 + $0x240] sm:$0xff]
      %v3795 = vld [vmem:[%s2861 + $0x248] sm:$0xff]
      %v3796 = vld [vmem:[%s2861 + $0x268] sm:$0xff]
      %v3797 = vld [vmem:[%s2861 + $0x270] sm:$0xff]
      %v3798 = vpack.c.bf16 %v3767, %v3766
      %v3799 = vpack.c.bf16 %v3769, %v3768
      %v3800 = vpack.c.bf16 %v3771, %v3770
      %v3801 = vpack.c.bf16 %v3773, %v3772
      %v3802 = vpack.c.bf16 %v3775, %v3774
      %v3803 = vpack.c.bf16 %v3777, %v3776
      %v3804 = vpack.c.bf16 %v3779, %v3778
      %v3805 = vpack.c.bf16 %v3781, %v3780
      %v3806 = vpack.c.bf16 %v3783, %v3782
      %v3807 = vpack.c.bf16 %v3785, %v3784
      %v3808 = vpack.c.bf16 %v3787, %v3786
      %v3809 = vpack.c.bf16 %v3789, %v3788
      %v3810 = vpack.c.bf16 %v3791, %v3790
      %v3811 = vpack.c.bf16 %v3793, %v3792
      %v3812 = vpack.c.bf16 %v3795, %v3794
      %v3813 = vpack.c.bf16 %v3797, %v3796
      %s3814 = scalar_lea.vmem %s4, 256
      %v3815 = vld [vmem:[%s3814] sm:$0xf]
      %v3816 = vld [vmem:[%s3814 + $0x4] sm:$0xf]
      %v3817 = vld [vmem:[%s3814 + $0x8] sm:$0xf]
      %v3818 = vld [vmem:[%s3814 + $0xc] sm:$0xf]
      %v3819 = vld [vmem:[%s3814 + $0x10] sm:$0xf]
      %v3820 = vld [vmem:[%s3814 + $0x14] sm:$0xf]
      %v3821 = vld [vmem:[%s3814 + $0x18] sm:$0xf]
      %v3822 = vld [vmem:[%s3814 + $0x1c] sm:$0xf]
      %v3823 = vld [vmem:[%s3814 + $0x20] sm:$0xf]
      %v3824 = vld [vmem:[%s3814 + $0x24] sm:$0xf]
      %v3825 = vld [vmem:[%s3814 + $0x28] sm:$0xf]
      %v3826 = vld [vmem:[%s3814 + $0x2c] sm:$0xf]
      %v3827 = vld [vmem:[%s3814 + $0x30] sm:$0xf]
      %v3828 = vld [vmem:[%s3814 + $0x34] sm:$0xf]
      %v3829 = vld [vmem:[%s3814 + $0x38] sm:$0xf]
      %v3830 = vld [vmem:[%s3814 + $0x3c] sm:$0xf]
      %v3847 = vunpack.c.l.b16 %v3815
      %v3848 = vunpack.c.l.b16 %v3816
      %v3849 = vunpack.c.l.b16 %v3817
      %v3850 = vunpack.c.l.b16 %v3818
      %v3851 = vunpack.c.l.b16 %v3819
      %v3852 = vunpack.c.l.b16 %v3820
      %v3853 = vunpack.c.l.b16 %v3821
      %v3854 = vunpack.c.l.b16 %v3822
      %v3855 = vunpack.c.l.b16 %v3823
      %v3856 = vunpack.c.l.b16 %v3824
      %v3857 = vunpack.c.l.b16 %v3825
      %v3858 = vunpack.c.l.b16 %v3826
      %v3859 = vunpack.c.l.b16 %v3827
      %v3860 = vunpack.c.l.b16 %v3828
      %v3861 = vunpack.c.l.b16 %v3829
      %v3862 = vunpack.c.l.b16 %v3830
      %v3863 = vpack.c.b16 %v3848, %v3847
      %v3864 = vpack.c.b16 %v3850, %v3849
      %v3865 = vpack.c.b16 %v3852, %v3851
      %v3866 = vpack.c.b16 %v3854, %v3853
      %v3867 = vpack.c.b16 %v3856, %v3855
      %v3868 = vpack.c.b16 %v3858, %v3857
      %v3869 = vpack.c.b16 %v3860, %v3859
      %v3870 = vpack.c.b16 %v3862, %v3861
      %3879 = vmatpush.bf16.msra.mxu0 %v3870
      %3880 = vmatpush.bf16.msra.mxu0 %v3869
      %3881 = vmatpush.bf16.msra.mxu0 %v3868
      %3882 = vmatpush.bf16.msra.mxu0 %v3867
      %3883 = vmatpush.bf16.msra.mxu0 %v3866
      %3884 = vmatpush.bf16.msra.mxu0 %v3865
      %3885 = vmatpush.bf16.msra.mxu0 %v3864
      %3886 = vmatpush.bf16.msra.mxu0 %v3863
      %3887 = vmatmul.bf16.gmra.mxu0 %v3798
      %v3888 = vpop.f32.mrf.mxu0
      %v3889 = vadd.f32 0.0, %v3888
      %v3890 = vpop.f32.mrf.mxu0
      %v3891 = vadd.f32 0.0, %v3890
      %3892 = vmatmul.bf16.gmra.mxu0 %v3799
      %v3893 = vpop.f32.mrf.mxu0
      %v3894 = vadd.f32 0.0, %v3893
      %v3895 = vpop.f32.mrf.mxu0
      %v3896 = vadd.f32 0.0, %v3895
      %3897 = vmatmul.bf16.gmra.mxu0 %v3800
      %v3898 = vpop.f32.mrf.mxu0
      %v3899 = vadd.f32 0.0, %v3898
      %v3900 = vpop.f32.mrf.mxu0
      %v3901 = vadd.f32 0.0, %v3900
      %3902 = vmatmul.bf16.gmra.mxu0 %v3801
      %v3903 = vpop.f32.mrf.mxu0
      %v3904 = vadd.f32 0.0, %v3903
      %v3905 = vpop.f32.mrf.mxu0
      %v3906 = vadd.f32 0.0, %v3905
      %3907 = vmatmul.bf16.gmra.mxu0 %v3802
      %v3908 = vpop.f32.mrf.mxu0
      %v3909 = vadd.f32 0.0, %v3908
      %v3910 = vpop.f32.mrf.mxu0
      %v3911 = vadd.f32 0.0, %v3910
      %3912 = vmatmul.bf16.gmra.mxu0 %v3803
      %v3913 = vpop.f32.mrf.mxu0
      %v3914 = vadd.f32 0.0, %v3913
      %v3915 = vpop.f32.mrf.mxu0
      %v3916 = vadd.f32 0.0, %v3915
      %3917 = vmatmul.bf16.gmra.mxu0 %v3804
      %v3918 = vpop.f32.mrf.mxu0
      %v3919 = vadd.f32 0.0, %v3918
      %v3920 = vpop.f32.mrf.mxu0
      %v3921 = vadd.f32 0.0, %v3920
      %3922 = vmatmul.bf16.gmra.mxu0 %v3805
      %v3923 = vpop.f32.mrf.mxu0
      %v3924 = vadd.f32 0.0, %v3923
      %v3925 = vpop.f32.mrf.mxu0
      %v3926 = vadd.f32 0.0, %v3925
      %3927 = vmatmul.bf16.gmra.mxu0 %v3806
      %v3928 = vpop.f32.mrf.mxu0
      %v3929 = vadd.f32 0.0, %v3928
      %v3930 = vpop.f32.mrf.mxu0
      %v3931 = vadd.f32 0.0, %v3930
      %3932 = vmatmul.bf16.gmra.mxu0 %v3807
      %v3933 = vpop.f32.mrf.mxu0
      %v3934 = vadd.f32 0.0, %v3933
      %v3935 = vpop.f32.mrf.mxu0
      %v3936 = vadd.f32 0.0, %v3935
      %3937 = vmatmul.bf16.gmra.mxu0 %v3808
      %v3938 = vpop.f32.mrf.mxu0
      %v3939 = vadd.f32 0.0, %v3938
      %v3940 = vpop.f32.mrf.mxu0
      %v3941 = vadd.f32 0.0, %v3940
      %3942 = vmatmul.bf16.gmra.mxu0 %v3809
      %v3943 = vpop.f32.mrf.mxu0
      %v3944 = vadd.f32 0.0, %v3943
      %v3945 = vpop.f32.mrf.mxu0
      %v3946 = vadd.f32 0.0, %v3945
      %3947 = vmatmul.bf16.gmra.mxu0 %v3810
      %v3948 = vpop.f32.mrf.mxu0
      %v3949 = vadd.f32 0.0, %v3948
      %v3950 = vpop.f32.mrf.mxu0
      %v3951 = vadd.f32 0.0, %v3950
      %3952 = vmatmul.bf16.gmra.mxu0 %v3811
      %v3953 = vpop.f32.mrf.mxu0
      %v3954 = vadd.f32 0.0, %v3953
      %v3955 = vpop.f32.mrf.mxu0
      %v3956 = vadd.f32 0.0, %v3955
      %3957 = vmatmul.bf16.gmra.mxu0 %v3812
      %v3958 = vpop.f32.mrf.mxu0
      %v3959 = vadd.f32 0.0, %v3958
      %v3960 = vpop.f32.mrf.mxu0
      %v3961 = vadd.f32 0.0, %v3960
      %3962 = vmatmul.bf16.gmra.mxu0 %v3813
      %v3963 = vpop.f32.mrf.mxu0
      %v3964 = vadd.f32 0.0, %v3963
      %v3965 = vpop.f32.mrf.mxu0
      %v3966 = vadd.f32 0.0, %v3965
      %3967 = vdwg.mxu0
      %v3968 = vadd.f32 %v3734, %v3889
      %v3969 = vadd.f32 %v3735, %v3891
      %v3970 = vadd.f32 %v3736, %v3894
      %v3971 = vadd.f32 %v3737, %v3896
      %v3972 = vadd.f32 %v3738, %v3899
      %v3973 = vadd.f32 %v3739, %v3901
      %v3974 = vadd.f32 %v3740, %v3904
      %v3975 = vadd.f32 %v3741, %v3906
      %v3976 = vadd.f32 %v3742, %v3909
      %v3977 = vadd.f32 %v3743, %v3911
      %v3978 = vadd.f32 %v3744, %v3914
      %v3979 = vadd.f32 %v3745, %v3916
      %v3980 = vadd.f32 %v3746, %v3919
      %v3981 = vadd.f32 %v3747, %v3921
      %v3982 = vadd.f32 %v3748, %v3924
      %v3983 = vadd.f32 %v3749, %v3926
      %v3984 = vadd.f32 %v3750, %v3929
      %v3985 = vadd.f32 %v3751, %v3931
      %v3986 = vadd.f32 %v3752, %v3934
      %v3987 = vadd.f32 %v3753, %v3936
      %v3988 = vadd.f32 %v3754, %v3939
      %v3989 = vadd.f32 %v3755, %v3941
      %v3990 = vadd.f32 %v3756, %v3944
      %v3991 = vadd.f32 %v3757, %v3946
      %v3992 = vadd.f32 %v3758, %v3949
      %v3993 = vadd.f32 %v3759, %v3951
      %v3994 = vadd.f32 %v3760, %v3954
      %v3995 = vadd.f32 %v3761, %v3956
      %v3996 = vadd.f32 %v3762, %v3959
      %v3997 = vadd.f32 %v3763, %v3961
      %v3998 = vadd.f32 %v3764, %v3964
      %v3999 = vadd.f32 %v3765, %v3966
      %v4000 = vld [vmem:[%s2861 + $0x11] sm:$0xff]
      %v4001 = vld [vmem:[%s2861 + $0x19] sm:$0xff]
      %v4002 = vld [vmem:[%s2861 + $0x39] sm:$0xff]
      %v4003 = vld [vmem:[%s2861 + $0x41] sm:$0xff]
      %v4004 = vld [vmem:[%s2861 + $0x61] sm:$0xff]
      %v4005 = vld [vmem:[%s2861 + $0x69] sm:$0xff]
      %v4006 = vld [vmem:[%s2861 + $0x89] sm:$0xff]
      %v4007 = vld [vmem:[%s2861 + $0x91] sm:$0xff]
      %v4008 = vld [vmem:[%s2861 + $0xb1] sm:$0xff]
      %v4009 = vld [vmem:[%s2861 + $0xb9] sm:$0xff]
      %v4010 = vld [vmem:[%s2861 + $0xd9] sm:$0xff]
      %v4011 = vld [vmem:[%s2861 + $0xe1] sm:$0xff]
      %v4012 = vld [vmem:[%s2861 + $0x101] sm:$0xff]
      %v4013 = vld [vmem:[%s2861 + $0x109] sm:$0xff]
      %v4014 = vld [vmem:[%s2861 + $0x129] sm:$0xff]
      %v4015 = vld [vmem:[%s2861 + $0x131] sm:$0xff]
      %v4016 = vld [vmem:[%s2861 + $0x151] sm:$0xff]
      %v4017 = vld [vmem:[%s2861 + $0x159] sm:$0xff]
      %v4018 = vld [vmem:[%s2861 + $0x179] sm:$0xff]
      %v4019 = vld [vmem:[%s2861 + $0x181] sm:$0xff]
      %v4020 = vld [vmem:[%s2861 + $0x1a1] sm:$0xff]
      %v4021 = vld [vmem:[%s2861 + $0x1a9] sm:$0xff]
      %v4022 = vld [vmem:[%s2861 + $0x1c9] sm:$0xff]
      %v4023 = vld [vmem:[%s2861 + $0x1d1] sm:$0xff]
      %v4024 = vld [vmem:[%s2861 + $0x1f1] sm:$0xff]
      %v4025 = vld [vmem:[%s2861 + $0x1f9] sm:$0xff]
      %v4026 = vld [vmem:[%s2861 + $0x219] sm:$0xff]
      %v4027 = vld [vmem:[%s2861 + $0x221] sm:$0xff]
      %v4028 = vld [vmem:[%s2861 + $0x241] sm:$0xff]
      %v4029 = vld [vmem:[%s2861 + $0x249] sm:$0xff]
      %v4030 = vld [vmem:[%s2861 + $0x269] sm:$0xff]
      %v4031 = vld [vmem:[%s2861 + $0x271] sm:$0xff]
      %v4032 = vpack.c.bf16 %v4001, %v4000
      %v4033 = vpack.c.bf16 %v4003, %v4002
      %v4034 = vpack.c.bf16 %v4005, %v4004
      %v4035 = vpack.c.bf16 %v4007, %v4006
      %v4036 = vpack.c.bf16 %v4009, %v4008
      %v4037 = vpack.c.bf16 %v4011, %v4010
      %v4038 = vpack.c.bf16 %v4013, %v4012
      %v4039 = vpack.c.bf16 %v4015, %v4014
      %v4040 = vpack.c.bf16 %v4017, %v4016
      %v4041 = vpack.c.bf16 %v4019, %v4018
      %v4042 = vpack.c.bf16 %v4021, %v4020
      %v4043 = vpack.c.bf16 %v4023, %v4022
      %v4044 = vpack.c.bf16 %v4025, %v4024
      %v4045 = vpack.c.bf16 %v4027, %v4026
      %v4046 = vpack.c.bf16 %v4029, %v4028
      %v4047 = vpack.c.bf16 %v4031, %v4030
      %s4048 = scalar_lea.vmem %s4, 320
      %v4049 = vld [vmem:[%s4048] sm:$0xf]
      %v4050 = vld [vmem:[%s4048 + $0x4] sm:$0xf]
      %v4051 = vld [vmem:[%s4048 + $0x8] sm:$0xf]
      %v4052 = vld [vmem:[%s4048 + $0xc] sm:$0xf]
      %v4053 = vld [vmem:[%s4048 + $0x10] sm:$0xf]
      %v4054 = vld [vmem:[%s4048 + $0x14] sm:$0xf]
      %v4055 = vld [vmem:[%s4048 + $0x18] sm:$0xf]
      %v4056 = vld [vmem:[%s4048 + $0x1c] sm:$0xf]
      %v4057 = vld [vmem:[%s4048 + $0x20] sm:$0xf]
      %v4058 = vld [vmem:[%s4048 + $0x24] sm:$0xf]
      %v4059 = vld [vmem:[%s4048 + $0x28] sm:$0xf]
      %v4060 = vld [vmem:[%s4048 + $0x2c] sm:$0xf]
      %v4061 = vld [vmem:[%s4048 + $0x30] sm:$0xf]
      %v4062 = vld [vmem:[%s4048 + $0x34] sm:$0xf]
      %v4063 = vld [vmem:[%s4048 + $0x38] sm:$0xf]
      %v4064 = vld [vmem:[%s4048 + $0x3c] sm:$0xf]
      %v4081 = vunpack.c.l.b16 %v4049
      %v4082 = vunpack.c.l.b16 %v4050
      %v4083 = vunpack.c.l.b16 %v4051
      %v4084 = vunpack.c.l.b16 %v4052
      %v4085 = vunpack.c.l.b16 %v4053
      %v4086 = vunpack.c.l.b16 %v4054
      %v4087 = vunpack.c.l.b16 %v4055
      %v4088 = vunpack.c.l.b16 %v4056
      %v4089 = vunpack.c.l.b16 %v4057
      %v4090 = vunpack.c.l.b16 %v4058
      %v4091 = vunpack.c.l.b16 %v4059
      %v4092 = vunpack.c.l.b16 %v4060
      %v4093 = vunpack.c.l.b16 %v4061
      %v4094 = vunpack.c.l.b16 %v4062
      %v4095 = vunpack.c.l.b16 %v4063
      %v4096 = vunpack.c.l.b16 %v4064
      %v4097 = vpack.c.b16 %v4082, %v4081
      %v4098 = vpack.c.b16 %v4084, %v4083
      %v4099 = vpack.c.b16 %v4086, %v4085
      %v4100 = vpack.c.b16 %v4088, %v4087
      %v4101 = vpack.c.b16 %v4090, %v4089
      %v4102 = vpack.c.b16 %v4092, %v4091
      %v4103 = vpack.c.b16 %v4094, %v4093
      %v4104 = vpack.c.b16 %v4096, %v4095
      %4113 = vmatpush.bf16.msra.mxu0 %v4104
      %4114 = vmatpush.bf16.msra.mxu0 %v4103
      %4115 = vmatpush.bf16.msra.mxu0 %v4102
      %4116 = vmatpush.bf16.msra.mxu0 %v4101
      %4117 = vmatpush.bf16.msra.mxu0 %v4100
      %4118 = vmatpush.bf16.msra.mxu0 %v4099
      %4119 = vmatpush.bf16.msra.mxu0 %v4098
      %4120 = vmatpush.bf16.msra.mxu0 %v4097
      %4121 = vmatmul.bf16.gmra.mxu0 %v4032
      %v4122 = vpop.f32.mrf.mxu0
      %v4123 = vadd.f32 0.0, %v4122
      %v4124 = vpop.f32.mrf.mxu0
      %v4125 = vadd.f32 0.0, %v4124
      %4126 = vmatmul.bf16.gmra.mxu0 %v4033
      %v4127 = vpop.f32.mrf.mxu0
      %v4128 = vadd.f32 0.0, %v4127
      %v4129 = vpop.f32.mrf.mxu0
      %v4130 = vadd.f32 0.0, %v4129
      %4131 = vmatmul.bf16.gmra.mxu0 %v4034
      %v4132 = vpop.f32.mrf.mxu0
      %v4133 = vadd.f32 0.0, %v4132
      %v4134 = vpop.f32.mrf.mxu0
      %v4135 = vadd.f32 0.0, %v4134
      %4136 = vmatmul.bf16.gmra.mxu0 %v4035
      %v4137 = vpop.f32.mrf.mxu0
      %v4138 = vadd.f32 0.0, %v4137
      %v4139 = vpop.f32.mrf.mxu0
      %v4140 = vadd.f32 0.0, %v4139
      %4141 = vmatmul.bf16.gmra.mxu0 %v4036
      %v4142 = vpop.f32.mrf.mxu0
      %v4143 = vadd.f32 0.0, %v4142
      %v4144 = vpop.f32.mrf.mxu0
      %v4145 = vadd.f32 0.0, %v4144
      %4146 = vmatmul.bf16.gmra.mxu0 %v4037
      %v4147 = vpop.f32.mrf.mxu0
      %v4148 = vadd.f32 0.0, %v4147
      %v4149 = vpop.f32.mrf.mxu0
      %v4150 = vadd.f32 0.0, %v4149
      %4151 = vmatmul.bf16.gmra.mxu0 %v4038
      %v4152 = vpop.f32.mrf.mxu0
      %v4153 = vadd.f32 0.0, %v4152
      %v4154 = vpop.f32.mrf.mxu0
      %v4155 = vadd.f32 0.0, %v4154
      %4156 = vmatmul.bf16.gmra.mxu0 %v4039
      %v4157 = vpop.f32.mrf.mxu0
      %v4158 = vadd.f32 0.0, %v4157
      %v4159 = vpop.f32.mrf.mxu0
      %v4160 = vadd.f32 0.0, %v4159
      %4161 = vmatmul.bf16.gmra.mxu0 %v4040
      %v4162 = vpop.f32.mrf.mxu0
      %v4163 = vadd.f32 0.0, %v4162
      %v4164 = vpop.f32.mrf.mxu0
      %v4165 = vadd.f32 0.0, %v4164
      %4166 = vmatmul.bf16.gmra.mxu0 %v4041
      %v4167 = vpop.f32.mrf.mxu0
      %v4168 = vadd.f32 0.0, %v4167
      %v4169 = vpop.f32.mrf.mxu0
      %v4170 = vadd.f32 0.0, %v4169
      %4171 = vmatmul.bf16.gmra.mxu0 %v4042
      %v4172 = vpop.f32.mrf.mxu0
      %v4173 = vadd.f32 0.0, %v4172
      %v4174 = vpop.f32.mrf.mxu0
      %v4175 = vadd.f32 0.0, %v4174
      %4176 = vmatmul.bf16.gmra.mxu0 %v4043
      %v4177 = vpop.f32.mrf.mxu0
      %v4178 = vadd.f32 0.0, %v4177
      %v4179 = vpop.f32.mrf.mxu0
      %v4180 = vadd.f32 0.0, %v4179
      %4181 = vmatmul.bf16.gmra.mxu0 %v4044
      %v4182 = vpop.f32.mrf.mxu0
      %v4183 = vadd.f32 0.0, %v4182
      %v4184 = vpop.f32.mrf.mxu0
      %v4185 = vadd.f32 0.0, %v4184
      %4186 = vmatmul.bf16.gmra.mxu0 %v4045
      %v4187 = vpop.f32.mrf.mxu0
      %v4188 = vadd.f32 0.0, %v4187
      %v4189 = vpop.f32.mrf.mxu0
      %v4190 = vadd.f32 0.0, %v4189
      %4191 = vmatmul.bf16.gmra.mxu0 %v4046
      %v4192 = vpop.f32.mrf.mxu0
      %v4193 = vadd.f32 0.0, %v4192
      %v4194 = vpop.f32.mrf.mxu0
      %v4195 = vadd.f32 0.0, %v4194
      %4196 = vmatmul.bf16.gmra.mxu0 %v4047
      %v4197 = vpop.f32.mrf.mxu0
      %v4198 = vadd.f32 0.0, %v4197
      %v4199 = vpop.f32.mrf.mxu0
      %v4200 = vadd.f32 0.0, %v4199
      %4201 = vdwg.mxu0
      %v4202 = vadd.f32 %v3968, %v4123
      %v4203 = vadd.f32 %v3969, %v4125
      %v4204 = vadd.f32 %v3970, %v4128
      %v4205 = vadd.f32 %v3971, %v4130
      %v4206 = vadd.f32 %v3972, %v4133
      %v4207 = vadd.f32 %v3973, %v4135
      %v4208 = vadd.f32 %v3974, %v4138
      %v4209 = vadd.f32 %v3975, %v4140
      %v4210 = vadd.f32 %v3976, %v4143
      %v4211 = vadd.f32 %v3977, %v4145
      %v4212 = vadd.f32 %v3978, %v4148
      %v4213 = vadd.f32 %v3979, %v4150
      %v4214 = vadd.f32 %v3980, %v4153
      %v4215 = vadd.f32 %v3981, %v4155
      %v4216 = vadd.f32 %v3982, %v4158
      %v4217 = vadd.f32 %v3983, %v4160
      %v4218 = vadd.f32 %v3984, %v4163
      %v4219 = vadd.f32 %v3985, %v4165
      %v4220 = vadd.f32 %v3986, %v4168
      %v4221 = vadd.f32 %v3987, %v4170
      %v4222 = vadd.f32 %v3988, %v4173
      %v4223 = vadd.f32 %v3989, %v4175
      %v4224 = vadd.f32 %v3990, %v4178
      %v4225 = vadd.f32 %v3991, %v4180
      %v4226 = vadd.f32 %v3992, %v4183
      %v4227 = vadd.f32 %v3993, %v4185
      %v4228 = vadd.f32 %v3994, %v4188
      %v4229 = vadd.f32 %v3995, %v4190
      %v4230 = vadd.f32 %v3996, %v4193
      %v4231 = vadd.f32 %v3997, %v4195
      %v4232 = vadd.f32 %v3998, %v4198
      %v4233 = vadd.f32 %v3999, %v4200
      %s4234 = scalar_lea.vmem [#allocation3], 680
      %v4235 = vld [vmem:[%s4234 + $0xf] sm:$0xff]
      %v4236 = vld [vmem:[%s4234 + $0x17] sm:$0xff]
      %v4237 = vld [vmem:[%s4234 + $0x37] sm:$0xff]
      %v4238 = vld [vmem:[%s4234 + $0x3f] sm:$0xff]
      %v4239 = vld [vmem:[%s4234 + $0x5f] sm:$0xff]
      %v4240 = vld [vmem:[%s4234 + $0x67] sm:$0xff]
      %v4241 = vld [vmem:[%s4234 + $0x87] sm:$0xff]
      %v4242 = vld [vmem:[%s4234 + $0x8f] sm:$0xff]
      %v4243 = vld [vmem:[%s4234 + $0xaf] sm:$0xff]
      %v4244 = vld [vmem:[%s4234 + $0xb7] sm:$0xff]
      %v4245 = vld [vmem:[%s4234 + $0xd7] sm:$0xff]
      %v4246 = vld [vmem:[%s4234 + $0xdf] sm:$0xff]
      %v4247 = vld [vmem:[%s4234 + $0xff] sm:$0xff]
      %v4248 = vld [vmem:[%s4234 + $0x107] sm:$0xff]
      %v4249 = vld [vmem:[%s4234 + $0x127] sm:$0xff]
      %v4250 = vld [vmem:[%s4234 + $0x12f] sm:$0xff]
      %v4251 = vld [vmem:[%s4234 + $0x14f] sm:$0xff]
      %v4252 = vld [vmem:[%s4234 + $0x157] sm:$0xff]
      %v4253 = vld [vmem:[%s4234 + $0x177] sm:$0xff]
      %v4254 = vld [vmem:[%s4234 + $0x17f] sm:$0xff]
      %v4255 = vld [vmem:[%s4234 + $0x19f] sm:$0xff]
      %v4256 = vld [vmem:[%s4234 + $0x1a7] sm:$0xff]
      %v4257 = vld [vmem:[%s4234 + $0x1c7] sm:$0xff]
      %v4258 = vld [vmem:[%s4234 + $0x1cf] sm:$0xff]
      %v4259 = vld [vmem:[%s4234 + $0x1ef] sm:$0xff]
      %v4260 = vld [vmem:[%s4234 + $0x1f7] sm:$0xff]
      %v4261 = vld [vmem:[%s4234 + $0x217] sm:$0xff]
      %v4262 = vld [vmem:[%s4234 + $0x21f] sm:$0xff]
      %v4263 = vld [vmem:[%s4234 + $0x23f] sm:$0xff]
      %v4264 = vld [vmem:[%s4234 + $0x247] sm:$0xff]
      %v4265 = vld [vmem:[%s4234 + $0x267] sm:$0xff]
      %v4266 = vld [vmem:[%s4234 + $0x26f] sm:$0xff]
      %v4267 = vpack.c.bf16 %v4236, %v4235
      %v4268 = vpack.c.bf16 %v4238, %v4237
      %v4269 = vpack.c.bf16 %v4240, %v4239
      %v4270 = vpack.c.bf16 %v4242, %v4241
      %v4271 = vpack.c.bf16 %v4244, %v4243
      %v4272 = vpack.c.bf16 %v4246, %v4245
      %v4273 = vpack.c.bf16 %v4248, %v4247
      %v4274 = vpack.c.bf16 %v4250, %v4249
      %v4275 = vpack.c.bf16 %v4252, %v4251
      %v4276 = vpack.c.bf16 %v4254, %v4253
      %v4277 = vpack.c.bf16 %v4256, %v4255
      %v4278 = vpack.c.bf16 %v4258, %v4257
      %v4279 = vpack.c.bf16 %v4260, %v4259
      %v4280 = vpack.c.bf16 %v4262, %v4261
      %v4281 = vpack.c.bf16 %v4264, %v4263
      %v4282 = vpack.c.bf16 %v4266, %v4265
      %s4283 = scalar_lea.vmem %s4, 384
      %v4284 = vld [vmem:[%s4283] sm:$0xf]
      %v4285 = vld [vmem:[%s4283 + $0x4] sm:$0xf]
      %v4286 = vld [vmem:[%s4283 + $0x8] sm:$0xf]
      %v4287 = vld [vmem:[%s4283 + $0xc] sm:$0xf]
      %v4288 = vld [vmem:[%s4283 + $0x10] sm:$0xf]
      %v4289 = vld [vmem:[%s4283 + $0x14] sm:$0xf]
      %v4290 = vld [vmem:[%s4283 + $0x18] sm:$0xf]
      %v4291 = vld [vmem:[%s4283 + $0x1c] sm:$0xf]
      %v4292 = vld [vmem:[%s4283 + $0x20] sm:$0xf]
      %v4293 = vld [vmem:[%s4283 + $0x24] sm:$0xf]
      %v4294 = vld [vmem:[%s4283 + $0x28] sm:$0xf]
      %v4295 = vld [vmem:[%s4283 + $0x2c] sm:$0xf]
      %v4296 = vld [vmem:[%s4283 + $0x30] sm:$0xf]
      %v4297 = vld [vmem:[%s4283 + $0x34] sm:$0xf]
      %v4298 = vld [vmem:[%s4283 + $0x38] sm:$0xf]
      %v4299 = vld [vmem:[%s4283 + $0x3c] sm:$0xf]
      %v4316 = vunpack.c.l.b16 %v4284
      %v4317 = vunpack.c.l.b16 %v4285
      %v4318 = vunpack.c.l.b16 %v4286
      %v4319 = vunpack.c.l.b16 %v4287
      %v4320 = vunpack.c.l.b16 %v4288
      %v4321 = vunpack.c.l.b16 %v4289
      %v4322 = vunpack.c.l.b16 %v4290
      %v4323 = vunpack.c.l.b16 %v4291
      %v4324 = vunpack.c.l.b16 %v4292
      %v4325 = vunpack.c.l.b16 %v4293
      %v4326 = vunpack.c.l.b16 %v4294
      %v4327 = vunpack.c.l.b16 %v4295
      %v4328 = vunpack.c.l.b16 %v4296
      %v4329 = vunpack.c.l.b16 %v4297
      %v4330 = vunpack.c.l.b16 %v4298
      %v4331 = vunpack.c.l.b16 %v4299
      %v4332 = vpack.c.b16 %v4317, %v4316
      %v4333 = vpack.c.b16 %v4319, %v4318
      %v4334 = vpack.c.b16 %v4321, %v4320
      %v4335 = vpack.c.b16 %v4323, %v4322
      %v4336 = vpack.c.b16 %v4325, %v4324
      %v4337 = vpack.c.b16 %v4327, %v4326
      %v4338 = vpack.c.b16 %v4329, %v4328
      %v4339 = vpack.c.b16 %v4331, %v4330
      %4348 = vmatpush.bf16.msra.mxu0 %v4339
      %4349 = vmatpush.bf16.msra.mxu0 %v4338
      %4350 = vmatpush.bf16.msra.mxu0 %v4337
      %4351 = vmatpush.bf16.msra.mxu0 %v4336
      %4352 = vmatpush.bf16.msra.mxu0 %v4335
      %4353 = vmatpush.bf16.msra.mxu0 %v4334
      %4354 = vmatpush.bf16.msra.mxu0 %v4333
      %4355 = vmatpush.bf16.msra.mxu0 %v4332
      %4356 = vmatmul.bf16.gmra.mxu0 %v4267
      %v4357 = vpop.f32.mrf.mxu0
      %v4358 = vadd.f32 0.0, %v4357
      %v4359 = vpop.f32.mrf.mxu0
      %v4360 = vadd.f32 0.0, %v4359
      %4361 = vmatmul.bf16.gmra.mxu0 %v4268
      %v4362 = vpop.f32.mrf.mxu0
      %v4363 = vadd.f32 0.0, %v4362
      %v4364 = vpop.f32.mrf.mxu0
      %v4365 = vadd.f32 0.0, %v4364
      %4366 = vmatmul.bf16.gmra.mxu0 %v4269
      %v4367 = vpop.f32.mrf.mxu0
      %v4368 = vadd.f32 0.0, %v4367
      %v4369 = vpop.f32.mrf.mxu0
      %v4370 = vadd.f32 0.0, %v4369
      %4371 = vmatmul.bf16.gmra.mxu0 %v4270
      %v4372 = vpop.f32.mrf.mxu0
      %v4373 = vadd.f32 0.0, %v4372
      %v4374 = vpop.f32.mrf.mxu0
      %v4375 = vadd.f32 0.0, %v4374
      %4376 = vmatmul.bf16.gmra.mxu0 %v4271
      %v4377 = vpop.f32.mrf.mxu0
      %v4378 = vadd.f32 0.0, %v4377
      %v4379 = vpop.f32.mrf.mxu0
      %v4380 = vadd.f32 0.0, %v4379
      %4381 = vmatmul.bf16.gmra.mxu0 %v4272
      %v4382 = vpop.f32.mrf.mxu0
      %v4383 = vadd.f32 0.0, %v4382
      %v4384 = vpop.f32.mrf.mxu0
      %v4385 = vadd.f32 0.0, %v4384
      %4386 = vmatmul.bf16.gmra.mxu0 %v4273
      %v4387 = vpop.f32.mrf.mxu0
      %v4388 = vadd.f32 0.0, %v4387
      %v4389 = vpop.f32.mrf.mxu0
      %v4390 = vadd.f32 0.0, %v4389
      %4391 = vmatmul.bf16.gmra.mxu0 %v4274
      %v4392 = vpop.f32.mrf.mxu0
      %v4393 = vadd.f32 0.0, %v4392
      %v4394 = vpop.f32.mrf.mxu0
      %v4395 = vadd.f32 0.0, %v4394
      %4396 = vmatmul.bf16.gmra.mxu0 %v4275
      %v4397 = vpop.f32.mrf.mxu0
      %v4398 = vadd.f32 0.0, %v4397
      %v4399 = vpop.f32.mrf.mxu0
      %v4400 = vadd.f32 0.0, %v4399
      %4401 = vmatmul.bf16.gmra.mxu0 %v4276
      %v4402 = vpop.f32.mrf.mxu0
      %v4403 = vadd.f32 0.0, %v4402
      %v4404 = vpop.f32.mrf.mxu0
      %v4405 = vadd.f32 0.0, %v4404
      %4406 = vmatmul.bf16.gmra.mxu0 %v4277
      %v4407 = vpop.f32.mrf.mxu0
      %v4408 = vadd.f32 0.0, %v4407
      %v4409 = vpop.f32.mrf.mxu0
      %v4410 = vadd.f32 0.0, %v4409
      %4411 = vmatmul.bf16.gmra.mxu0 %v4278
      %v4412 = vpop.f32.mrf.mxu0
      %v4413 = vadd.f32 0.0, %v4412
      %v4414 = vpop.f32.mrf.mxu0
      %v4415 = vadd.f32 0.0, %v4414
      %4416 = vmatmul.bf16.gmra.mxu0 %v4279
      %v4417 = vpop.f32.mrf.mxu0
      %v4418 = vadd.f32 0.0, %v4417
      %v4419 = vpop.f32.mrf.mxu0
      %v4420 = vadd.f32 0.0, %v4419
      %4421 = vmatmul.bf16.gmra.mxu0 %v4280
      %v4422 = vpop.f32.mrf.mxu0
      %v4423 = vadd.f32 0.0, %v4422
      %v4424 = vpop.f32.mrf.mxu0
      %v4425 = vadd.f32 0.0, %v4424
      %4426 = vmatmul.bf16.gmra.mxu0 %v4281
      %v4427 = vpop.f32.mrf.mxu0
      %v4428 = vadd.f32 0.0, %v4427
      %v4429 = vpop.f32.mrf.mxu0
      %v4430 = vadd.f32 0.0, %v4429
      %4431 = vmatmul.bf16.gmra.mxu0 %v4282
      %v4432 = vpop.f32.mrf.mxu0
      %v4433 = vadd.f32 0.0, %v4432
      %v4434 = vpop.f32.mrf.mxu0
      %v4435 = vadd.f32 0.0, %v4434
      %4436 = vdwg.mxu0
      %v4437 = vadd.f32 %v4202, %v4358
      %v4438 = vadd.f32 %v4203, %v4360
      %v4439 = vadd.f32 %v4204, %v4363
      %v4440 = vadd.f32 %v4205, %v4365
      %v4441 = vadd.f32 %v4206, %v4368
      %v4442 = vadd.f32 %v4207, %v4370
      %v4443 = vadd.f32 %v4208, %v4373
      %v4444 = vadd.f32 %v4209, %v4375
      %v4445 = vadd.f32 %v4210, %v4378
      %v4446 = vadd.f32 %v4211, %v4380
      %v4447 = vadd.f32 %v4212, %v4383
      %v4448 = vadd.f32 %v4213, %v4385
      %v4449 = vadd.f32 %v4214, %v4388
      %v4450 = vadd.f32 %v4215, %v4390
      %v4451 = vadd.f32 %v4216, %v4393
      %v4452 = vadd.f32 %v4217, %v4395
      %v4453 = vadd.f32 %v4218, %v4398
      %v4454 = vadd.f32 %v4219, %v4400
      %v4455 = vadd.f32 %v4220, %v4403
      %v4456 = vadd.f32 %v4221, %v4405
      %v4457 = vadd.f32 %v4222, %v4408
      %v4458 = vadd.f32 %v4223, %v4410
      %v4459 = vadd.f32 %v4224, %v4413
      %v4460 = vadd.f32 %v4225, %v4415
      %v4461 = vadd.f32 %v4226, %v4418
      %v4462 = vadd.f32 %v4227, %v4420
      %v4463 = vadd.f32 %v4228, %v4423
      %v4464 = vadd.f32 %v4229, %v4425
      %v4465 = vadd.f32 %v4230, %v4428
      %v4466 = vadd.f32 %v4231, %v4430
      %v4467 = vadd.f32 %v4232, %v4433
      %v4468 = vadd.f32 %v4233, %v4435
      %v4469 = vld [vmem:[%s4234 + $0x10] sm:$0xff]
      %v4470 = vld [vmem:[%s4234 + $0x18] sm:$0xff]
      %v4471 = vld [vmem:[%s4234 + $0x38] sm:$0xff]
      %v4472 = vld [vmem:[%s4234 + $0x40] sm:$0xff]
      %v4473 = vld [vmem:[%s4234 + $0x60] sm:$0xff]
      %v4474 = vld [vmem:[%s4234 + $0x68] sm:$0xff]
      %v4475 = vld [vmem:[%s4234 + $0x88] sm:$0xff]
      %v4476 = vld [vmem:[%s4234 + $0x90] sm:$0xff]
      %v4477 = vld [vmem:[%s4234 + $0xb0] sm:$0xff]
      %v4478 = vld [vmem:[%s4234 + $0xb8] sm:$0xff]
      %v4479 = vld [vmem:[%s4234 + $0xd8] sm:$0xff]
      %v4480 = vld [vmem:[%s4234 + $0xe0] sm:$0xff]
      %v4481 = vld [vmem:[%s4234 + $0x100] sm:$0xff]
      %v4482 = vld [vmem:[%s4234 + $0x108] sm:$0xff]
      %v4483 = vld [vmem:[%s4234 + $0x128] sm:$0xff]
      %v4484 = vld [vmem:[%s4234 + $0x130] sm:$0xff]
      %v4485 = vld [vmem:[%s4234 + $0x150] sm:$0xff]
      %v4486 = vld [vmem:[%s4234 + $0x158] sm:$0xff]
      %v4487 = vld [vmem:[%s4234 + $0x178] sm:$0xff]
      %v4488 = vld [vmem:[%s4234 + $0x180] sm:$0xff]
      %v4489 = vld [vmem:[%s4234 + $0x1a0] sm:$0xff]
      %v4490 = vld [vmem:[%s4234 + $0x1a8] sm:$0xff]
      %v4491 = vld [vmem:[%s4234 + $0x1c8] sm:$0xff]
      %v4492 = vld [vmem:[%s4234 + $0x1d0] sm:$0xff]
      %v4493 = vld [vmem:[%s4234 + $0x1f0] sm:$0xff]
      %v4494 = vld [vmem:[%s4234 + $0x1f8] sm:$0xff]
      %v4495 = vld [vmem:[%s4234 + $0x218] sm:$0xff]
      %v4496 = vld [vmem:[%s4234 + $0x220] sm:$0xff]
      %v4497 = vld [vmem:[%s4234 + $0x240] sm:$0xff]
      %v4498 = vld [vmem:[%s4234 + $0x248] sm:$0xff]
      %v4499 = vld [vmem:[%s4234 + $0x268] sm:$0xff]
      %v4500 = vld [vmem:[%s4234 + $0x270] sm:$0xff]
      %v4501 = vpack.c.bf16 %v4470, %v4469
      %v4502 = vpack.c.bf16 %v4472, %v4471
      %v4503 = vpack.c.bf16 %v4474, %v4473
      %v4504 = vpack.c.bf16 %v4476, %v4475
      %v4505 = vpack.c.bf16 %v4478, %v4477
      %v4506 = vpack.c.bf16 %v4480, %v4479
      %v4507 = vpack.c.bf16 %v4482, %v4481
      %v4508 = vpack.c.bf16 %v4484, %v4483
      %v4509 = vpack.c.bf16 %v4486, %v4485
      %v4510 = vpack.c.bf16 %v4488, %v4487
      %v4511 = vpack.c.bf16 %v4490, %v4489
      %v4512 = vpack.c.bf16 %v4492, %v4491
      %v4513 = vpack.c.bf16 %v4494, %v4493
      %v4514 = vpack.c.bf16 %v4496, %v4495
      %v4515 = vpack.c.bf16 %v4498, %v4497
      %v4516 = vpack.c.bf16 %v4500, %v4499
      %s4517 = scalar_lea.vmem %s4, 448
      %v4518 = vld [vmem:[%s4517] sm:$0xf]
      %v4519 = vld [vmem:[%s4517 + $0x4] sm:$0xf]
      %v4520 = vld [vmem:[%s4517 + $0x8] sm:$0xf]
      %v4521 = vld [vmem:[%s4517 + $0xc] sm:$0xf]
      %v4522 = vld [vmem:[%s4517 + $0x10] sm:$0xf]
      %v4523 = vld [vmem:[%s4517 + $0x14] sm:$0xf]
      %v4524 = vld [vmem:[%s4517 + $0x18] sm:$0xf]
      %v4525 = vld [vmem:[%s4517 + $0x1c] sm:$0xf]
      %v4526 = vld [vmem:[%s4517 + $0x20] sm:$0xf]
      %v4527 = vld [vmem:[%s4517 + $0x24] sm:$0xf]
      %v4528 = vld [vmem:[%s4517 + $0x28] sm:$0xf]
      %v4529 = vld [vmem:[%s4517 + $0x2c] sm:$0xf]
      %v4530 = vld [vmem:[%s4517 + $0x30] sm:$0xf]
      %v4531 = vld [vmem:[%s4517 + $0x34] sm:$0xf]
      %v4532 = vld [vmem:[%s4517 + $0x38] sm:$0xf]
      %v4533 = vld [vmem:[%s4517 + $0x3c] sm:$0xf]
      %v4550 = vunpack.c.l.b16 %v4518
      %v4551 = vunpack.c.l.b16 %v4519
      %v4552 = vunpack.c.l.b16 %v4520
      %v4553 = vunpack.c.l.b16 %v4521
      %v4554 = vunpack.c.l.b16 %v4522
      %v4555 = vunpack.c.l.b16 %v4523
      %v4556 = vunpack.c.l.b16 %v4524
      %v4557 = vunpack.c.l.b16 %v4525
      %v4558 = vunpack.c.l.b16 %v4526
      %v4559 = vunpack.c.l.b16 %v4527
      %v4560 = vunpack.c.l.b16 %v4528
      %v4561 = vunpack.c.l.b16 %v4529
      %v4562 = vunpack.c.l.b16 %v4530
      %v4563 = vunpack.c.l.b16 %v4531
      %v4564 = vunpack.c.l.b16 %v4532
      %v4565 = vunpack.c.l.b16 %v4533
      %v4566 = vpack.c.b16 %v4551, %v4550
      %v4567 = vpack.c.b16 %v4553, %v4552
      %v4568 = vpack.c.b16 %v4555, %v4554
      %v4569 = vpack.c.b16 %v4557, %v4556
      %v4570 = vpack.c.b16 %v4559, %v4558
      %v4571 = vpack.c.b16 %v4561, %v4560
      %v4572 = vpack.c.b16 %v4563, %v4562
      %v4573 = vpack.c.b16 %v4565, %v4564
      %4582 = vmatpush.bf16.msra.mxu0 %v4573
      %4583 = vmatpush.bf16.msra.mxu0 %v4572
      %4584 = vmatpush.bf16.msra.mxu0 %v4571
      %4585 = vmatpush.bf16.msra.mxu0 %v4570
      %4586 = vmatpush.bf16.msra.mxu0 %v4569
      %4587 = vmatpush.bf16.msra.mxu0 %v4568
      %4588 = vmatpush.bf16.msra.mxu0 %v4567
      %4589 = vmatpush.bf16.msra.mxu0 %v4566
      %4590 = vmatmul.bf16.gmra.mxu0 %v4501
      %v4591 = vpop.f32.mrf.mxu0
      %v4592 = vadd.f32 0.0, %v4591
      %v4593 = vpop.f32.mrf.mxu0
      %v4594 = vadd.f32 0.0, %v4593
      %4595 = vmatmul.bf16.gmra.mxu0 %v4502
      %v4596 = vpop.f32.mrf.mxu0
      %v4597 = vadd.f32 0.0, %v4596
      %v4598 = vpop.f32.mrf.mxu0
      %v4599 = vadd.f32 0.0, %v4598
      %4600 = vmatmul.bf16.gmra.mxu0 %v4503
      %v4601 = vpop.f32.mrf.mxu0
      %v4602 = vadd.f32 0.0, %v4601
      %v4603 = vpop.f32.mrf.mxu0
      %v4604 = vadd.f32 0.0, %v4603
      %4605 = vmatmul.bf16.gmra.mxu0 %v4504
      %v4606 = vpop.f32.mrf.mxu0
      %v4607 = vadd.f32 0.0, %v4606
      %v4608 = vpop.f32.mrf.mxu0
      %v4609 = vadd.f32 0.0, %v4608
      %4610 = vmatmul.bf16.gmra.mxu0 %v4505
      %v4611 = vpop.f32.mrf.mxu0
      %v4612 = vadd.f32 0.0, %v4611
      %v4613 = vpop.f32.mrf.mxu0
      %v4614 = vadd.f32 0.0, %v4613
      %4615 = vmatmul.bf16.gmra.mxu0 %v4506
      %v4616 = vpop.f32.mrf.mxu0
      %v4617 = vadd.f32 0.0, %v4616
      %v4618 = vpop.f32.mrf.mxu0
      %v4619 = vadd.f32 0.0, %v4618
      %4620 = vmatmul.bf16.gmra.mxu0 %v4507
      %v4621 = vpop.f32.mrf.mxu0
      %v4622 = vadd.f32 0.0, %v4621
      %v4623 = vpop.f32.mrf.mxu0
      %v4624 = vadd.f32 0.0, %v4623
      %4625 = vmatmul.bf16.gmra.mxu0 %v4508
      %v4626 = vpop.f32.mrf.mxu0
      %v4627 = vadd.f32 0.0, %v4626
      %v4628 = vpop.f32.mrf.mxu0
      %v4629 = vadd.f32 0.0, %v4628
      %4630 = vmatmul.bf16.gmra.mxu0 %v4509
      %v4631 = vpop.f32.mrf.mxu0
      %v4632 = vadd.f32 0.0, %v4631
      %v4633 = vpop.f32.mrf.mxu0
      %v4634 = vadd.f32 0.0, %v4633
      %4635 = vmatmul.bf16.gmra.mxu0 %v4510
      %v4636 = vpop.f32.mrf.mxu0
      %v4637 = vadd.f32 0.0, %v4636
      %v4638 = vpop.f32.mrf.mxu0
      %v4639 = vadd.f32 0.0, %v4638
      %4640 = vmatmul.bf16.gmra.mxu0 %v4511
      %v4641 = vpop.f32.mrf.mxu0
      %v4642 = vadd.f32 0.0, %v4641
      %v4643 = vpop.f32.mrf.mxu0
      %v4644 = vadd.f32 0.0, %v4643
      %4645 = vmatmul.bf16.gmra.mxu0 %v4512
      %v4646 = vpop.f32.mrf.mxu0
      %v4647 = vadd.f32 0.0, %v4646
      %v4648 = vpop.f32.mrf.mxu0
      %v4649 = vadd.f32 0.0, %v4648
      %4650 = vmatmul.bf16.gmra.mxu0 %v4513
      %v4651 = vpop.f32.mrf.mxu0
      %v4652 = vadd.f32 0.0, %v4651
      %v4653 = vpop.f32.mrf.mxu0
      %v4654 = vadd.f32 0.0, %v4653
      %4655 = vmatmul.bf16.gmra.mxu0 %v4514
      %v4656 = vpop.f32.mrf.mxu0
      %v4657 = vadd.f32 0.0, %v4656
      %v4658 = vpop.f32.mrf.mxu0
      %v4659 = vadd.f32 0.0, %v4658
      %4660 = vmatmul.bf16.gmra.mxu0 %v4515
      %v4661 = vpop.f32.mrf.mxu0
      %v4662 = vadd.f32 0.0, %v4661
      %v4663 = vpop.f32.mrf.mxu0
      %v4664 = vadd.f32 0.0, %v4663
      %4665 = vmatmul.bf16.gmra.mxu0 %v4516
      %v4666 = vpop.f32.mrf.mxu0
      %v4667 = vadd.f32 0.0, %v4666
      %v4668 = vpop.f32.mrf.mxu0
      %v4669 = vadd.f32 0.0, %v4668
      %4670 = vdwg.mxu0
      %v4671 = vadd.f32 %v4437, %v4592
      %v4672 = vadd.f32 %v4438, %v4594
      %v4673 = vadd.f32 %v4439, %v4597
      %v4674 = vadd.f32 %v4440, %v4599
      %v4675 = vadd.f32 %v4441, %v4602
      %v4676 = vadd.f32 %v4442, %v4604
      %v4677 = vadd.f32 %v4443, %v4607
      %v4678 = vadd.f32 %v4444, %v4609
      %v4679 = vadd.f32 %v4445, %v4612
      %v4680 = vadd.f32 %v4446, %v4614
      %v4681 = vadd.f32 %v4447, %v4617
      %v4682 = vadd.f32 %v4448, %v4619
      %v4683 = vadd.f32 %v4449, %v4622
      %v4684 = vadd.f32 %v4450, %v4624
      %v4685 = vadd.f32 %v4451, %v4627
      %v4686 = vadd.f32 %v4452, %v4629
      %v4687 = vadd.f32 %v4453, %v4632
      %v4688 = vadd.f32 %v4454, %v4634
      %v4689 = vadd.f32 %v4455, %v4637
      %v4690 = vadd.f32 %v4456, %v4639
      %v4691 = vadd.f32 %v4457, %v4642
      %v4692 = vadd.f32 %v4458, %v4644
      %v4693 = vadd.f32 %v4459, %v4647
      %v4694 = vadd.f32 %v4460, %v4649
      %v4695 = vadd.f32 %v4461, %v4652
      %v4696 = vadd.f32 %v4462, %v4654
      %v4697 = vadd.f32 %v4463, %v4657
      %v4698 = vadd.f32 %v4464, %v4659
      %v4699 = vadd.f32 %v4465, %v4662
      %v4700 = vadd.f32 %v4466, %v4664
      %v4701 = vadd.f32 %v4467, %v4667
      %v4702 = vadd.f32 %v4468, %v4669
      %v4703 = vld [vmem:[%s4234 + $0x11] sm:$0xff]
      %v4704 = vld [vmem:[%s4234 + $0x19] sm:$0xff]
      %v4705 = vld [vmem:[%s4234 + $0x39] sm:$0xff]
      %v4706 = vld [vmem:[%s4234 + $0x41] sm:$0xff]
      %v4707 = vld [vmem:[%s4234 + $0x61] sm:$0xff]
      %v4708 = vld [vmem:[%s4234 + $0x69] sm:$0xff]
      %v4709 = vld [vmem:[%s4234 + $0x89] sm:$0xff]
      %v4710 = vld [vmem:[%s4234 + $0x91] sm:$0xff]
      %v4711 = vld [vmem:[%s4234 + $0xb1] sm:$0xff]
      %v4712 = vld [vmem:[%s4234 + $0xb9] sm:$0xff]
      %v4713 = vld [vmem:[%s4234 + $0xd9] sm:$0xff]
      %v4714 = vld [vmem:[%s4234 + $0xe1] sm:$0xff]
      %v4715 = vld [vmem:[%s4234 + $0x101] sm:$0xff]
      %v4716 = vld [vmem:[%s4234 + $0x109] sm:$0xff]
      %v4717 = vld [vmem:[%s4234 + $0x129] sm:$0xff]
      %v4718 = vld [vmem:[%s4234 + $0x131] sm:$0xff]
      %v4719 = vld [vmem:[%s4234 + $0x151] sm:$0xff]
      %v4720 = vld [vmem:[%s4234 + $0x159] sm:$0xff]
      %v4721 = vld [vmem:[%s4234 + $0x179] sm:$0xff]
      %v4722 = vld [vmem:[%s4234 + $0x181] sm:$0xff]
      %v4723 = vld [vmem:[%s4234 + $0x1a1] sm:$0xff]
      %v4724 = vld [vmem:[%s4234 + $0x1a9] sm:$0xff]
      %v4725 = vld [vmem:[%s4234 + $0x1c9] sm:$0xff]
      %v4726 = vld [vmem:[%s4234 + $0x1d1] sm:$0xff]
      %v4727 = vld [vmem:[%s4234 + $0x1f1] sm:$0xff]
      %v4728 = vld [vmem:[%s4234 + $0x1f9] sm:$0xff]
      %v4729 = vld [vmem:[%s4234 + $0x219] sm:$0xff]
      %v4730 = vld [vmem:[%s4234 + $0x221] sm:$0xff]
      %v4731 = vld [vmem:[%s4234 + $0x241] sm:$0xff]
      %v4732 = vld [vmem:[%s4234 + $0x249] sm:$0xff]
      %v4733 = vld [vmem:[%s4234 + $0x269] sm:$0xff]
      %v4734 = vld [vmem:[%s4234 + $0x271] sm:$0xff]
      %v4735 = vpack.c.bf16 %v4704, %v4703
      %v4736 = vpack.c.bf16 %v4706, %v4705
      %v4737 = vpack.c.bf16 %v4708, %v4707
      %v4738 = vpack.c.bf16 %v4710, %v4709
      %v4739 = vpack.c.bf16 %v4712, %v4711
      %v4740 = vpack.c.bf16 %v4714, %v4713
      %v4741 = vpack.c.bf16 %v4716, %v4715
      %v4742 = vpack.c.bf16 %v4718, %v4717
      %v4743 = vpack.c.bf16 %v4720, %v4719
      %v4744 = vpack.c.bf16 %v4722, %v4721
      %v4745 = vpack.c.bf16 %v4724, %v4723
      %v4746 = vpack.c.bf16 %v4726, %v4725
      %v4747 = vpack.c.bf16 %v4728, %v4727
      %v4748 = vpack.c.bf16 %v4730, %v4729
      %v4749 = vpack.c.bf16 %v4732, %v4731
      %v4750 = vpack.c.bf16 %v4734, %v4733
      %s4751 = scalar_lea.vmem %s4, 512
      %v4752 = vld [vmem:[%s4751] sm:$0xf]
      %v4753 = vld [vmem:[%s4751 + $0x4] sm:$0xf]
      %v4754 = vld [vmem:[%s4751 + $0x8] sm:$0xf]
      %v4755 = vld [vmem:[%s4751 + $0xc] sm:$0xf]
      %v4756 = vld [vmem:[%s4751 + $0x10] sm:$0xf]
      %v4757 = vld [vmem:[%s4751 + $0x14] sm:$0xf]
      %v4758 = vld [vmem:[%s4751 + $0x18] sm:$0xf]
      %v4759 = vld [vmem:[%s4751 + $0x1c] sm:$0xf]
      %v4760 = vld [vmem:[%s4751 + $0x20] sm:$0xf]
      %v4761 = vld [vmem:[%s4751 + $0x24] sm:$0xf]
      %v4762 = vld [vmem:[%s4751 + $0x28] sm:$0xf]
      %v4763 = vld [vmem:[%s4751 + $0x2c] sm:$0xf]
      %v4764 = vld [vmem:[%s4751 + $0x30] sm:$0xf]
      %v4765 = vld [vmem:[%s4751 + $0x34] sm:$0xf]
      %v4766 = vld [vmem:[%s4751 + $0x38] sm:$0xf]
      %v4767 = vld [vmem:[%s4751 + $0x3c] sm:$0xf]
      %v4784 = vunpack.c.l.b16 %v4752
      %v4785 = vunpack.c.l.b16 %v4753
      %v4786 = vunpack.c.l.b16 %v4754
      %v4787 = vunpack.c.l.b16 %v4755
      %v4788 = vunpack.c.l.b16 %v4756
      %v4789 = vunpack.c.l.b16 %v4757
      %v4790 = vunpack.c.l.b16 %v4758
      %v4791 = vunpack.c.l.b16 %v4759
      %v4792 = vunpack.c.l.b16 %v4760
      %v4793 = vunpack.c.l.b16 %v4761
      %v4794 = vunpack.c.l.b16 %v4762
      %v4795 = vunpack.c.l.b16 %v4763
      %v4796 = vunpack.c.l.b16 %v4764
      %v4797 = vunpack.c.l.b16 %v4765
      %v4798 = vunpack.c.l.b16 %v4766
      %v4799 = vunpack.c.l.b16 %v4767
      %v4800 = vpack.c.b16 %v4785, %v4784
      %v4801 = vpack.c.b16 %v4787, %v4786
      %v4802 = vpack.c.b16 %v4789, %v4788
      %v4803 = vpack.c.b16 %v4791, %v4790
      %v4804 = vpack.c.b16 %v4793, %v4792
      %v4805 = vpack.c.b16 %v4795, %v4794
      %v4806 = vpack.c.b16 %v4797, %v4796
      %v4807 = vpack.c.b16 %v4799, %v4798
      %4816 = vmatpush.bf16.msra.mxu0 %v4807
      %4817 = vmatpush.bf16.msra.mxu0 %v4806
      %4818 = vmatpush.bf16.msra.mxu0 %v4805
      %4819 = vmatpush.bf16.msra.mxu0 %v4804
      %4820 = vmatpush.bf16.msra.mxu0 %v4803
      %4821 = vmatpush.bf16.msra.mxu0 %v4802
      %4822 = vmatpush.bf16.msra.mxu0 %v4801
      %4823 = vmatpush.bf16.msra.mxu0 %v4800
      %4824 = vmatmul.bf16.gmra.mxu0 %v4735
      %v4825 = vpop.f32.mrf.mxu0
      %v4826 = vadd.f32 0.0, %v4825
      %v4827 = vpop.f32.mrf.mxu0
      %v4828 = vadd.f32 0.0, %v4827
      %4829 = vmatmul.bf16.gmra.mxu0 %v4736
      %v4830 = vpop.f32.mrf.mxu0
      %v4831 = vadd.f32 0.0, %v4830
      %v4832 = vpop.f32.mrf.mxu0
      %v4833 = vadd.f32 0.0, %v4832
      %4834 = vmatmul.bf16.gmra.mxu0 %v4737
      %v4835 = vpop.f32.mrf.mxu0
      %v4836 = vadd.f32 0.0, %v4835
      %v4837 = vpop.f32.mrf.mxu0
      %v4838 = vadd.f32 0.0, %v4837
      %4839 = vmatmul.bf16.gmra.mxu0 %v4738
      %v4840 = vpop.f32.mrf.mxu0
      %v4841 = vadd.f32 0.0, %v4840
      %v4842 = vpop.f32.mrf.mxu0
      %v4843 = vadd.f32 0.0, %v4842
      %4844 = vmatmul.bf16.gmra.mxu0 %v4739
      %v4845 = vpop.f32.mrf.mxu0
      %v4846 = vadd.f32 0.0, %v4845
      %v4847 = vpop.f32.mrf.mxu0
      %v4848 = vadd.f32 0.0, %v4847
      %4849 = vmatmul.bf16.gmra.mxu0 %v4740
      %v4850 = vpop.f32.mrf.mxu0
      %v4851 = vadd.f32 0.0, %v4850
      %v4852 = vpop.f32.mrf.mxu0
      %v4853 = vadd.f32 0.0, %v4852
      %4854 = vmatmul.bf16.gmra.mxu0 %v4741
      %v4855 = vpop.f32.mrf.mxu0
      %v4856 = vadd.f32 0.0, %v4855
      %v4857 = vpop.f32.mrf.mxu0
      %v4858 = vadd.f32 0.0, %v4857
      %4859 = vmatmul.bf16.gmra.mxu0 %v4742
      %v4860 = vpop.f32.mrf.mxu0
      %v4861 = vadd.f32 0.0, %v4860
      %v4862 = vpop.f32.mrf.mxu0
      %v4863 = vadd.f32 0.0, %v4862
      %4864 = vmatmul.bf16.gmra.mxu0 %v4743
      %v4865 = vpop.f32.mrf.mxu0
      %v4866 = vadd.f32 0.0, %v4865
      %v4867 = vpop.f32.mrf.mxu0
      %v4868 = vadd.f32 0.0, %v4867
      %4869 = vmatmul.bf16.gmra.mxu0 %v4744
      %v4870 = vpop.f32.mrf.mxu0
      %v4871 = vadd.f32 0.0, %v4870
      %v4872 = vpop.f32.mrf.mxu0
      %v4873 = vadd.f32 0.0, %v4872
      %4874 = vmatmul.bf16.gmra.mxu0 %v4745
      %v4875 = vpop.f32.mrf.mxu0
      %v4876 = vadd.f32 0.0, %v4875
      %v4877 = vpop.f32.mrf.mxu0
      %v4878 = vadd.f32 0.0, %v4877
      %4879 = vmatmul.bf16.gmra.mxu0 %v4746
      %v4880 = vpop.f32.mrf.mxu0
      %v4881 = vadd.f32 0.0, %v4880
      %v4882 = vpop.f32.mrf.mxu0
      %v4883 = vadd.f32 0.0, %v4882
      %4884 = vmatmul.bf16.gmra.mxu0 %v4747
      %v4885 = vpop.f32.mrf.mxu0
      %v4886 = vadd.f32 0.0, %v4885
      %v4887 = vpop.f32.mrf.mxu0
      %v4888 = vadd.f32 0.0, %v4887
      %4889 = vmatmul.bf16.gmra.mxu0 %v4748
      %v4890 = vpop.f32.mrf.mxu0
      %v4891 = vadd.f32 0.0, %v4890
      %v4892 = vpop.f32.mrf.mxu0
      %v4893 = vadd.f32 0.0, %v4892
      %4894 = vmatmul.bf16.gmra.mxu0 %v4749
      %v4895 = vpop.f32.mrf.mxu0
      %v4896 = vadd.f32 0.0, %v4895
      %v4897 = vpop.f32.mrf.mxu0
      %v4898 = vadd.f32 0.0, %v4897
      %4899 = vmatmul.bf16.gmra.mxu0 %v4750
      %v4900 = vpop.f32.mrf.mxu0
      %v4901 = vadd.f32 0.0, %v4900
      %v4902 = vpop.f32.mrf.mxu0
      %v4903 = vadd.f32 0.0, %v4902
      %4904 = vdwg.mxu0
      %v4905 = vadd.f32 %v4671, %v4826
      %v4906 = vadd.f32 %v4672, %v4828
      %v4907 = vadd.f32 %v4673, %v4831
      %v4908 = vadd.f32 %v4674, %v4833
      %v4909 = vadd.f32 %v4675, %v4836
      %v4910 = vadd.f32 %v4676, %v4838
      %v4911 = vadd.f32 %v4677, %v4841
      %v4912 = vadd.f32 %v4678, %v4843
      %v4913 = vadd.f32 %v4679, %v4846
      %v4914 = vadd.f32 %v4680, %v4848
      %v4915 = vadd.f32 %v4681, %v4851
      %v4916 = vadd.f32 %v4682, %v4853
      %v4917 = vadd.f32 %v4683, %v4856
      %v4918 = vadd.f32 %v4684, %v4858
      %v4919 = vadd.f32 %v4685, %v4861
      %v4920 = vadd.f32 %v4686, %v4863
      %v4921 = vadd.f32 %v4687, %v4866
      %v4922 = vadd.f32 %v4688, %v4868
      %v4923 = vadd.f32 %v4689, %v4871
      %v4924 = vadd.f32 %v4690, %v4873
      %v4925 = vadd.f32 %v4691, %v4876
      %v4926 = vadd.f32 %v4692, %v4878
      %v4927 = vadd.f32 %v4693, %v4881
      %v4928 = vadd.f32 %v4694, %v4883
      %v4929 = vadd.f32 %v4695, %v4886
      %v4930 = vadd.f32 %v4696, %v4888
      %v4931 = vadd.f32 %v4697, %v4891
      %v4932 = vadd.f32 %v4698, %v4893
      %v4933 = vadd.f32 %v4699, %v4896
      %v4934 = vadd.f32 %v4700, %v4898
      %v4935 = vadd.f32 %v4701, %v4901
      %v4936 = vadd.f32 %v4702, %v4903
      %v4937 = vld [vmem:[%s5] sm:$0x1]
      %v4939 = vperm.slane %v4937, 0
      %v4941 = vmul.f32 %v4905, %v4939
      %v4942 = vmul.f32 %v4906, %v4939
      %v4943 = vmul.f32 %v4907, %v4939
      %v4944 = vmul.f32 %v4908, %v4939
      %v4945 = vmul.f32 %v4909, %v4939
      %v4946 = vmul.f32 %v4910, %v4939
      %v4947 = vmul.f32 %v4911, %v4939
      %v4948 = vmul.f32 %v4912, %v4939
      %v4949 = vmul.f32 %v4913, %v4939
      %v4950 = vmul.f32 %v4914, %v4939
      %v4951 = vmul.f32 %v4915, %v4939
      %v4952 = vmul.f32 %v4916, %v4939
      %v4953 = vmul.f32 %v4917, %v4939
      %v4954 = vmul.f32 %v4918, %v4939
      %v4955 = vmul.f32 %v4919, %v4939
      %v4956 = vmul.f32 %v4920, %v4939
      %v4957 = vmul.f32 %v4921, %v4939
      %v4958 = vmul.f32 %v4922, %v4939
      %v4959 = vmul.f32 %v4923, %v4939
      %v4960 = vmul.f32 %v4924, %v4939
      %v4961 = vmul.f32 %v4925, %v4939
      %v4962 = vmul.f32 %v4926, %v4939
      %v4963 = vmul.f32 %v4927, %v4939
      %v4964 = vmul.f32 %v4928, %v4939
      %v4965 = vmul.f32 %v4929, %v4939
      %v4966 = vmul.f32 %v4930, %v4939
      %v4967 = vmul.f32 %v4931, %v4939
      %v4968 = vmul.f32 %v4932, %v4939
      %v4969 = vmul.f32 %v4933, %v4939
      %v4970 = vmul.f32 %v4934, %v4939
      %v4971 = vmul.f32 %v4935, %v4939
      %v4972 = vmul.f32 %v4936, %v4939
      %v4973 = vld [vmem:[%s6] sm:$0x1]
      %v4975 = vperm.slane %v4973, 0
      %v4977 = vadd.f32 %v4941, %v4975
      %v4978 = vadd.f32 %v4942, %v4975
      %v4979 = vadd.f32 %v4943, %v4975
      %v4980 = vadd.f32 %v4944, %v4975
      %v4981 = vadd.f32 %v4945, %v4975
      %v4982 = vadd.f32 %v4946, %v4975
      %v4983 = vadd.f32 %v4947, %v4975
      %v4984 = vadd.f32 %v4948, %v4975
      %v4985 = vadd.f32 %v4949, %v4975
      %v4986 = vadd.f32 %v4950, %v4975
      %v4987 = vadd.f32 %v4951, %v4975
      %v4988 = vadd.f32 %v4952, %v4975
      %v4989 = vadd.f32 %v4953, %v4975
      %v4990 = vadd.f32 %v4954, %v4975
      %v4991 = vadd.f32 %v4955, %v4975
      %v4992 = vadd.f32 %v4956, %v4975
      %v4993 = vadd.f32 %v4957, %v4975
      %v4994 = vadd.f32 %v4958, %v4975
      %v4995 = vadd.f32 %v4959, %v4975
      %v4996 = vadd.f32 %v4960, %v4975
      %v4997 = vadd.f32 %v4961, %v4975
      %v4998 = vadd.f32 %v4962, %v4975
      %v4999 = vadd.f32 %v4963, %v4975
      %v5000 = vadd.f32 %v4964, %v4975
      %v5001 = vadd.f32 %v4965, %v4975
      %v5002 = vadd.f32 %v4966, %v4975
      %v5003 = vadd.f32 %v4967, %v4975
      %v5004 = vadd.f32 %v4968, %v4975
      %v5005 = vadd.f32 %v4969, %v4975
      %v5006 = vadd.f32 %v4970, %v4975
      %v5007 = vadd.f32 %v4971, %v4975
      %v5008 = vadd.f32 %v4972, %v4975
      %v5009 = vmax.f32 %v4977, 0.0
      %v5010 = vmax.f32 %v4978, 0.0
      %v5011 = vmax.f32 %v4979, 0.0
      %v5012 = vmax.f32 %v4980, 0.0
      %v5013 = vmax.f32 %v4981, 0.0
      %v5014 = vmax.f32 %v4982, 0.0
      %v5015 = vmax.f32 %v4983, 0.0
      %v5016 = vmax.f32 %v4984, 0.0
      %v5017 = vmax.f32 %v4985, 0.0
      %v5018 = vmax.f32 %v4986, 0.0
      %v5019 = vmax.f32 %v4987, 0.0
      %v5020 = vmax.f32 %v4988, 0.0
      %v5021 = vmax.f32 %v4989, 0.0
      %v5022 = vmax.f32 %v4990, 0.0
      %v5023 = vmax.f32 %v4991, 0.0
      %v5024 = vmax.f32 %v4992, 0.0
      %v5025 = vmax.f32 %v4993, 0.0
      %v5026 = vmax.f32 %v4994, 0.0
      %v5027 = vmax.f32 %v4995, 0.0
      %v5028 = vmax.f32 %v4996, 0.0
      %v5029 = vmax.f32 %v4997, 0.0
      %v5030 = vmax.f32 %v4998, 0.0
      %v5031 = vmax.f32 %v4999, 0.0
      %v5032 = vmax.f32 %v5000, 0.0
      %v5033 = vmax.f32 %v5001, 0.0
      %v5034 = vmax.f32 %v5002, 0.0
      %v5035 = vmax.f32 %v5003, 0.0
      %v5036 = vmax.f32 %v5004, 0.0
      %v5037 = vmax.f32 %v5005, 0.0
      %v5038 = vmax.f32 %v5006, 0.0
      %v5039 = vmax.f32 %v5007, 0.0
      %v5040 = vmax.f32 %v5008, 0.0
      %5041 = vst [vmem:[%s313] sm:$0xff] %v5009
      %5042 = vst [vmem:[%s313 + $0x8] sm:$0xff] %v5010
      %5043 = vst [vmem:[%s313 + $0x10] sm:$0xff] %v5011
      %5044 = vst [vmem:[%s313 + $0x18] sm:$0xff] %v5012
      %5045 = vst [vmem:[%s313 + $0x20] sm:$0xff] %v5013
      %5046 = vst [vmem:[%s313 + $0x28] sm:$0xff] %v5014
      %5047 = vst [vmem:[%s313 + $0x30] sm:$0xff] %v5015
      %5048 = vst [vmem:[%s313 + $0x38] sm:$0xff] %v5016
      %5049 = vst [vmem:[%s313 + $0x40] sm:$0xff] %v5017
      %5050 = vst [vmem:[%s313 + $0x48] sm:$0xff] %v5018
      %5051 = vst [vmem:[%s313 + $0x50] sm:$0xff] %v5019
      %5052 = vst [vmem:[%s313 + $0x58] sm:$0xff] %v5020
      %5053 = vst [vmem:[%s313 + $0x60] sm:$0xff] %v5021
      %5054 = vst [vmem:[%s313 + $0x68] sm:$0xff] %v5022
      %5055 = vst [vmem:[%s313 + $0x70] sm:$0xff] %v5023
      %5056 = vst [vmem:[%s313 + $0x78] sm:$0xff] %v5024
      %5057 = vst [vmem:[%s313 + $0x80] sm:$0xff] %v5025
      %5058 = vst [vmem:[%s313 + $0x88] sm:$0xff] %v5026
      %5059 = vst [vmem:[%s313 + $0x90] sm:$0xff] %v5027
      %5060 = vst [vmem:[%s313 + $0x98] sm:$0xff] %v5028
      %5061 = vst [vmem:[%s313 + $0xa0] sm:$0xff] %v5029
      %5062 = vst [vmem:[%s313 + $0xa8] sm:$0xff] %v5030
      %5063 = vst [vmem:[%s313 + $0xb0] sm:$0xff] %v5031
      %5064 = vst [vmem:[%s313 + $0xb8] sm:$0xff] %v5032
      %5065 = vst [vmem:[%s313 + $0xc0] sm:$0xff] %v5033
      %5066 = vst [vmem:[%s313 + $0xc8] sm:$0xff] %v5034
      %5067 = vst [vmem:[%s313 + $0xd0] sm:$0xff] %v5035
      %5068 = vst [vmem:[%s313 + $0xd8] sm:$0xff] %v5036
      %5069 = vst [vmem:[%s313 + $0xe0] sm:$0xff] %v5037
      %5070 = vst [vmem:[%s313 + $0xe8] sm:$0xff] %v5038
      %5071 = vst [vmem:[%s313 + $0xf0] sm:$0xff] %v5039
      %5072 = vst [vmem:[%s313 + $0xf8] sm:$0xff] %v5040
      %5073 = vst [vmem:[#allocation4] sm:$0xff] -inf
      %5074 = vst [vmem:[#allocation4 + $0x8] sm:$0xff] -inf
      %5075 = vst [vmem:[#allocation4 + $0x10] sm:$0xff] -inf
      %5076 = vst [vmem:[#allocation4 + $0x18] sm:$0xff] -inf
      %5077 = vst [vmem:[#allocation4 + $0x20] sm:$0xff] -inf
      %5078 = vst [vmem:[#allocation4 + $0x28] sm:$0xff] -inf
      %5079 = vst [vmem:[#allocation4 + $0x30] sm:$0xff] -inf
      %5080 = vst [vmem:[#allocation4 + $0x38] sm:$0xff] -inf
      %5081 = vst [vmem:[#allocation4 + $0x40] sm:$0xff] -inf
      %5082 = vst [vmem:[#allocation4 + $0x48] sm:$0xff] -inf
      %5083 = vst [vmem:[#allocation4 + $0x50] sm:$0xff] -inf
      %5084 = vst [vmem:[#allocation4 + $0x58] sm:$0xff] -inf
      %5085 = vst [vmem:[#allocation4 + $0x60] sm:$0xff] -inf
      %5086 = vst [vmem:[#allocation4 + $0x68] sm:$0xff] -inf
      %5087 = vst [vmem:[#allocation4 + $0x70] sm:$0xff] -inf
      %5088 = vst [vmem:[#allocation4 + $0x78] sm:$0xff] -inf
      %5089 = vst [vmem:[#allocation4 + $0x80] sm:$0xff] -inf
      %5090 = vst [vmem:[#allocation4 + $0x88] sm:$0xff] -inf
      %5091 = vst [vmem:[#allocation4 + $0x90] sm:$0xff] -inf
      %5092 = vst [vmem:[#allocation4 + $0x98] sm:$0xff] -inf
      %5093 = vst [vmem:[#allocation4 + $0xa0] sm:$0xff] -inf
      %5094 = vst [vmem:[#allocation4 + $0xa8] sm:$0xff] -inf
      %5095 = vst [vmem:[#allocation4 + $0xb0] sm:$0xff] -inf
      %5096 = vst [vmem:[#allocation4 + $0xb8] sm:$0xff] -inf
      %5097 = vst [vmem:[#allocation4 + $0xc0] sm:$0xff] -inf
      %5098 = vst [vmem:[#allocation4 + $0xc8] sm:$0xff] -inf
      %5099 = vst [vmem:[#allocation4 + $0xd0] sm:$0xff] -inf
      %5100 = vst [vmem:[#allocation4 + $0xd8] sm:$0xff] -inf
      %5101 = vst [vmem:[#allocation4 + $0xe0] sm:$0xff] -inf
      %5102 = vst [vmem:[#allocation4 + $0xe8] sm:$0xff] -inf
      %5103 = vst [vmem:[#allocation4 + $0xf0] sm:$0xff] -inf
      %5104 = vst [vmem:[#allocation4 + $0xf8] sm:$0xff] -inf
      %5105 = vst [vmem:[#allocation4] sm:$0xff] %v5009
      %5106 = vst [vmem:[#allocation4 + $0x8] sm:$0xff] %v5010
      %5107 = vst [vmem:[#allocation4 + $0x10] sm:$0xff] %v5011
      %5108 = vst [vmem:[#allocation4 + $0x18] sm:$0xff] %v5012
      %5109 = vst [vmem:[#allocation4 + $0x20] sm:$0xff] %v5013
      %5110 = vst [vmem:[#allocation4 + $0x28] sm:$0xff] %v5014
      %5111 = vst [vmem:[#allocation4 + $0x30] sm:$0xff] %v5015
      %5112 = vst [vmem:[#allocation4 + $0x38] sm:$0xff] %v5016
      %5113 = vst [vmem:[#allocation4 + $0x40] sm:$0xff] %v5017
      %5114 = vst [vmem:[#allocation4 + $0x48] sm:$0xff] %v5018
      %5115 = vst [vmem:[#allocation4 + $0x50] sm:$0xff] %v5019
      %5116 = vst [vmem:[#allocation4 + $0x58] sm:$0xff] %v5020
      %5117 = vst [vmem:[#allocation4 + $0x60] sm:$0xff] %v5021
      %5118 = vst [vmem:[#allocation4 + $0x68] sm:$0xff] %v5022
      %5119 = vst [vmem:[#allocation4 + $0x70] sm:$0xff] %v5023
      %5120 = vst [vmem:[#allocation4 + $0x78] sm:$0xff] %v5024
      %5121 = vst [vmem:[#allocation4 + $0x80] sm:$0xff] %v5025
      %5122 = vst [vmem:[#allocation4 + $0x88] sm:$0xff] %v5026
      %5123 = vst [vmem:[#allocation4 + $0x90] sm:$0xff] %v5027
      %5124 = vst [vmem:[#allocation4 + $0x98] sm:$0xff] %v5028
      %5125 = vst [vmem:[#allocation4 + $0xa0] sm:$0xff] %v5029
      %5126 = vst [vmem:[#allocation4 + $0xa8] sm:$0xff] %v5030
      %5127 = vst [vmem:[#allocation4 + $0xb0] sm:$0xff] %v5031
      %5128 = vst [vmem:[#allocation4 + $0xb8] sm:$0xff] %v5032
      %5129 = vst [vmem:[#allocation4 + $0xc0] sm:$0xff] %v5033
      %5130 = vst [vmem:[#allocation4 + $0xc8] sm:$0xff] %v5034
      %5131 = vst [vmem:[#allocation4 + $0xd0] sm:$0xff] %v5035
      %5132 = vst [vmem:[#allocation4 + $0xd8] sm:$0xff] %v5036
      %5133 = vst [vmem:[#allocation4 + $0xe0] sm:$0xff] %v5037
      %5134 = vst [vmem:[#allocation4 + $0xe8] sm:$0xff] %v5038
      %5135 = vst [vmem:[#allocation4 + $0xf0] sm:$0xff] %v5039
      %5136 = vst [vmem:[#allocation4 + $0xf8] sm:$0xff] %v5040
      %v5137 = vld [vmem:[#allocation4] ss:$2 sm:$0xff]
      %s5138 = scalar_lea.vmem [#allocation4], 32
      %v5139 = vld [vmem:[%s5138] ss:$2 sm:$0xff]
      %s5140 = scalar_lea.vmem [#allocation4], 64
      %v5141 = vld [vmem:[%s5140] ss:$2 sm:$0xff]
      %s5142 = scalar_lea.vmem [#allocation4], 96
      %v5143 = vld [vmem:[%s5142] ss:$2 sm:$0xff]
      %s5144 = scalar_lea.vmem [#allocation4], 128
      %v5145 = vld [vmem:[%s5144] ss:$2 sm:$0xff]
      %s5146 = scalar_lea.vmem [#allocation4], 160
      %v5147 = vld [vmem:[%s5146] ss:$2 sm:$0xff]
      %s5148 = scalar_lea.vmem [#allocation4], 192
      %v5149 = vld [vmem:[%s5148] ss:$2 sm:$0xff]
      %s5150 = scalar_lea.vmem [#allocation4], 224
      %v5151 = vld [vmem:[%s5150] ss:$2 sm:$0xff]
      %s5152 = scalar_lea.vmem [#allocation4], 1
      %v5153 = vld [vmem:[%s5152] ss:$2 sm:$0xff]
      %s5154 = scalar_lea.vmem [#allocation4], 33
      %v5155 = vld [vmem:[%s5154] ss:$2 sm:$0xff]
      %s5156 = scalar_lea.vmem [#allocation4], 65
      %v5157 = vld [vmem:[%s5156] ss:$2 sm:$0xff]
      %s5158 = scalar_lea.vmem [#allocation4], 97
      %v5159 = vld [vmem:[%s5158] ss:$2 sm:$0xff]
      %s5160 = scalar_lea.vmem [#allocation4], 129
      %v5161 = vld [vmem:[%s5160] ss:$2 sm:$0xff]
      %s5162 = scalar_lea.vmem [#allocation4], 161
      %v5163 = vld [vmem:[%s5162] ss:$2 sm:$0xff]
      %s5164 = scalar_lea.vmem [#allocation4], 193
      %v5165 = vld [vmem:[%s5164] ss:$2 sm:$0xff]
      %s5166 = scalar_lea.vmem [#allocation4], 225
      %v5167 = vld [vmem:[%s5166] ss:$2 sm:$0xff]
      %s5168 = scalar_lea.vmem [#allocation4], 16
      %v5169 = vld [vmem:[%s5168] ss:$2 sm:$0xff]
      %s5170 = scalar_lea.vmem %s5168, 32 [#allocation4]
      %v5171 = vld [vmem:[%s5170] ss:$2 sm:$0xff]
      %s5172 = scalar_lea.vmem %s5168, 64 [#allocation4]
      %v5173 = vld [vmem:[%s5172] ss:$2 sm:$0xff]
      %s5174 = scalar_lea.vmem %s5168, 96 [#allocation4]
      %v5175 = vld [vmem:[%s5174] ss:$2 sm:$0xff]
      %s5176 = scalar_lea.vmem %s5168, 128 [#allocation4]
      %v5177 = vld [vmem:[%s5176] ss:$2 sm:$0xff]
      %s5178 = scalar_lea.vmem %s5168, 160 [#allocation4]
      %v5179 = vld [vmem:[%s5178] ss:$2 sm:$0xff]
      %s5180 = scalar_lea.vmem %s5168, 192 [#allocation4]
      %v5181 = vld [vmem:[%s5180] ss:$2 sm:$0xff]
      %s5182 = scalar_lea.vmem %s5168, 224 [#allocation4]
      %v5183 = vld [vmem:[%s5182] ss:$2 sm:$0xff]
      %s5184 = scalar_lea.vmem %s5168, 1 [#allocation4]
      %v5185 = vld [vmem:[%s5184] ss:$2 sm:$0xff]
      %s5186 = scalar_lea.vmem %s5168, 33 [#allocation4]
      %v5187 = vld [vmem:[%s5186] ss:$2 sm:$0xff]
      %s5188 = scalar_lea.vmem %s5168, 65 [#allocation4]
      %v5189 = vld [vmem:[%s5188] ss:$2 sm:$0xff]
      %s5190 = scalar_lea.vmem %s5168, 97 [#allocation4]
      %v5191 = vld [vmem:[%s5190] ss:$2 sm:$0xff]
      %s5192 = scalar_lea.vmem %s5168, 129 [#allocation4]
      %v5193 = vld [vmem:[%s5192] ss:$2 sm:$0xff]
      %s5194 = scalar_lea.vmem %s5168, 161 [#allocation4]
      %v5195 = vld [vmem:[%s5194] ss:$2 sm:$0xff]
      %s5196 = scalar_lea.vmem %s5168, 193 [#allocation4]
      %v5197 = vld [vmem:[%s5196] ss:$2 sm:$0xff]
      %s5198 = scalar_lea.vmem %s5168, 225 [#allocation4]
      %v5199 = vld [vmem:[%s5198] ss:$2 sm:$0xff]
      %v5200 = vmax.f32 %v5137, %v5153
      %v5201 = vmax.f32 %v5139, %v5155
      %v5202 = vmax.f32 %v5141, %v5157
      %v5203 = vmax.f32 %v5143, %v5159
      %v5204 = vmax.f32 %v5145, %v5161
      %v5205 = vmax.f32 %v5147, %v5163
      %v5206 = vmax.f32 %v5149, %v5165
      %v5207 = vmax.f32 %v5151, %v5167
      %v5208 = vmax.f32 %v5169, %v5185
      %v5209 = vmax.f32 %v5171, %v5187
      %v5210 = vmax.f32 %v5173, %v5189
      %v5211 = vmax.f32 %v5175, %v5191
      %v5212 = vmax.f32 %v5177, %v5193
      %v5213 = vmax.f32 %v5179, %v5195
      %v5214 = vmax.f32 %v5181, %v5197
      %v5215 = vmax.f32 %v5183, %v5199
      %v5216 = vmax.f32 %v5200, %v5208
      %v5217 = vmax.f32 %v5201, %v5209
      %v5218 = vmax.f32 %v5202, %v5210
      %v5219 = vmax.f32 %v5203, %v5211
      %v5220 = vmax.f32 %v5204, %v5212
      %v5221 = vmax.f32 %v5205, %v5213
      %v5222 = vmax.f32 %v5206, %v5214
      %v5223 = vmax.f32 %v5207, %v5215
      %5224 = vst [vmem:[%s318] sm:$0xff] %v5216
      %5225 = vst [vmem:[%s318 + $0x8] sm:$0xff] %v5217
      %5226 = vst [vmem:[%s318 + $0x10] sm:$0xff] %v5218
      %5227 = vst [vmem:[%s318 + $0x18] sm:$0xff] %v5219
      %5228 = vst [vmem:[%s318 + $0x20] sm:$0xff] %v5220
      %5229 = vst [vmem:[%s318 + $0x28] sm:$0xff] %v5221
      %5230 = vst [vmem:[%s318 + $0x30] sm:$0xff] %v5222
      %5231 = vst [vmem:[%s318 + $0x38] sm:$0xff] %v5223
      %p5232 = scmp.lt.s32.totalorder %s20, 1
      %s5233 = scalar_select %p5232, %s20, 1
      %s5234 = smul.addr %s5233, 32
      %s5235 = smul.addr %s5234, 8
      %s5236 = scalar_lea.vmem %s7, %s5235
      %p5237 = scmp.lt.s32.totalorder %s20, 1
      %s5238 = scalar_select %p5237, %s20, 1
      %s5239 = smul.addr %s5238, 8
      %s5240 = smul.addr %s5239, 8
      %s5241 = scalar_lea.vmem %s8, %s5240
      // Predicated region
      $region49: #{stack_encoder_2d.1} parent=47 // pred_check
        %p5242 = pneg %p190
      $region50: #{stack_encoder_2d.1} parent=47 // pred_check_branch
        %5244 = sbr.rel (%p5242) target = $region52
      $region51: #{stack_encoder_2d.1} parent=47 // pred_region
        _
      $region52: #{stack_encoder_2d.1} parent=47 // pred_fallthru
        _
      // Predicated region
      $region53: #{stack_encoder_2d.1} parent=47 // pred_check
        %p5245 = pneg %p216
      $region54: #{stack_encoder_2d.1} parent=47 // pred_check_branch
        %5247 = sbr.rel (%p5245) target = $region56
      $region55: #{stack_encoder_2d.1} parent=47 // pred_region
        _
      $region56: #{stack_encoder_2d.1} parent=47 // pred_fallthru
        _
    $region48: #{stack_encoder_2d.1} parent=5 // pred_fallthru
      _
    %p5248 = scmp.le.s32.totalorder 2, %s15
    // Predicated region
    $region57: #{stack_encoder_2d.1} parent=5 // pred_check
      %p5249 = pneg %p5248
    $region58: #{stack_encoder_2d.1} parent=5 // pred_check_branch
      %5251 = sbr.rel (%p5249) target = $region60
    $region59: #{stack_encoder_2d.1} parent=5 // pred_region
      %s5252 = ssub.s32 %s15, 2
      // Predicated region
      $region61: #{stack_encoder_2d.1} parent=59 // pred_check
        %p5253 = pneg %p196
      $region62: #{stack_encoder_2d.1} parent=59 // pred_check_branch
        %5255 = sbr.rel (%p5253) target = $region64
      $region63: #{stack_encoder_2d.1} parent=59 // pred_region
        %p5256 = scmp.lt.s32.totalorder %s21, 1
        %s5257 = scalar_select %p5256, %s21, 1
        %s5258 = smul.addr %s5257, 32
        %s5259 = smul.addr %s5258, 8
        %s5260 = scalar_lea.vmem %s7, %s5259
      $region64: #{stack_encoder_2d.1} parent=59 // pred_fallthru
        _
      // Predicated region
      $region65: #{stack_encoder_2d.1} parent=59 // pred_check
        %p5261 = pneg %p222
      $region66: #{stack_encoder_2d.1} parent=59 // pred_check_branch
        %5263 = sbr.rel (%p5261) target = $region68
      $region67: #{stack_encoder_2d.1} parent=59 // pred_region
        %p5264 = scmp.lt.s32.totalorder %s21, 1
        %s5265 = scalar_select %p5264, %s21, 1
        %s5266 = smul.addr %s5265, 8
        %s5267 = smul.addr %s5266, 8
        %s5268 = scalar_lea.vmem %s8, %s5267
      $region68: #{stack_encoder_2d.1} parent=59 // pred_fallthru
        _
    $region60: #{stack_encoder_2d.1} parent=5 // pred_fallthru
      _
  $region6: #{stack_encoder_2d.1} parent=0 // loop_footer
    %s19 = sadd.s32 1, %s15
  $region7: #{stack_encoder_2d.1} parent=0 // loop_footer_branch
    %14 = sbr.rel target = $region3
  $region8: #{stack_encoder_2d.1} parent=0 // loop_exit
    _

</llo_original>
